<compile_context>
chip_gen: v6e
topology: v6e:2x2x1
jax: 0.10.0
libtpu: 0.0.40
codegen_flags: <defaults>
</compile_context>

<pallas_src>
import functools

import numpy as np
import jax
import jax.numpy as jnp
from jax.experimental import pallas as pl
from jax.experimental.pallas import tpu as pltpu

_BN_EPS = 1e-5
_PAD = 2          # Conv1d padding used everywhere in the model
_K = 5            # kernel_size used everywhere in the model


# ----------------------------------------------------------------------------
# parameter packing (host / trace-time, run once outside jit)
# ----------------------------------------------------------------------------

def _fold_conv(conv, bn=None):
    """Conv1d weight (Cout,Cin,K) + bias with eval-mode BN folded in.

    Returns (w_kc, shift, cin, cout) where w_kc has shape (Cout, K*Cin) laid out
    k-major (row index = k*Cin + c) to match the im2col slab built in the kernel,
    and shift has shape (Cout, 1)."""
    w = jnp.asarray(conv["w"], jnp.float32)
    b = jnp.asarray(conv["b"], jnp.float32)
    cout, cin, k = (int(s) for s in w.shape)
    assert k == _K
    if bn is None:
        shift = b
    else:
        scale = jnp.asarray(bn["gamma"], jnp.float32) / jnp.sqrt(
            jnp.asarray(bn["var"], jnp.float32) + _BN_EPS)
        shift = scale * (b - jnp.asarray(bn["mean"], jnp.float32)) \
            + jnp.asarray(bn["beta"], jnp.float32)
        w = w * scale[:, None, None]                    # fold BN scale into the taps
    w_kc = jnp.transpose(w, (0, 2, 1)).reshape(cout, k * cin)
    return w_kc, shift.reshape(cout, 1), cin, cout


def _pad2d(a, rows, cols):
    a = jnp.asarray(a, jnp.float32)
    return jnp.pad(a, ((0, rows - a.shape[0]), (0, cols - a.shape[1])))


def prepare_unet(params, cfg, seq_len):
    """Pack all weights into a few padded VMEM slabs + build pool/sel/upsample matrices.

    Returns (consts: dict of arrays, meta: dict of static python values)."""
    input_dim = int(cfg["input_dim"])
    depth = int(cfg["depth"])
    nmasks = int(cfg["nmasks"])
    fourier = bool(cfg.get("fourier", False))
    L = int(seq_len)
    assert depth >= 1

    convs, ses = [], []

    def add_down(pd):
        convs.append(_fold_conv(pd["cbr"]["conv"], pd["cbr"]["bn"]))
        for rp in pd["re"]:
            convs.append(_fold_conv(rp["cbr1"]["conv"], rp["cbr1"]["bn"]))
            convs.append(_fold_conv(rp["cbr2"]["conv"], rp["cbr2"]["bn"]))
            c = int(rp["se"]["conv2"]["w"].shape[0])
            c8 = int(rp["se"]["conv1"]["w"].shape[0])
            ses.append((jnp.asarray(rp["se"]["conv1"]["w"], jnp.float32).reshape(c8, c),
                        jnp.asarray(rp["se"]["conv1"]["b"], jnp.float32).reshape(c8, 1),
                        jnp.asarray(rp["se"]["conv2"]["w"], jnp.float32).reshape(c, c8),
                        jnp.asarray(rp["se"]["conv2"]["b"], jnp.float32).reshape(c, 1),
                        c, c8))

    add_down(params["layer1"])
    add_down(params["layer2"])
    add_down(params["layer3"])
    convs.append(_fold_conv(params["cbr_up2"]["conv"], params["cbr_up2"]["bn"]))
    convs.append(_fold_conv(params["cbr_up3"]["conv"], params["cbr_up3"]["bn"]))
    convs.append(_fold_conv(params["outcov"], None))      # outcov has no BN

    cins = tuple(c[2] for c in convs)
    couts = tuple(c[3] for c in convs)
    max_cin, max_cout = max(cins), max(couts)
    max_kc = _K * max_cin

    wconv = jnp.stack([_pad2d(c[0], max_cout, max_kc) for c in convs])
    bconv = jnp.stack([_pad2d(c[1], max_cout, 1) for c in convs])

    se_c = tuple(s[4] for s in ses)
    se_c8 = tuple(s[5] for s in ses)
    max_c, max_c8 = max(se_c), max(se_c8)
    wse1 = jnp.stack([_pad2d(s[0], max_c8, max_c) for s in ses])
    bse1 = jnp.stack([_pad2d(s[1], max_c8, 1) for s in ses])
    wse2 = jnp.stack([_pad2d(s[2], max_c, max_c8) for s in ses])
    bse2 = jnp.stack([_pad2d(s[3], max_c, 1) for s in ses])

    # AvgPool1d(kernel=input_dim, stride=5, padding=4, count_include_pad=True) as a matmul.
    lpool = (L + 2 * 4 - input_dim) // 5 + 1
    pool_m = np.zeros((L, lpool), np.float32)
    for l in range(lpool):
        lo, hi = 5 * l - 4, 5 * l - 4 + input_dim
        for i in range(max(lo, 0), min(hi, L)):
            pool_m[i, l] = 1.0 / input_dim

    # stride-5 conv == full stride-1 conv followed by a 0/1 column selection.
    l1 = L
    l2 = (l1 - 1) // 5 + 1
    l3 = (l2 - 1) // 5 + 1
    sel2 = np.zeros((l1, l2), np.float32)
    for l in range(l2):
        sel2[5 * l, l] = 1.0
    sel3 = np.zeros((l2, l3), np.float32)
    for l in range(l3):
        sel3[5 * l, l] = 1.0
    # nearest x5 upsample matrices
    up1 = np.zeros((l3, 5 * l3), np.float32)
    for j in range(5 * l3):
        up1[j // 5, j] = 1.0
    up2 = np.zeros((l2, 5 * l2), np.float32)
    for j in range(5 * l2):
        up2[j // 5, j] = 1.0

    # shape-consistency of the original architecture (skip connections must line up)
    assert lpool == l2, "AvgPool output length must match layer2 output length"
    assert 5 * l3 == l2 and 5 * l2 == l1, "sequence length incompatible with x5 up/down"

    consts = dict(wconv=wconv, bconv=bconv, wse1=wse1, bse1=bse1, wse2=wse2, bse2=bse2,
                  pool=jnp.asarray(pool_m), sel2=jnp.asarray(sel2), sel3=jnp.asarray(sel3),
                  up1=jnp.asarray(up1), up2=jnp.asarray(up2))
    meta = dict(depth=depth, input_dim=input_dim, nmasks=nmasks,
                L=L, l2=l2, l3=l3,
                cins=cins, couts=couts, se_c8=se_c8,
                max_cin=max_cin,
                act=("sigmoid" if (nmasks == 1 or fourier) else "softmax"))
    return consts, meta


# ----------------------------------------------------------------------------
# the single fused kernel (runs the whole network for one batch element)
# ----------------------------------------------------------------------------

def _unet_kernel(x_ref, wconv_ref, bconv_ref, wse1_ref, bse1_ref, wse2_ref, bse2_ref,
                 pool_ref, sel2_ref, sel3_ref, up1_ref, up2_ref,
                 o_ref, pad_buf, slab_buf, *, meta):
    depth = meta["depth"]
    cins, couts = meta["cins"], meta["couts"]
    se_c8 = meta["se_c8"]
    L, l2, l3 = meta["L"], meta["l2"], meta["l3"]

    state = dict(ci=0, si=0)    # trace-time conv / SE counters

    def fill_pad(groups, lin):
        """Stack `groups` along channels into pad_buf with zeroed 2-column lane edges.
        Only the pad edges are zeroed; the interior is fully overwritten."""
        off = 0
        for g in groups:
            c = g.shape[0]
            pad_buf[off:off + c, _PAD:_PAD + lin] = g
            off += c
        zeros = jnp.zeros((off, _PAD), jnp.float32)
        pad_buf[0:off, 0:_PAD] = zeros
        pad_buf[0:off, _PAD + lin:_PAD + lin + _PAD] = zeros
        return off

    def conv(groups, lin, *, sel=None, relu=True):
        """Conv1d(k=5, pad=2, stride 1) as ONE (Cout, 5*Cin)@(5*Cin, lin) MXU matmul,
        folded BN shift + ReLU epilogue, optional stride-5 column selection."""
        idx = state["ci"]
        state["ci"] += 1
        cin, cout = cins[idx], couts[idx]
        got = fill_pad(groups, lin)
        assert got == cin, (got, cin, idx)
        kc = _K * cin
        # im2col slab: row k*cin + c holds the padded input shifted by tap k.
        for k in range(_K):
            slab_buf[k * cin:(k + 1) * cin, 0:lin] = pad_buf[0:cin, k:k + lin]
        w = wconv_ref[idx][0:cout, 0:kc]
        y = jnp.dot(w, slab_buf[0:kc, 0:lin], preferred_element_type=jnp.float32)
        if sel is not None:                       # stride-5: pick every 5th column
            y = jnp.dot(y, sel, preferred_element_type=jnp.float32)
        y = y + bconv_ref[idx][0:cout, :]
        return jnp.maximum(y, 0.0) if relu else y

    def se_add(h):
        """Additive SE block (matches torch.add(x, x_se) in the reference)."""
        sidx = state["si"]
        state["si"] += 1
        c = h.shape[0]
        c8 = se_c8[sidx]
        m = jnp.mean(h, axis=-1, keepdims=True)                              # (c, 1)
        u = jnp.maximum(
            jnp.dot(wse1_ref[sidx][0:c8, 0:c], m, preferred_element_type=jnp.float32)
            + bse1_ref[sidx][0:c8, :], 0.0)                                  # (c//8, 1)
        s = jax.nn.sigmoid(
            jnp.dot(wse2_ref[sidx][0:c, 0:c8], u, preferred_element_type=jnp.float32)
            + bse2_ref[sidx][0:c, :])                                        # (c, 1)
        return h + s

    def down_stage(groups, lin, sel, lout):
        h = conv(groups, lin, sel=sel)                    # conbr_block(stride)
        for _ in range(depth):                            # depth x re_block
            h1 = conv([h], lout)
            h2 = conv([h1], lout)
            h = h + se_add(h2)
        return h

    def upsample5(h, mat_ref):
        c, lz = h.shape
        if lz == 1:
            return jnp.broadcast_to(h, (c, 5 * lz))
        return jnp.dot(h, mat_ref[...], preferred_element_type=jnp.float32)

    # ----------------------- forward pass -----------------------
    x = x_ref[...]                                                        # (input_dim, L)
    pool = jnp.dot(x, pool_ref[...], preferred_element_type=jnp.float32)  # (input_dim, l2)

    out_0 = down_stage([x], L, None, L)                    # layer1 -> (emb,   L)
    out_1 = down_stage([out_0], L, sel2_ref[...], l2)      # layer2 -> (2emb,  l2)
    x3 = down_stage([out_1, pool], l2, sel3_ref[...], l3)  # layer3 -> (3emb,  l3)

    up = upsample5(x3, up1_ref)                            # (3emb, l2)
    up = conv([up, out_1], l2)                             # cbr_up2 -> (2emb, l2)
    up = upsample5(up, up2_ref)                            # (2emb, L)
    up = conv([up, out_0], L)                              # cbr_up3 -> (emb,  L)

    y = conv([up], L, relu=False)                          # outcov  -> (nmasks, L)
    if meta["act"] == "softmax":
        mx = jnp.max(y, axis=0, keepdims=True)
        e = jnp.exp(y - mx)
        y = e / jnp.sum(e, axis=0, keepdims=True)
    else:
        y = jax.nn.sigmoid(y)
    o_ref[...] = y


# ----------------------------------------------------------------------------
# wrapper: one pallas_call, grid=(B,), all constants as a handful of packed slabs
# ----------------------------------------------------------------------------

_CONST_NAMES = ("wconv", "bconv", "wse1", "bse1", "wse2", "bse2",
                "pool", "sel2", "sel3", "up1", "up2")


def make_unet_forward(consts, meta, batch):
    kernel = functools.partial(_unet_kernel, meta=meta)
    L, nmasks, cin0 = meta["L"], meta["nmasks"], meta["input_dim"]
    max_cin = meta["max_cin"]

    in_specs = [pl.BlockSpec((None, cin0, L), lambda b: (b, 0, 0))]
    for name in _CONST_NAMES:
        shape = tuple(int(s) for s in consts[name].shape)
        nd = len(shape)
        in_specs.append(pl.BlockSpec(shape, lambda b, _nd=nd: (0,) * _nd))

    call = pl.pallas_call(
        kernel,
        out_shape=jax.ShapeDtypeStruct((batch, nmasks, L), jnp.float32),
        grid=(batch,),
        in_specs=in_specs,
        out_specs=pl.BlockSpec((None, nmasks, L), lambda b: (b, 0, 0)),
        scratch_shapes=[
            pltpu.VMEM((max_cin, L + 2 * _PAD), jnp.float32),      # padded input buffer
            pltpu.VMEM((_K * max_cin, L), jnp.float32),            # im2col slab buffer
        ],
        compiler_params=pltpu.CompilerParams(
            dimension_semantics=("parallel",)),                    # v7x: 2 TCs split batch
    )

    def forward(x, c):
        return call(x.astype(jnp.float32), *(c[n] for n in _CONST_NAMES))

    return jax.jit(forward)


# ----------------------------------------------------------------------------
# deterministic parameter initialization (shapes follow the PyTorch __init__)
# ----------------------------------------------------------------------------

def build_params(key, input_dim, emb, depth, nmasks, k=_K):
    keys = iter(jax.random.split(key, 512))
    nxt = lambda: next(keys)

    def init_conv(cin, cout, ksz):
        return dict(w=0.1 * jax.random.normal(nxt(), (cout, cin, ksz), jnp.float32),
                    b=0.1 * jax.random.normal(nxt(), (cout,), jnp.float32))

    def init_bn(c):
        return dict(gamma=1.0 + 0.1 * jax.random.normal(nxt(), (c,), jnp.float32),
                    beta=0.1 * jax.random.normal(nxt(), (c,), jnp.float32),
                    mean=0.1 * jax.random.normal(nxt(), (c,), jnp.float32),
                    var=0.5 + jnp.abs(jax.random.normal(nxt(), (c,), jnp.float32)))

    def init_conbr(cin, cout):
        return dict(conv=init_conv(cin, cout, k), bn=init_bn(cout))

    def init_se(c):
        return dict(conv1=init_conv(c, c // 8, 1), conv2=init_conv(c // 8, c, 1))

    def init_re(c):
        return dict(cbr1=init_conbr(c, c), cbr2=init_conbr(c, c), se=init_se(c))

    def init_down(cin, cout):
        return dict(cbr=init_conbr(cin, cout), re=[init_re(cout) for _ in range(depth)])

    return dict(
        layer1=init_down(input_dim, emb),
        layer2=init_down(emb, 2 * emb),
        layer3=init_down(2 * emb + input_dim, 3 * emb),
        cbr_up2=init_conbr(5 * emb, 2 * emb),
        cbr_up3=init_conbr(3 * emb, emb),
        outcov=init_conv(emb, nmasks, k),
    )


# ----------------------------------------------------------------------------

if __name__ == "__main__":
    # Small, shape-consistent configuration:
    #   L = 25 (multiple of 25 so skip-connection lengths line up),
    #   input_dim = 10 (AvgPool1d(kernel=input_dim, stride=5, padding=4) -> length 5).
    B, input_dim, emb, depth, nmasks, L = 2, 10, 8, 1, 3, 25
    cfg = dict(input_dim=input_dim, embedding_dim=emb, depth=depth,
               nmasks=nmasks, fourier=False)

    root = jax.random.PRNGKey(0)
    kx, kp = jax.random.split(root)
    x = jax.random.normal(kx, (B, input_dim, L), jnp.float32)
    params = build_params(kp, input_dim, emb, depth, nmasks)

    consts, meta = prepare_unet(params, cfg, L)          # one-time weight packing
    fwd = make_unet_forward(consts, meta, B)
    out = jax.block_until_ready(fwd(x, consts))

    assert out.shape == (B, nmasks, L), out.shape
    assert bool(jnp.all(jnp.isfinite(out)))
    s = jnp.sum(out, axis=1)                             # channel softmax sums to 1
    assert bool(jnp.all(jnp.abs(s - 1.0) < 1e-4))
    print("KERNEL_OK")
</pallas_src>

<mosaic_0001>
module attributes {stable_mosaic.version = 11 : i64} {
  func.func @_unet_kernel(%arg0: i32, %arg1: memref<1x10x25xf32, #tpu.memory_space<vmem>>, %arg2: memref<12x24x200xf32, #tpu.memory_space<vmem>>, %arg3: memref<12x24x1xf32, #tpu.memory_space<vmem>>, %arg4: memref<3x3x24xf32, #tpu.memory_space<vmem>>, %arg5: memref<3x3x1xf32, #tpu.memory_space<vmem>>, %arg6: memref<3x24x3xf32, #tpu.memory_space<vmem>>, %arg7: memref<3x24x1xf32, #tpu.memory_space<vmem>>, %arg8: memref<25x5xf32, #tpu.memory_space<vmem>>, %arg9: memref<25x5xf32, #tpu.memory_space<vmem>>, %arg10: memref<5x1xf32, #tpu.memory_space<vmem>>, %arg11: memref<1x5xf32, #tpu.memory_space<vmem>>, %arg12: memref<5x25xf32, #tpu.memory_space<vmem>>, %arg13: memref<1x3x25xf32, #tpu.memory_space<vmem>>, %arg14: memref<40x29xf32, #tpu.memory_space<vmem>>, %arg15: memref<200x25xf32, #tpu.memory_space<vmem>>) attributes {dimension_semantics = [#tpu.dimension_semantics<parallel>], iteration_bounds = array<i64: 2>, scalar_prefetch = 0 : i64, scratch_operands = 2 : i64, tpu.core_type = #tpu.core_type<tc>, window_params = [{transform_indices = @transform_0, window_bounds = array<i64: 1, 10, 25>}, {pipeline_mode = #tpu.pipeline_mode<synchronous>, transform_indices = @transform_1, window_bounds = array<i64: 12, 24, 200>}, {pipeline_mode = #tpu.pipeline_mode<synchronous>, transform_indices = @transform_2, window_bounds = array<i64: 12, 24, 1>}, {pipeline_mode = #tpu.pipeline_mode<synchronous>, transform_indices = @transform_3, window_bounds = array<i64: 3, 3, 24>}, {pipeline_mode = #tpu.pipeline_mode<synchronous>, transform_indices = @transform_4, window_bounds = array<i64: 3, 3, 1>}, {pipeline_mode = #tpu.pipeline_mode<synchronous>, transform_indices = @transform_5, window_bounds = array<i64: 3, 24, 3>}, {pipeline_mode = #tpu.pipeline_mode<synchronous>, transform_indices = @transform_6, window_bounds = array<i64: 3, 24, 1>}, {pipeline_mode = #tpu.pipeline_mode<synchronous>, transform_indices = @transform_7, window_bounds = array<i64: 25, 5>}, {pipeline_mode = #tpu.pipeline_mode<synchronous>, transform_indices = @transform_8, window_bounds = array<i64: 25, 5>}, {pipeline_mode = #tpu.pipeline_mode<synchronous>, transform_indices = @transform_9, window_bounds = array<i64: 5, 1>}, {pipeline_mode = #tpu.pipeline_mode<synchronous>, transform_indices = @transform_10, window_bounds = array<i64: 1, 5>}, {pipeline_mode = #tpu.pipeline_mode<synchronous>, transform_indices = @transform_11, window_bounds = array<i64: 5, 25>}, {transform_indices = @transform_12, window_bounds = array<i64: 1, 3, 25>}]} {
    %c0 = arith.constant 0 : index
    %c0_0 = arith.constant 0 : index
    %c0_1 = arith.constant 0 : index
    %0 = vector.load %arg1[%c0, %c0_0, %c0_1] : memref<1x10x25xf32, #tpu.memory_space<vmem>>, vector<1x10x25xf32>
    %1 = vector.shape_cast %0 : vector<1x10x25xf32> to vector<10x25xf32>
    %c0_2 = arith.constant 0 : index
    %c0_3 = arith.constant 0 : index
    %2 = vector.load %arg8[%c0_2, %c0_3] : memref<25x5xf32, #tpu.memory_space<vmem>>, vector<25x5xf32>
    %cst = arith.constant dense<0.000000e+00> : vector<10x5xf32>
    %3 = tpu.matmul %1, %2, %cst {dimension_numbers = #tpu.dot_dimension_numbers<[1], [0], [0], [1], [0, 0, 1, 1], [], []>} : vector<10x25xf32>, vector<25x5xf32>, vector<10x5xf32> -> vector<10x5xf32>
    %c0_4 = arith.constant 0 : index
    %c2 = arith.constant 2 : index
    %4 = vector.load %arg14[%c0_4, %c2] : memref<40x29xf32, #tpu.memory_space<vmem>>, vector<10x25xf32>
    tpu.vector_store %arg14[%c0_4, %c2], %1 {strides = array<i32>} : memref<40x29xf32, #tpu.memory_space<vmem>>, vector<10x25xf32>,
    %cst_5 = arith.constant 0.000000e+00 : f32
    %5 = vector.broadcast %cst_5 : f32 to vector<10x2xf32>
    %c0_6 = arith.constant 0 : index
    %c0_7 = arith.constant 0 : index
    %6 = vector.load %arg14[%c0_6, %c0_7] : memref<40x29xf32, #tpu.memory_space<vmem>>, vector<10x2xf32>
    tpu.vector_store %arg14[%c0_6, %c0_7], %5 {strides = array<i32>} : memref<40x29xf32, #tpu.memory_space<vmem>>, vector<10x2xf32>,
    %c0_8 = arith.constant 0 : index
    %c27 = arith.constant 27 : index
    %7 = vector.load %arg14[%c0_8, %c27] : memref<40x29xf32, #tpu.memory_space<vmem>>, vector<10x2xf32>
    tpu.vector_store %arg14[%c0_8, %c27], %5 {strides = array<i32>} : memref<40x29xf32, #tpu.memory_space<vmem>>, vector<10x2xf32>,
    %c0_9 = arith.constant 0 : index
    %c0_10 = arith.constant 0 : index
    %8 = vector.load %arg14[%c0_9, %c0_10] : memref<40x29xf32, #tpu.memory_space<vmem>>, vector<10x25xf32>
    %c0_11 = arith.constant 0 : index
    %c0_12 = arith.constant 0 : index
    %9 = vector.load %arg15[%c0_11, %c0_12] : memref<200x25xf32, #tpu.memory_space<vmem>>, vector<10x25xf32>
    tpu.vector_store %arg15[%c0_11, %c0_12], %8 {strides = array<i32>} : memref<200x25xf32, #tpu.memory_space<vmem>>, vector<10x25xf32>,
    %c0_13 = arith.constant 0 : index
    %c1 = arith.constant 1 : index
    %10 = vector.load %arg14[%c0_13, %c1] : memref<40x29xf32, #tpu.memory_space<vmem>>, vector<10x25xf32>
    %c10 = arith.constant 10 : index
    %c0_14 = arith.constant 0 : index
    %11 = vector.load %arg15[%c10, %c0_14] : memref<200x25xf32, #tpu.memory_space<vmem>>, vector<10x25xf32>
    tpu.vector_store %arg15[%c10, %c0_14], %10 {strides = array<i32>} : memref<200x25xf32, #tpu.memory_space<vmem>>, vector<10x25xf32>,
    %c0_15 = arith.constant 0 : index
    %c2_16 = arith.constant 2 : index
    %12 = vector.load %arg14[%c0_15, %c2_16] : memref<40x29xf32, #tpu.memory_space<vmem>>, vector<10x25xf32>
    %c20 = arith.constant 20 : index
    %c0_17 = arith.constant 0 : index
    %13 = vector.load %arg15[%c20, %c0_17] : memref<200x25xf32, #tpu.memory_space<vmem>>, vector<10x25xf32>
    tpu.vector_store %arg15[%c20, %c0_17], %12 {strides = array<i32>} : memref<200x25xf32, #tpu.memory_space<vmem>>, vector<10x25xf32>,
    %c0_18 = arith.constant 0 : index
    %c3 = arith.constant 3 : index
    %14 = vector.load %arg14[%c0_18, %c3] : memref<40x29xf32, #tpu.memory_space<vmem>>, vector<10x25xf32>
    %c30 = arith.constant 30 : index
    %c0_19 = arith.constant 0 : index
    %15 = vector.load %arg15[%c30, %c0_19] : memref<200x25xf32, #tpu.memory_space<vmem>>, vector<10x25xf32>
    tpu.vector_store %arg15[%c30, %c0_19], %14 {strides = array<i32>} : memref<200x25xf32, #tpu.memory_space<vmem>>, vector<10x25xf32>,
    %c0_20 = arith.constant 0 : index
    %c4 = arith.constant 4 : index
    %16 = vector.load %arg14[%c0_20, %c4] : memref<40x29xf32, #tpu.memory_space<vmem>>, vector<10x25xf32>
    %c40 = arith.constant 40 : index
    %c0_21 = arith.constant 0 : index
    %17 = vector.load %arg15[%c40, %c0_21] : memref<200x25xf32, #tpu.memory_space<vmem>>, vector<10x25xf32>
    tpu.vector_store %arg15[%c40, %c0_21], %16 {strides = array<i32>} : memref<200x25xf32, #tpu.memory_space<vmem>>, vector<10x25xf32>,
    %c0_22 = arith.constant 0 : index
    %c0_23 = arith.constant 0 : index
    %c0_24 = arith.constant 0 : index
    %18 = vector.load %arg2[%c0_22, %c0_23, %c0_24] : memref<12x24x200xf32, #tpu.memory_space<vmem>>, vector<1x24x200xf32>
    %19 = vector.shape_cast %18 : vector<1x24x200xf32> to vector<24x200xf32>
    %20 = vector.extract_strided_slice %19 {offsets = [0, 0], sizes = [8, 50], strides = [1, 1]} : vector<24x200xf32> to vector<8x50xf32>
    %c0_25 = arith.constant 0 : index
    %c0_26 = arith.constant 0 : index
    %21 = vector.load %arg15[%c0_25, %c0_26] : memref<200x25xf32, #tpu.memory_space<vmem>>, vector<50x25xf32>
    %cst_27 = arith.constant dense<0.000000e+00> : vector<8x25xf32>
    %22 = tpu.matmul %20, %21, %cst_27 {dimension_numbers = #tpu.dot_dimension_numbers<[1], [0], [0], [1], [0, 0, 1, 1], [], []>} : vector<8x50xf32>, vector<50x25xf32>, vector<8x25xf32> -> vector<8x25xf32>
    %c0_28 = arith.constant 0 : index
    %c0_29 = arith.constant 0 : index
    %c0_30 = arith.constant 0 : index
    %23 = vector.load %arg3[%c0_28, %c0_29, %c0_30] : memref<12x24x1xf32, #tpu.memory_space<vmem>>, vector<1x24x1xf32>
    %24 = vector.shape_cast %23 : vector<1x24x1xf32> to vector<24x1xf32>
    %25 = vector.extract_strided_slice %24 {offsets = [0, 0], sizes = [8, 1], strides = [1, 1]} : vector<24x1xf32> to vector<8x1xf32>
    %26 = vector.broadcast %25 : vector<8x1xf32> to vector<8x25xf32>
    %27 = arith.addf %22, %26 : vector<8x25xf32>
    %cst_31 = arith.constant 0.000000e+00 : f32
    %28 = vector.broadcast %cst_31 : f32 to vector<8x25xf32>
    %29 = arith.maximumf %27, %28 : vector<8x25xf32>
    %c0_32 = arith.constant 0 : index
    %c2_33 = arith.constant 2 : index
    %30 = vector.load %arg14[%c0_32, %c2_33] : memref<40x29xf32, #tpu.memory_space<vmem>>, vector<8x25xf32>
    tpu.vector_store %arg14[%c0_32, %c2_33], %29 {strides = array<i32>} : memref<40x29xf32, #tpu.memory_space<vmem>>, vector<8x25xf32>,
    %cst_34 = arith.constant 0.000000e+00 : f32
    %31 = vector.broadcast %cst_34 : f32 to vector<8x2xf32>
    %c0_35 = arith.constant 0 : index
    %c0_36 = arith.constant 0 : index
    %32 = vector.load %arg14[%c0_35, %c0_36] : memref<40x29xf32, #tpu.memory_space<vmem>>, vector<8x2xf32>
    tpu.vector_store %arg14[%c0_35, %c0_36], %31 {strides = array<i32>} : memref<40x29xf32, #tpu.memory_space<vmem>>, vector<8x2xf32>,
    %c0_37 = arith.constant 0 : index
    %c27_38 = arith.constant 27 : index
    %33 = vector.load %arg14[%c0_37, %c27_38] : memref<40x29xf32, #tpu.memory_space<vmem>>, vector<8x2xf32>
    tpu.vector_store %arg14[%c0_37, %c27_38], %31 {strides = array<i32>} : memref<40x29xf32, #tpu.memory_space<vmem>>, vector<8x2xf32>,
    %c0_39 = arith.constant 0 : index
    %c0_40 = arith.constant 0 : index
    %34 = vector.load %arg14[%c0_39, %c0_40] : memref<40x29xf32, #tpu.memory_space<vmem>>, vector<8x25xf32>
    %c0_41 = arith.constant 0 : index
    %c0_42 = arith.constant 0 : index
    %35 = vector.load %arg15[%c0_41, %c0_42] : memref<200x25xf32, #tpu.memory_space<vmem>>, vector<8x25xf32>
    tpu.vector_store %arg15[%c0_41, %c0_42], %34 {strides = array<i32>} : memref<200x25xf32, #tpu.memory_space<vmem>>, vector<8x25xf32>,
    %c0_43 = arith.constant 0 : index
    %c1_44 = arith.constant 1 : index
    %36 = vector.load %arg14[%c0_43, %c1_44] : memref<40x29xf32, #tpu.memory_space<vmem>>, vector<8x25xf32>
    %c8 = arith.constant 8 : index
    %c0_45 = arith.constant 0 : index
    %37 = vector.load %arg15[%c8, %c0_45] : memref<200x25xf32, #tpu.memory_space<vmem>>, vector<8x25xf32>
    tpu.vector_store %arg15[%c8, %c0_45], %36 {strides = array<i32>} : memref<200x25xf32, #tpu.memory_space<vmem>>, vector<8x25xf32>,
    %c0_46 = arith.constant 0 : index
    %c2_47 = arith.constant 2 : index
    %38 = vector.load %arg14[%c0_46, %c2_47] : memref<40x29xf32, #tpu.memory_space<vmem>>, vector<8x25xf32>
    %c16 = arith.constant 16 : index
    %c0_48 = arith.constant 0 : index
    %39 = vector.load %arg15[%c16, %c0_48] : memref<200x25xf32, #tpu.memory_space<vmem>>, vector<8x25xf32>
    tpu.vector_store %arg15[%c16, %c0_48], %38 {strides = array<i32>} : memref<200x25xf32, #tpu.memory_space<vmem>>, vector<8x25xf32>,
    %c0_49 = arith.constant 0 : index
    %c3_50 = arith.constant 3 : index
    %40 = vector.load %arg14[%c0_49, %c3_50] : memref<40x29xf32, #tpu.memory_space<vmem>>, vector<8x25xf32>
    %c24 = arith.constant 24 : index
    %c0_51 = arith.constant 0 : index
    %41 = vector.load %arg15[%c24, %c0_51] : memref<200x25xf32, #tpu.memory_space<vmem>>, vector<8x25xf32>
    tpu.vector_store %arg15[%c24, %c0_51], %40 {strides = array<i32>} : memref<200x25xf32, #tpu.memory_space<vmem>>, vector<8x25xf32>,
    %c0_52 = arith.constant 0 : index
    %c4_53 = arith.constant 4 : index
    %42 = vector.load %arg14[%c0_52, %c4_53] : memref<40x29xf32, #tpu.memory_space<vmem>>, vector<8x25xf32>
    %c32 = arith.constant 32 : index
    %c0_54 = arith.constant 0 : index
    %43 = vector.load %arg15[%c32, %c0_54] : memref<200x25xf32, #tpu.memory_space<vmem>>, vector<8x25xf32>
    tpu.vector_store %arg15[%c32, %c0_54], %42 {strides = array<i32>} : memref<200x25xf32, #tpu.memory_space<vmem>>, vector<8x25xf32>,
    %c1_55 = arith.constant 1 : index
    %c0_56 = arith.constant 0 : index
    %c0_57 = arith.constant 0 : index
    %44 = vector.load %arg2[%c1_55, %c0_56, %c0_57] : memref<12x24x200xf32, #tpu.memory_space<vmem>>, vector<1x24x200xf32>
    %45 = vector.shape_cast %44 : vector<1x24x200xf32> to vector<24x200xf32>
    %46 = vector.extract_strided_slice %45 {offsets = [0, 0], sizes = [8, 40], strides = [1, 1]} : vector<24x200xf32> to vector<8x40xf32>
    %c0_58 = arith.constant 0 : index
    %c0_59 = arith.constant 0 : index
    %47 = vector.load %arg15[%c0_58, %c0_59] : memref<200x25xf32, #tpu.memory_space<vmem>>, vector<40x25xf32>
    %cst_60 = arith.constant dense<0.000000e+00> : vector<8x25xf32>
    %48 = tpu.matmul %46, %47, %cst_60 {dimension_numbers = #tpu.dot_dimension_numbers<[1], [0], [0], [1], [0, 0, 1, 1], [], []>} : vector<8x40xf32>, vector<40x25xf32>, vector<8x25xf32> -> vector<8x25xf32>
    %c1_61 = arith.constant 1 : index
    %c0_62 = arith.constant 0 : index
    %c0_63 = arith.constant 0 : index
    %49 = vector.load %arg3[%c1_61, %c0_62, %c0_63] : memref<12x24x1xf32, #tpu.memory_space<vmem>>, vector<1x24x1xf32>
    %50 = vector.shape_cast %49 : vector<1x24x1xf32> to vector<24x1xf32>
    %51 = vector.extract_strided_slice %50 {offsets = [0, 0], sizes = [8, 1], strides = [1, 1]} : vector<24x1xf32> to vector<8x1xf32>
    %52 = vector.broadcast %51 : vector<8x1xf32> to vector<8x25xf32>
    %53 = arith.addf %48, %52 : vector<8x25xf32>
    %cst_64 = arith.constant 0.000000e+00 : f32
    %54 = vector.broadcast %cst_64 : f32 to vector<8x25xf32>
    %55 = arith.maximumf %53, %54 : vector<8x25xf32>
    %c0_65 = arith.constant 0 : index
    %c2_66 = arith.constant 2 : index
    %56 = vector.load %arg14[%c0_65, %c2_66] : memref<40x29xf32, #tpu.memory_space<vmem>>, vector<8x25xf32>
    tpu.vector_store %arg14[%c0_65, %c2_66], %55 {strides = array<i32>} : memref<40x29xf32, #tpu.memory_space<vmem>>, vector<8x25xf32>,
    %cst_67 = arith.constant 0.000000e+00 : f32
    %57 = vector.broadcast %cst_67 : f32 to vector<8x2xf32>
    %c0_68 = arith.constant 0 : index
    %c0_69 = arith.constant 0 : index
    %58 = vector.load %arg14[%c0_68, %c0_69] : memref<40x29xf32, #tpu.memory_space<vmem>>, vector<8x2xf32>
    tpu.vector_store %arg14[%c0_68, %c0_69], %57 {strides = array<i32>} : memref<40x29xf32, #tpu.memory_space<vmem>>, vector<8x2xf32>,
    %c0_70 = arith.constant 0 : index
    %c27_71 = arith.constant 27 : index
    %59 = vector.load %arg14[%c0_70, %c27_71] : memref<40x29xf32, #tpu.memory_space<vmem>>, vector<8x2xf32>
    tpu.vector_store %arg14[%c0_70, %c27_71], %57 {strides = array<i32>} : memref<40x29xf32, #tpu.memory_space<vmem>>, vector<8x2xf32>,
    %c0_72 = arith.constant 0 : index
    %c0_73 = arith.constant 0 : index
    %60 = vector.load %arg14[%c0_72, %c0_73] : memref<40x29xf32, #tpu.memory_space<vmem>>, vector<8x25xf32>
    %c0_74 = arith.constant 0 : index
    %c0_75 = arith.constant 0 : index
    %61 = vector.load %arg15[%c0_74, %c0_75] : memref<200x25xf32, #tpu.memory_space<vmem>>, vector<8x25xf32>
    tpu.vector_store %arg15[%c0_74, %c0_75], %60 {strides = array<i32>} : memref<200x25xf32, #tpu.memory_space<vmem>>, vector<8x25xf32>,
    %c0_76 = arith.constant 0 : index
    %c1_77 = arith.constant 1 : index
    %62 = vector.load %arg14[%c0_76, %c1_77] : memref<40x29xf32, #tpu.memory_space<vmem>>, vector<8x25xf32>
    %c8_78 = arith.constant 8 : index
    %c0_79 = arith.constant 0 : index
    %63 = vector.load %arg15[%c8_78, %c0_79] : memref<200x25xf32, #tpu.memory_space<vmem>>, vector<8x25xf32>
    tpu.vector_store %arg15[%c8_78, %c0_79], %62 {strides = array<i32>} : memref<200x25xf32, #tpu.memory_space<vmem>>, vector<8x25xf32>,
    %c0_80 = arith.constant 0 : index
    %c2_81 = arith.constant 2 : index
    %64 = vector.load %arg14[%c0_80, %c2_81] : memref<40x29xf32, #tpu.memory_space<vmem>>, vector<8x25xf32>
    %c16_82 = arith.constant 16 : index
    %c0_83 = arith.constant 0 : index
    %65 = vector.load %arg15[%c16_82, %c0_83] : memref<200x25xf32, #tpu.memory_space<vmem>>, vector<8x25xf32>
    tpu.vector_store %arg15[%c16_82, %c0_83], %64 {strides = array<i32>} : memref<200x25xf32, #tpu.memory_space<vmem>>, vector<8x25xf32>,
    %c0_84 = arith.constant 0 : index
    %c3_85 = arith.constant 3 : index
    %66 = vector.load %arg14[%c0_84, %c3_85] : memref<40x29xf32, #tpu.memory_space<vmem>>, vector<8x25xf32>
    %c24_86 = arith.constant 24 : index
    %c0_87 = arith.constant 0 : index
    %67 = vector.load %arg15[%c24_86, %c0_87] : memref<200x25xf32, #tpu.memory_space<vmem>>, vector<8x25xf32>
    tpu.vector_store %arg15[%c24_86, %c0_87], %66 {strides = array<i32>} : memref<200x25xf32, #tpu.memory_space<vmem>>, vector<8x25xf32>,
    %c0_88 = arith.constant 0 : index
    %c4_89 = arith.constant 4 : index
    %68 = vector.load %arg14[%c0_88, %c4_89] : memref<40x29xf32, #tpu.memory_space<vmem>>, vector<8x25xf32>
    %c32_90 = arith.constant 32 : index
    %c0_91 = arith.constant 0 : index
    %69 = vector.load %arg15[%c32_90, %c0_91] : memref<200x25xf32, #tpu.memory_space<vmem>>, vector<8x25xf32>
    tpu.vector_store %arg15[%c32_90, %c0_91], %68 {strides = array<i32>} : memref<200x25xf32, #tpu.memory_space<vmem>>, vector<8x25xf32>,
    %c2_92 = arith.constant 2 : index
    %c0_93 = arith.constant 0 : index
    %c0_94 = arith.constant 0 : index
    %70 = vector.load %arg2[%c2_92, %c0_93, %c0_94] : memref<12x24x200xf32, #tpu.memory_space<vmem>>, vector<1x24x200xf32>
    %71 = vector.shape_cast %70 : vector<1x24x200xf32> to vector<24x200xf32>
    %72 = vector.extract_strided_slice %71 {offsets = [0, 0], sizes = [8, 40], strides = [1, 1]} : vector<24x200xf32> to vector<8x40xf32>
    %c0_95 = arith.constant 0 : index
    %c0_96 = arith.constant 0 : index
    %73 = vector.load %arg15[%c0_95, %c0_96] : memref<200x25xf32, #tpu.memory_space<vmem>>, vector<40x25xf32>
    %cst_97 = arith.constant dense<0.000000e+00> : vector<8x25xf32>
    %74 = tpu.matmul %72, %73, %cst_97 {dimension_numbers = #tpu.dot_dimension_numbers<[1], [0], [0], [1], [0, 0, 1, 1], [], []>} : vector<8x40xf32>, vector<40x25xf32>, vector<8x25xf32> -> vector<8x25xf32>
    %c2_98 = arith.constant 2 : index
    %c0_99 = arith.constant 0 : index
    %c0_100 = arith.constant 0 : index
    %75 = vector.load %arg3[%c2_98, %c0_99, %c0_100] : memref<12x24x1xf32, #tpu.memory_space<vmem>>, vector<1x24x1xf32>
    %76 = vector.shape_cast %75 : vector<1x24x1xf32> to vector<24x1xf32>
    %77 = vector.extract_strided_slice %76 {offsets = [0, 0], sizes = [8, 1], strides = [1, 1]} : vector<24x1xf32> to vector<8x1xf32>
    %78 = vector.broadcast %77 : vector<8x1xf32> to vector<8x25xf32>
    %79 = arith.addf %74, %78 : vector<8x25xf32>
    %cst_101 = arith.constant 0.000000e+00 : f32
    %80 = vector.broadcast %cst_101 : f32 to vector<8x25xf32>
    %81 = arith.maximumf %79, %80 : vector<8x25xf32>
    %cst_102 = arith.constant dense<0.000000e+00> : vector<8xf32>
    %82 = vector.multi_reduction <add>, %81, %cst_102 [1] : vector<8x25xf32> to vector<8xf32>
    %83 = vector.shape_cast %82 : vector<8xf32> to vector<8x1xf32>
    %cst_103 = arith.constant 2.500000e+01 : f32
    %84 = vector.broadcast %cst_103 : f32 to vector<8x1xf32>
    %85 = arith.divf %83, %84 : vector<8x1xf32>
    %c0_104 = arith.constant 0 : index
    %c0_105 = arith.constant 0 : index
    %c0_106 = arith.constant 0 : index
    %86 = vector.load %arg4[%c0_104, %c0_105, %c0_106] : memref<3x3x24xf32, #tpu.memory_space<vmem>>, vector<1x3x24xf32>
    %87 = vector.shape_cast %86 : vector<1x3x24xf32> to vector<3x24xf32>
    %88 = vector.extract_strided_slice %87 {offsets = [0, 0], sizes = [1, 8], strides = [1, 1]} : vector<3x24xf32> to vector<1x8xf32>
    %cst_107 = arith.constant dense<0.000000e+00> : vector<1x1xf32>
    %89 = tpu.matmul %88, %85, %cst_107 {dimension_numbers = #tpu.dot_dimension_numbers<[1], [0], [0], [1], [0, 0, 1, 1], [], []>} : vector<1x8xf32>, vector<8x1xf32>, vector<1x1xf32> -> vector<1x1xf32>
    %c0_108 = arith.constant 0 : index
    %c0_109 = arith.constant 0 : index
    %c0_110 = arith.constant 0 : index
    %90 = vector.load %arg5[%c0_108, %c0_109, %c0_110] : memref<3x3x1xf32, #tpu.memory_space<vmem>>, vector<1x3x1xf32>
    %91 = vector.shape_cast %90 : vector<1x3x1xf32> to vector<3x1xf32>
    %92 = vector.extract_strided_slice %91 {offsets = [0, 0], sizes = [1, 1], strides = [1, 1]} : vector<3x1xf32> to vector<1x1xf32>
    %93 = arith.addf %89, %92 : vector<1x1xf32>
    %cst_111 = arith.constant 0.000000e+00 : f32
    %94 = vector.broadcast %cst_111 : f32 to vector<1x1xf32>
    %95 = arith.maximumf %93, %94 : vector<1x1xf32>
    %c0_112 = arith.constant 0 : index
    %c0_113 = arith.constant 0 : index
    %c0_114 = arith.constant 0 : index
    %96 = vector.load %arg6[%c0_112, %c0_113, %c0_114] : memref<3x24x3xf32, #tpu.memory_space<vmem>>, vector<1x24x3xf32>
    %97 = vector.shape_cast %96 : vector<1x24x3xf32> to vector<24x3xf32>
    %98 = vector.extract_strided_slice %97 {offsets = [0, 0], sizes = [8, 1], strides = [1, 1]} : vector<24x3xf32> to vector<8x1xf32>
    %cst_115 = arith.constant dense<0.000000e+00> : vector<8x1xf32>
    %99 = tpu.matmul %98, %95, %cst_115 {dimension_numbers = #tpu.dot_dimension_numbers<[1], [0], [0], [1], [0, 0, 1, 1], [], []>} : vector<8x1xf32>, vector<1x1xf32>, vector<8x1xf32> -> vector<8x1xf32>
    %c0_116 = arith.constant 0 : index
    %c0_117 = arith.constant 0 : index
    %c0_118 = arith.constant 0 : index
    %100 = vector.load %arg7[%c0_116, %c0_117, %c0_118] : memref<3x24x1xf32, #tpu.memory_space<vmem>>, vector<1x24x1xf32>
    %101 = vector.shape_cast %100 : vector<1x24x1xf32> to vector<24x1xf32>
    %102 = vector.extract_strided_slice %101 {offsets = [0, 0], sizes = [8, 1], strides = [1, 1]} : vector<24x1xf32> to vector<8x1xf32>
    %103 = arith.addf %99, %102 : vector<8x1xf32>
    %104 = arith.negf %103 : vector<8x1xf32>
    %105 = math.exp %104 : vector<8x1xf32>
    %cst_119 = arith.constant 1.000000e+00 : f32
    %106 = vector.broadcast %cst_119 : f32 to vector<8x1xf32>
    %107 = arith.addf %106, %105 : vector<8x1xf32>
    %108 = arith.divf %106, %107 : vector<8x1xf32>
    %109 = vector.broadcast %108 : vector<8x1xf32> to vector<8x25xf32>
    %110 = arith.addf %81, %109 : vector<8x25xf32>
    %111 = arith.addf %29, %110 : vector<8x25xf32>
    %c0_120 = arith.constant 0 : index
    %c0_121 = arith.constant 0 : index
    %112 = vector.load %arg9[%c0_120, %c0_121] : memref<25x5xf32, #tpu.memory_space<vmem>>, vector<25x5xf32>
    %c0_122 = arith.constant 0 : index
    %c2_123 = arith.constant 2 : index
    %113 = vector.load %arg14[%c0_122, %c2_123] : memref<40x29xf32, #tpu.memory_space<vmem>>, vector<8x25xf32>
    tpu.vector_store %arg14[%c0_122, %c2_123], %111 {strides = array<i32>} : memref<40x29xf32, #tpu.memory_space<vmem>>, vector<8x25xf32>,
    %cst_124 = arith.constant 0.000000e+00 : f32
    %114 = vector.broadcast %cst_124 : f32 to vector<8x2xf32>
    %c0_125 = arith.constant 0 : index
    %c0_126 = arith.constant 0 : index
    %115 = vector.load %arg14[%c0_125, %c0_126] : memref<40x29xf32, #tpu.memory_space<vmem>>, vector<8x2xf32>
    tpu.vector_store %arg14[%c0_125, %c0_126], %114 {strides = array<i32>} : memref<40x29xf32, #tpu.memory_space<vmem>>, vector<8x2xf32>,
    %c0_127 = arith.constant 0 : index
    %c27_128 = arith.constant 27 : index
    %116 = vector.load %arg14[%c0_127, %c27_128] : memref<40x29xf32, #tpu.memory_space<vmem>>, vector<8x2xf32>
    tpu.vector_store %arg14[%c0_127, %c27_128], %114 {strides = array<i32>} : memref<40x29xf32, #tpu.memory_space<vmem>>, vector<8x2xf32>,
    %c0_129 = arith.constant 0 : index
    %c0_130 = arith.constant 0 : index
    %117 = vector.load %arg14[%c0_129, %c0_130] : memref<40x29xf32, #tpu.memory_space<vmem>>, vector<8x25xf32>
    %c0_131 = arith.constant 0 : index
    %c0_132 = arith.constant 0 : index
    %118 = vector.load %arg15[%c0_131, %c0_132] : memref<200x25xf32, #tpu.memory_space<vmem>>, vector<8x25xf32>
    tpu.vector_store %arg15[%c0_131, %c0_132], %117 {strides = array<i32>} : memref<200x25xf32, #tpu.memory_space<vmem>>, vector<8x25xf32>,
    %c0_133 = arith.constant 0 : index
    %c1_134 = arith.constant 1 : index
    %119 = vector.load %arg14[%c0_133, %c1_134] : memref<40x29xf32, #tpu.memory_space<vmem>>, vector<8x25xf32>
    %c8_135 = arith.constant 8 : index
    %c0_136 = arith.constant 0 : index
    %120 = vector.load %arg15[%c8_135, %c0_136] : memref<200x25xf32, #tpu.memory_space<vmem>>, vector<8x25xf32>
    tpu.vector_store %arg15[%c8_135, %c0_136], %119 {strides = array<i32>} : memref<200x25xf32, #tpu.memory_space<vmem>>, vector<8x25xf32>,
    %c0_137 = arith.constant 0 : index
    %c2_138 = arith.constant 2 : index
    %121 = vector.load %arg14[%c0_137, %c2_138] : memref<40x29xf32, #tpu.memory_space<vmem>>, vector<8x25xf32>
    %c16_139 = arith.constant 16 : index
    %c0_140 = arith.constant 0 : index
    %122 = vector.load %arg15[%c16_139, %c0_140] : memref<200x25xf32, #tpu.memory_space<vmem>>, vector<8x25xf32>
    tpu.vector_store %arg15[%c16_139, %c0_140], %121 {strides = array<i32>} : memref<200x25xf32, #tpu.memory_space<vmem>>, vector<8x25xf32>,
    %c0_141 = arith.constant 0 : index
    %c3_142 = arith.constant 3 : index
    %123 = vector.load %arg14[%c0_141, %c3_142] : memref<40x29xf32, #tpu.memory_space<vmem>>, vector<8x25xf32>
    %c24_143 = arith.constant 24 : index
    %c0_144 = arith.constant 0 : index
    %124 = vector.load %arg15[%c24_143, %c0_144] : memref<200x25xf32, #tpu.memory_space<vmem>>, vector<8x25xf32>
    tpu.vector_store %arg15[%c24_143, %c0_144], %123 {strides = array<i32>} : memref<200x25xf32, #tpu.memory_space<vmem>>, vector<8x25xf32>,
    %c0_145 = arith.constant 0 : index
    %c4_146 = arith.constant 4 : index
    %125 = vector.load %arg14[%c0_145, %c4_146] : memref<40x29xf32, #tpu.memory_space<vmem>>, vector<8x25xf32>
    %c32_147 = arith.constant 32 : index
    %c0_148 = arith.constant 0 : index
    %126 = vector.load %arg15[%c32_147, %c0_148] : memref<200x25xf32, #tpu.memory_space<vmem>>, vector<8x25xf32>
    tpu.vector_store %arg15[%c32_147, %c0_148], %125 {strides = array<i32>} : memref<200x25xf32, #tpu.memory_space<vmem>>, vector<8x25xf32>,
    %c3_149 = arith.constant 3 : index
    %c0_150 = arith.constant 0 : index
    %c0_151 = arith.constant 0 : index
    %127 = vector.load %arg2[%c3_149, %c0_150, %c0_151] : memref<12x24x200xf32, #tpu.memory_space<vmem>>, vector<1x24x200xf32>
    %128 = vector.shape_cast %127 : vector<1x24x200xf32> to vector<24x200xf32>
    %129 = vector.extract_strided_slice %128 {offsets = [0, 0], sizes = [16, 40], strides = [1, 1]} : vector<24x200xf32> to vector<16x40xf32>
    %c0_152 = arith.constant 0 : index
    %c0_153 = arith.constant 0 : index
    %130 = vector.load %arg15[%c0_152, %c0_153] : memref<200x25xf32, #tpu.memory_space<vmem>>, vector<40x25xf32>
    %cst_154 = arith.constant dense<0.000000e+00> : vector<16x25xf32>
    %131 = tpu.matmul %129, %130, %cst_154 {dimension_numbers = #tpu.dot_dimension_numbers<[1], [0], [0], [1], [0, 0, 1, 1], [], []>} : vector<16x40xf32>, vector<40x25xf32>, vector<16x25xf32> -> vector<16x25xf32>
    %cst_155 = arith.constant dense<0.000000e+00> : vector<16x5xf32>
    %132 = tpu.matmul %131, %112, %cst_155 {dimension_numbers = #tpu.dot_dimension_numbers<[1], [0], [0], [1], [0, 0, 1, 1], [], []>} : vector<16x25xf32>, vector<25x5xf32>, vector<16x5xf32> -> vector<16x5xf32>
    %c3_156 = arith.constant 3 : index
    %c0_157 = arith.constant 0 : index
    %c0_158 = arith.constant 0 : index
    %133 = vector.load %arg3[%c3_156, %c0_157, %c0_158] : memref<12x24x1xf32, #tpu.memory_space<vmem>>, vector<1x24x1xf32>
    %134 = vector.shape_cast %133 : vector<1x24x1xf32> to vector<24x1xf32>
    %135 = vector.extract_strided_slice %134 {offsets = [0, 0], sizes = [16, 1], strides = [1, 1]} : vector<24x1xf32> to vector<16x1xf32>
    %136 = vector.broadcast %135 : vector<16x1xf32> to vector<16x5xf32>
    %137 = arith.addf %132, %136 : vector<16x5xf32>
    %cst_159 = arith.constant 0.000000e+00 : f32
    %138 = vector.broadcast %cst_159 : f32 to vector<16x5xf32>
    %139 = arith.maximumf %137, %138 : vector<16x5xf32>
    %c0_160 = arith.constant 0 : index
    %c2_161 = arith.constant 2 : index
    %140 = vector.load %arg14[%c0_160, %c2_161] : memref<40x29xf32, #tpu.memory_space<vmem>>, vector<16x5xf32>
    tpu.vector_store %arg14[%c0_160, %c2_161], %139 {strides = array<i32>} : memref<40x29xf32, #tpu.memory_space<vmem>>, vector<16x5xf32>,
    %cst_162 = arith.constant 0.000000e+00 : f32
    %141 = vector.broadcast %cst_162 : f32 to vector<16x2xf32>
    %c0_163 = arith.constant 0 : index
    %c0_164 = arith.constant 0 : index
    %142 = vector.load %arg14[%c0_163, %c0_164] : memref<40x29xf32, #tpu.memory_space<vmem>>, vector<16x2xf32>
    tpu.vector_store %arg14[%c0_163, %c0_164], %141 {strides = array<i32>} : memref<40x29xf32, #tpu.memory_space<vmem>>, vector<16x2xf32>,
    %c0_165 = arith.constant 0 : index
    %c7 = arith.constant 7 : index
    %143 = vector.load %arg14[%c0_165, %c7] : memref<40x29xf32, #tpu.memory_space<vmem>>, vector<16x2xf32>
    tpu.vector_store %arg14[%c0_165, %c7], %141 {strides = array<i32>} : memref<40x29xf32, #tpu.memory_space<vmem>>, vector<16x2xf32>,
    %c0_166 = arith.constant 0 : index
    %c0_167 = arith.constant 0 : index
    %144 = vector.load %arg14[%c0_166, %c0_167] : memref<40x29xf32, #tpu.memory_space<vmem>>, vector<16x5xf32>
    %c0_168 = arith.constant 0 : index
    %c0_169 = arith.constant 0 : index
    %145 = vector.load %arg15[%c0_168, %c0_169] : memref<200x25xf32, #tpu.memory_space<vmem>>, vector<16x5xf32>
    tpu.vector_store %arg15[%c0_168, %c0_169], %144 {strides = array<i32>} : memref<200x25xf32, #tpu.memory_space<vmem>>, vector<16x5xf32>,
    %c0_170 = arith.constant 0 : index
    %c1_171 = arith.constant 1 : index
    %146 = vector.load %arg14[%c0_170, %c1_171] : memref<40x29xf32, #tpu.memory_space<vmem>>, vector<16x5xf32>
    %c16_172 = arith.constant 16 : index
    %c0_173 = arith.constant 0 : index
    %147 = vector.load %arg15[%c16_172, %c0_173] : memref<200x25xf32, #tpu.memory_space<vmem>>, vector<16x5xf32>
    tpu.vector_store %arg15[%c16_172, %c0_173], %146 {strides = array<i32>} : memref<200x25xf32, #tpu.memory_space<vmem>>, vector<16x5xf32>,
    %c0_174 = arith.constant 0 : index
    %c2_175 = arith.constant 2 : index
    %148 = vector.load %arg14[%c0_174, %c2_175] : memref<40x29xf32, #tpu.memory_space<vmem>>, vector<16x5xf32>
    %c32_176 = arith.constant 32 : index
    %c0_177 = arith.constant 0 : index
    %149 = vector.load %arg15[%c32_176, %c0_177] : memref<200x25xf32, #tpu.memory_space<vmem>>, vector<16x5xf32>
    tpu.vector_store %arg15[%c32_176, %c0_177], %148 {strides = array<i32>} : memref<200x25xf32, #tpu.memory_space<vmem>>, vector<16x5xf32>,
    %c0_178 = arith.constant 0 : index
    %c3_179 = arith.constant 3 : index
    %150 = vector.load %arg14[%c0_178, %c3_179] : memref<40x29xf32, #tpu.memory_space<vmem>>, vector<16x5xf32>
    %c48 = arith.constant 48 : index
    %c0_180 = arith.constant 0 : index
    %151 = vector.load %arg15[%c48, %c0_180] : memref<200x25xf32, #tpu.memory_space<vmem>>, vector<16x5xf32>
    tpu.vector_store %arg15[%c48, %c0_180], %150 {strides = array<i32>} : memref<200x25xf32, #tpu.memory_space<vmem>>, vector<16x5xf32>,
    %c0_181 = arith.constant 0 : index
    %c4_182 = arith.constant 4 : index
    %152 = vector.load %arg14[%c0_181, %c4_182] : memref<40x29xf32, #tpu.memory_space<vmem>>, vector<16x5xf32>
    %c64 = arith.constant 64 : index
    %c0_183 = arith.constant 0 : index
    %153 = vector.load %arg15[%c64, %c0_183] : memref<200x25xf32, #tpu.memory_space<vmem>>, vector<16x5xf32>
    tpu.vector_store %arg15[%c64, %c0_183], %152 {strides = array<i32>} : memref<200x25xf32, #tpu.memory_space<vmem>>, vector<16x5xf32>,
    %c4_184 = arith.constant 4 : index
    %c0_185 = arith.constant 0 : index
    %c0_186 = arith.constant 0 : index
    %154 = vector.load %arg2[%c4_184, %c0_185, %c0_186] : memref<12x24x200xf32, #tpu.memory_space<vmem>>, vector<1x24x200xf32>
    %155 = vector.shape_cast %154 : vector<1x24x200xf32> to vector<24x200xf32>
    %156 = vector.extract_strided_slice %155 {offsets = [0, 0], sizes = [16, 80], strides = [1, 1]} : vector<24x200xf32> to vector<16x80xf32>
    %c0_187 = arith.constant 0 : index
    %c0_188 = arith.constant 0 : index
    %157 = vector.load %arg15[%c0_187, %c0_188] : memref<200x25xf32, #tpu.memory_space<vmem>>, vector<80x5xf32>
    %cst_189 = arith.constant dense<0.000000e+00> : vector<16x5xf32>
    %158 = tpu.matmul %156, %157, %cst_189 {dimension_numbers = #tpu.dot_dimension_numbers<[1], [0], [0], [1], [0, 0, 1, 1], [], []>} : vector<16x80xf32>, vector<80x5xf32>, vector<16x5xf32> -> vector<16x5xf32>
    %c4_190 = arith.constant 4 : index
    %c0_191 = arith.constant 0 : index
    %c0_192 = arith.constant 0 : index
    %159 = vector.load %arg3[%c4_190, %c0_191, %c0_192] : memref<12x24x1xf32, #tpu.memory_space<vmem>>, vector<1x24x1xf32>
    %160 = vector.shape_cast %159 : vector<1x24x1xf32> to vector<24x1xf32>
    %161 = vector.extract_strided_slice %160 {offsets = [0, 0], sizes = [16, 1], strides = [1, 1]} : vector<24x1xf32> to vector<16x1xf32>
    %162 = vector.broadcast %161 : vector<16x1xf32> to vector<16x5xf32>
    %163 = arith.addf %158, %162 : vector<16x5xf32>
    %cst_193 = arith.constant 0.000000e+00 : f32
    %164 = vector.broadcast %cst_193 : f32 to vector<16x5xf32>
    %165 = arith.maximumf %163, %164 : vector<16x5xf32>
    %c0_194 = arith.constant 0 : index
    %c2_195 = arith.constant 2 : index
    %166 = vector.load %arg14[%c0_194, %c2_195] : memref<40x29xf32, #tpu.memory_space<vmem>>, vector<16x5xf32>
    tpu.vector_store %arg14[%c0_194, %c2_195], %165 {strides = array<i32>} : memref<40x29xf32, #tpu.memory_space<vmem>>, vector<16x5xf32>,
    %cst_196 = arith.constant 0.000000e+00 : f32
    %167 = vector.broadcast %cst_196 : f32 to vector<16x2xf32>
    %c0_197 = arith.constant 0 : index
    %c0_198 = arith.constant 0 : index
    %168 = vector.load %arg14[%c0_197, %c0_198] : memref<40x29xf32, #tpu.memory_space<vmem>>, vector<16x2xf32>
    tpu.vector_store %arg14[%c0_197, %c0_198], %167 {strides = array<i32>} : memref<40x29xf32, #tpu.memory_space<vmem>>, vector<16x2xf32>,
    %c0_199 = arith.constant 0 : index
    %c7_200 = arith.constant 7 : index
    %169 = vector.load %arg14[%c0_199, %c7_200] : memref<40x29xf32, #tpu.memory_space<vmem>>, vector<16x2xf32>
    tpu.vector_store %arg14[%c0_199, %c7_200], %167 {strides = array<i32>} : memref<40x29xf32, #tpu.memory_space<vmem>>, vector<16x2xf32>,
    %c0_201 = arith.constant 0 : index
    %c0_202 = arith.constant 0 : index
    %170 = vector.load %arg14[%c0_201, %c0_202] : memref<40x29xf32, #tpu.memory_space<vmem>>, vector<16x5xf32>
    %c0_203 = arith.constant 0 : index
    %c0_204 = arith.constant 0 : index
    %171 = vector.load %arg15[%c0_203, %c0_204] : memref<200x25xf32, #tpu.memory_space<vmem>>, vector<16x5xf32>
    tpu.vector_store %arg15[%c0_203, %c0_204], %170 {strides = array<i32>} : memref<200x25xf32, #tpu.memory_space<vmem>>, vector<16x5xf32>,
    %c0_205 = arith.constant 0 : index
    %c1_206 = arith.constant 1 : index
    %172 = vector.load %arg14[%c0_205, %c1_206] : memref<40x29xf32, #tpu.memory_space<vmem>>, vector<16x5xf32>
    %c16_207 = arith.constant 16 : index
    %c0_208 = arith.constant 0 : index
    %173 = vector.load %arg15[%c16_207, %c0_208] : memref<200x25xf32, #tpu.memory_space<vmem>>, vector<16x5xf32>
    tpu.vector_store %arg15[%c16_207, %c0_208], %172 {strides = array<i32>} : memref<200x25xf32, #tpu.memory_space<vmem>>, vector<16x5xf32>,
    %c0_209 = arith.constant 0 : index
    %c2_210 = arith.constant 2 : index
    %174 = vector.load %arg14[%c0_209, %c2_210] : memref<40x29xf32, #tpu.memory_space<vmem>>, vector<16x5xf32>
    %c32_211 = arith.constant 32 : index
    %c0_212 = arith.constant 0 : index
    %175 = vector.load %arg15[%c32_211, %c0_212] : memref<200x25xf32, #tpu.memory_space<vmem>>, vector<16x5xf32>
    tpu.vector_store %arg15[%c32_211, %c0_212], %174 {strides = array<i32>} : memref<200x25xf32, #tpu.memory_space<vmem>>, vector<16x5xf32>,
    %c0_213 = arith.constant 0 : index
    %c3_214 = arith.constant 3 : index
    %176 = vector.load %arg14[%c0_213, %c3_214] : memref<40x29xf32, #tpu.memory_space<vmem>>, vector<16x5xf32>
    %c48_215 = arith.constant 48 : index
    %c0_216 = arith.constant 0 : index
    %177 = vector.load %arg15[%c48_215, %c0_216] : memref<200x25xf32, #tpu.memory_space<vmem>>, vector<16x5xf32>
    tpu.vector_store %arg15[%c48_215, %c0_216], %176 {strides = array<i32>} : memref<200x25xf32, #tpu.memory_space<vmem>>, vector<16x5xf32>,
    %c0_217 = arith.constant 0 : index
    %c4_218 = arith.constant 4 : index
    %178 = vector.load %arg14[%c0_217, %c4_218] : memref<40x29xf32, #tpu.memory_space<vmem>>, vector<16x5xf32>
    %c64_219 = arith.constant 64 : index
    %c0_220 = arith.constant 0 : index
    %179 = vector.load %arg15[%c64_219, %c0_220] : memref<200x25xf32, #tpu.memory_space<vmem>>, vector<16x5xf32>
    tpu.vector_store %arg15[%c64_219, %c0_220], %178 {strides = array<i32>} : memref<200x25xf32, #tpu.memory_space<vmem>>, vector<16x5xf32>,
    %c5 = arith.constant 5 : index
    %c0_221 = arith.constant 0 : index
    %c0_222 = arith.constant 0 : index
    %180 = vector.load %arg2[%c5, %c0_221, %c0_222] : memref<12x24x200xf32, #tpu.memory_space<vmem>>, vector<1x24x200xf32>
    %181 = vector.shape_cast %180 : vector<1x24x200xf32> to vector<24x200xf32>
    %182 = vector.extract_strided_slice %181 {offsets = [0, 0], sizes = [16, 80], strides = [1, 1]} : vector<24x200xf32> to vector<16x80xf32>
    %c0_223 = arith.constant 0 : index
    %c0_224 = arith.constant 0 : index
    %183 = vector.load %arg15[%c0_223, %c0_224] : memref<200x25xf32, #tpu.memory_space<vmem>>, vector<80x5xf32>
    %cst_225 = arith.constant dense<0.000000e+00> : vector<16x5xf32>
    %184 = tpu.matmul %182, %183, %cst_225 {dimension_numbers = #tpu.dot_dimension_numbers<[1], [0], [0], [1], [0, 0, 1, 1], [], []>} : vector<16x80xf32>, vector<80x5xf32>, vector<16x5xf32> -> vector<16x5xf32>
    %c5_226 = arith.constant 5 : index
    %c0_227 = arith.constant 0 : index
    %c0_228 = arith.constant 0 : index
    %185 = vector.load %arg3[%c5_226, %c0_227, %c0_228] : memref<12x24x1xf32, #tpu.memory_space<vmem>>, vector<1x24x1xf32>
    %186 = vector.shape_cast %185 : vector<1x24x1xf32> to vector<24x1xf32>
    %187 = vector.extract_strided_slice %186 {offsets = [0, 0], sizes = [16, 1], strides = [1, 1]} : vector<24x1xf32> to vector<16x1xf32>
    %188 = vector.broadcast %187 : vector<16x1xf32> to vector<16x5xf32>
    %189 = arith.addf %184, %188 : vector<16x5xf32>
    %cst_229 = arith.constant 0.000000e+00 : f32
    %190 = vector.broadcast %cst_229 : f32 to vector<16x5xf32>
    %191 = arith.maximumf %189, %190 : vector<16x5xf32>
    %cst_230 = arith.constant dense<0.000000e+00> : vector<16xf32>
    %192 = vector.multi_reduction <add>, %191, %cst_230 [1] : vector<16x5xf32> to vector<16xf32>
    %193 = vector.shape_cast %192 : vector<16xf32> to vector<16x1xf32>
    %cst_231 = arith.constant 5.000000e+00 : f32
    %194 = vector.broadcast %cst_231 : f32 to vector<16x1xf32>
    %195 = arith.divf %193, %194 : vector<16x1xf32>
    %c1_232 = arith.constant 1 : index
    %c0_233 = arith.constant 0 : index
    %c0_234 = arith.constant 0 : index
    %196 = vector.load %arg4[%c1_232, %c0_233, %c0_234] : memref<3x3x24xf32, #tpu.memory_space<vmem>>, vector<1x3x24xf32>
    %197 = vector.shape_cast %196 : vector<1x3x24xf32> to vector<3x24xf32>
    %198 = vector.extract_strided_slice %197 {offsets = [0, 0], sizes = [2, 16], strides = [1, 1]} : vector<3x24xf32> to vector<2x16xf32>
    %cst_235 = arith.constant dense<0.000000e+00> : vector<2x1xf32>
    %199 = tpu.matmul %198, %195, %cst_235 {dimension_numbers = #tpu.dot_dimension_numbers<[1], [0], [0], [1], [0, 0, 1, 1], [], []>} : vector<2x16xf32>, vector<16x1xf32>, vector<2x1xf32> -> vector<2x1xf32>
    %c1_236 = arith.constant 1 : index
    %c0_237 = arith.constant 0 : index
    %c0_238 = arith.constant 0 : index
    %200 = vector.load %arg5[%c1_236, %c0_237, %c0_238] : memref<3x3x1xf32, #tpu.memory_space<vmem>>, vector<1x3x1xf32>
    %201 = vector.shape_cast %200 : vector<1x3x1xf32> to vector<3x1xf32>
    %202 = vector.extract_strided_slice %201 {offsets = [0, 0], sizes = [2, 1], strides = [1, 1]} : vector<3x1xf32> to vector<2x1xf32>
    %203 = arith.addf %199, %202 : vector<2x1xf32>
    %cst_239 = arith.constant 0.000000e+00 : f32
    %204 = vector.broadcast %cst_239 : f32 to vector<2x1xf32>
    %205 = arith.maximumf %203, %204 : vector<2x1xf32>
    %c1_240 = arith.constant 1 : index
    %c0_241 = arith.constant 0 : index
    %c0_242 = arith.constant 0 : index
    %206 = vector.load %arg6[%c1_240, %c0_241, %c0_242] : memref<3x24x3xf32, #tpu.memory_space<vmem>>, vector<1x24x3xf32>
    %207 = vector.shape_cast %206 : vector<1x24x3xf32> to vector<24x3xf32>
    %208 = vector.extract_strided_slice %207 {offsets = [0, 0], sizes = [16, 2], strides = [1, 1]} : vector<24x3xf32> to vector<16x2xf32>
    %cst_243 = arith.constant dense<0.000000e+00> : vector<16x1xf32>
    %209 = tpu.matmul %208, %205, %cst_243 {dimension_numbers = #tpu.dot_dimension_numbers<[1], [0], [0], [1], [0, 0, 1, 1], [], []>} : vector<16x2xf32>, vector<2x1xf32>, vector<16x1xf32> -> vector<16x1xf32>
    %c1_244 = arith.constant 1 : index
    %c0_245 = arith.constant 0 : index
    %c0_246 = arith.constant 0 : index
    %210 = vector.load %arg7[%c1_244, %c0_245, %c0_246] : memref<3x24x1xf32, #tpu.memory_space<vmem>>, vector<1x24x1xf32>
    %211 = vector.shape_cast %210 : vector<1x24x1xf32> to vector<24x1xf32>
    %212 = vector.extract_strided_slice %211 {offsets = [0, 0], sizes = [16, 1], strides = [1, 1]} : vector<24x1xf32> to vector<16x1xf32>
    %213 = arith.addf %209, %212 : vector<16x1xf32>
    %214 = arith.negf %213 : vector<16x1xf32>
    %215 = math.exp %214 : vector<16x1xf32>
    %cst_247 = arith.constant 1.000000e+00 : f32
    %216 = vector.broadcast %cst_247 : f32 to vector<16x1xf32>
    %217 = arith.addf %216, %215 : vector<16x1xf32>
    %218 = arith.divf %216, %217 : vector<16x1xf32>
    %219 = vector.broadcast %218 : vector<16x1xf32> to vector<16x5xf32>
    %220 = arith.addf %191, %219 : vector<16x5xf32>
    %221 = arith.addf %139, %220 : vector<16x5xf32>
    %c0_248 = arith.constant 0 : index
    %c0_249 = arith.constant 0 : index
    %222 = vector.load %arg10[%c0_248, %c0_249] : memref<5x1xf32, #tpu.memory_space<vmem>>, vector<5x1xf32>
    %c0_250 = arith.constant 0 : index
    %c2_251 = arith.constant 2 : index
    %223 = vector.load %arg14[%c0_250, %c2_251] : memref<40x29xf32, #tpu.memory_space<vmem>>, vector<16x5xf32>
    tpu.vector_store %arg14[%c0_250, %c2_251], %221 {strides = array<i32>} : memref<40x29xf32, #tpu.memory_space<vmem>>, vector<16x5xf32>,
    %c16_252 = arith.constant 16 : index
    %c2_253 = arith.constant 2 : index
    %224 = vector.load %arg14[%c16_252, %c2_253] : memref<40x29xf32, #tpu.memory_space<vmem>>, vector<10x5xf32>
    tpu.vector_store %arg14[%c16_252, %c2_253], %3 {strides = array<i32>} : memref<40x29xf32, #tpu.memory_space<vmem>>, vector<10x5xf32>,
    %cst_254 = arith.constant 0.000000e+00 : f32
    %225 = vector.broadcast %cst_254 : f32 to vector<26x2xf32>
    %c0_255 = arith.constant 0 : index
    %c0_256 = arith.constant 0 : index
    %226 = vector.load %arg14[%c0_255, %c0_256] : memref<40x29xf32, #tpu.memory_space<vmem>>, vector<26x2xf32>
    tpu.vector_store %arg14[%c0_255, %c0_256], %225 {strides = array<i32>} : memref<40x29xf32, #tpu.memory_space<vmem>>, vector<26x2xf32>,
    %c0_257 = arith.constant 0 : index
    %c7_258 = arith.constant 7 : index
    %227 = vector.load %arg14[%c0_257, %c7_258] : memref<40x29xf32, #tpu.memory_space<vmem>>, vector<26x2xf32>
    tpu.vector_store %arg14[%c0_257, %c7_258], %225 {strides = array<i32>} : memref<40x29xf32, #tpu.memory_space<vmem>>, vector<26x2xf32>,
    %c0_259 = arith.constant 0 : index
    %c0_260 = arith.constant 0 : index
    %228 = vector.load %arg14[%c0_259, %c0_260] : memref<40x29xf32, #tpu.memory_space<vmem>>, vector<26x5xf32>
    %c0_261 = arith.constant 0 : index
    %c0_262 = arith.constant 0 : index
    %229 = vector.load %arg15[%c0_261, %c0_262] : memref<200x25xf32, #tpu.memory_space<vmem>>, vector<26x5xf32>
    tpu.vector_store %arg15[%c0_261, %c0_262], %228 {strides = array<i32>} : memref<200x25xf32, #tpu.memory_space<vmem>>, vector<26x5xf32>,
    %c0_263 = arith.constant 0 : index
    %c1_264 = arith.constant 1 : index
    %230 = vector.load %arg14[%c0_263, %c1_264] : memref<40x29xf32, #tpu.memory_space<vmem>>, vector<26x5xf32>
    %c26 = arith.constant 26 : index
    %c0_265 = arith.constant 0 : index
    %231 = vector.load %arg15[%c26, %c0_265] : memref<200x25xf32, #tpu.memory_space<vmem>>, vector<26x5xf32>
    tpu.vector_store %arg15[%c26, %c0_265], %230 {strides = array<i32>} : memref<200x25xf32, #tpu.memory_space<vmem>>, vector<26x5xf32>,
    %c0_266 = arith.constant 0 : index
    %c2_267 = arith.constant 2 : index
    %232 = vector.load %arg14[%c0_266, %c2_267] : memref<40x29xf32, #tpu.memory_space<vmem>>, vector<26x5xf32>
    %c52 = arith.constant 52 : index
    %c0_268 = arith.constant 0 : index
    %233 = vector.load %arg15[%c52, %c0_268] : memref<200x25xf32, #tpu.memory_space<vmem>>, vector<26x5xf32>
    tpu.vector_store %arg15[%c52, %c0_268], %232 {strides = array<i32>} : memref<200x25xf32, #tpu.memory_space<vmem>>, vector<26x5xf32>,
    %c0_269 = arith.constant 0 : index
    %c3_270 = arith.constant 3 : index
    %234 = vector.load %arg14[%c0_269, %c3_270] : memref<40x29xf32, #tpu.memory_space<vmem>>, vector<26x5xf32>
    %c78 = arith.constant 78 : index
    %c0_271 = arith.constant 0 : index
    %235 = vector.load %arg15[%c78, %c0_271] : memref<200x25xf32, #tpu.memory_space<vmem>>, vector<26x5xf32>
    tpu.vector_store %arg15[%c78, %c0_271], %234 {strides = array<i32>} : memref<200x25xf32, #tpu.memory_space<vmem>>, vector<26x5xf32>,
    %c0_272 = arith.constant 0 : index
    %c4_273 = arith.constant 4 : index
    %236 = vector.load %arg14[%c0_272, %c4_273] : memref<40x29xf32, #tpu.memory_space<vmem>>, vector<26x5xf32>
    %c104 = arith.constant 104 : index
    %c0_274 = arith.constant 0 : index
    %237 = vector.load %arg15[%c104, %c0_274] : memref<200x25xf32, #tpu.memory_space<vmem>>, vector<26x5xf32>
    tpu.vector_store %arg15[%c104, %c0_274], %236 {strides = array<i32>} : memref<200x25xf32, #tpu.memory_space<vmem>>, vector<26x5xf32>,
    %c6 = arith.constant 6 : index
    %c0_275 = arith.constant 0 : index
    %c0_276 = arith.constant 0 : index
    %238 = vector.load %arg2[%c6, %c0_275, %c0_276] : memref<12x24x200xf32, #tpu.memory_space<vmem>>, vector<1x24x200xf32>
    %239 = vector.shape_cast %238 : vector<1x24x200xf32> to vector<24x200xf32>
    %240 = vector.extract_strided_slice %239 {offsets = [0, 0], sizes = [24, 130], strides = [1, 1]} : vector<24x200xf32> to vector<24x130xf32>
    %c0_277 = arith.constant 0 : index
    %c0_278 = arith.constant 0 : index
    %241 = vector.load %arg15[%c0_277, %c0_278] : memref<200x25xf32, #tpu.memory_space<vmem>>, vector<130x5xf32>
    %cst_279 = arith.constant dense<0.000000e+00> : vector<24x5xf32>
    %242 = tpu.matmul %240, %241, %cst_279 {dimension_numbers = #tpu.dot_dimension_numbers<[1], [0], [0], [1], [0, 0, 1, 1], [], []>} : vector<24x130xf32>, vector<130x5xf32>, vector<24x5xf32> -> vector<24x5xf32>
    %cst_280 = arith.constant dense<0.000000e+00> : vector<24x1xf32>
    %243 = tpu.matmul %242, %222, %cst_280 {dimension_numbers = #tpu.dot_dimension_numbers<[1], [0], [0], [1], [0, 0, 1, 1], [], []>} : vector<24x5xf32>, vector<5x1xf32>, vector<24x1xf32> -> vector<24x1xf32>
    %c6_281 = arith.constant 6 : index
    %c0_282 = arith.constant 0 : index
    %c0_283 = arith.constant 0 : index
    %244 = vector.load %arg3[%c6_281, %c0_282, %c0_283] : memref<12x24x1xf32, #tpu.memory_space<vmem>>, vector<1x24x1xf32>
    %245 = vector.shape_cast %244 : vector<1x24x1xf32> to vector<24x1xf32>
    %246 = arith.addf %243, %245 : vector<24x1xf32>
    %cst_284 = arith.constant 0.000000e+00 : f32
    %247 = vector.broadcast %cst_284 : f32 to vector<24x1xf32>
    %248 = arith.maximumf %246, %247 : vector<24x1xf32>
    %c0_285 = arith.constant 0 : index
    %c2_286 = arith.constant 2 : index
    %249 = vector.load %arg14[%c0_285, %c2_286] : memref<40x29xf32, #tpu.memory_space<vmem>>, vector<24x1xf32>
    tpu.vector_store %arg14[%c0_285, %c2_286], %248 {strides = array<i32>} : memref<40x29xf32, #tpu.memory_space<vmem>>, vector<24x1xf32>,
    %cst_287 = arith.constant 0.000000e+00 : f32
    %250 = vector.broadcast %cst_287 : f32 to vector<24x2xf32>
    %c0_288 = arith.constant 0 : index
    %c0_289 = arith.constant 0 : index
    %251 = vector.load %arg14[%c0_288, %c0_289] : memref<40x29xf32, #tpu.memory_space<vmem>>, vector<24x2xf32>
    tpu.vector_store %arg14[%c0_288, %c0_289], %250 {strides = array<i32>} : memref<40x29xf32, #tpu.memory_space<vmem>>, vector<24x2xf32>,
    %c0_290 = arith.constant 0 : index
    %c3_291 = arith.constant 3 : index
    %252 = vector.load %arg14[%c0_290, %c3_291] : memref<40x29xf32, #tpu.memory_space<vmem>>, vector<24x2xf32>
    tpu.vector_store %arg14[%c0_290, %c3_291], %250 {strides = array<i32>} : memref<40x29xf32, #tpu.memory_space<vmem>>, vector<24x2xf32>,
    %c0_292 = arith.constant 0 : index
    %c0_293 = arith.constant 0 : index
    %253 = vector.load %arg14[%c0_292, %c0_293] : memref<40x29xf32, #tpu.memory_space<vmem>>, vector<24x1xf32>
    %c0_294 = arith.constant 0 : index
    %c0_295 = arith.constant 0 : index
    %254 = vector.load %arg15[%c0_294, %c0_295] : memref<200x25xf32, #tpu.memory_space<vmem>>, vector<24x1xf32>
    tpu.vector_store %arg15[%c0_294, %c0_295], %253 {strides = array<i32>} : memref<200x25xf32, #tpu.memory_space<vmem>>, vector<24x1xf32>,
    %c0_296 = arith.constant 0 : index
    %c1_297 = arith.constant 1 : index
    %255 = vector.load %arg14[%c0_296, %c1_297] : memref<40x29xf32, #tpu.memory_space<vmem>>, vector<24x1xf32>
    %c24_298 = arith.constant 24 : index
    %c0_299 = arith.constant 0 : index
    %256 = vector.load %arg15[%c24_298, %c0_299] : memref<200x25xf32, #tpu.memory_space<vmem>>, vector<24x1xf32>
    tpu.vector_store %arg15[%c24_298, %c0_299], %255 {strides = array<i32>} : memref<200x25xf32, #tpu.memory_space<vmem>>, vector<24x1xf32>,
    %c0_300 = arith.constant 0 : index
    %c2_301 = arith.constant 2 : index
    %257 = vector.load %arg14[%c0_300, %c2_301] : memref<40x29xf32, #tpu.memory_space<vmem>>, vector<24x1xf32>
    %c48_302 = arith.constant 48 : index
    %c0_303 = arith.constant 0 : index
    %258 = vector.load %arg15[%c48_302, %c0_303] : memref<200x25xf32, #tpu.memory_space<vmem>>, vector<24x1xf32>
    tpu.vector_store %arg15[%c48_302, %c0_303], %257 {strides = array<i32>} : memref<200x25xf32, #tpu.memory_space<vmem>>, vector<24x1xf32>,
    %c0_304 = arith.constant 0 : index
    %c3_305 = arith.constant 3 : index
    %259 = vector.load %arg14[%c0_304, %c3_305] : memref<40x29xf32, #tpu.memory_space<vmem>>, vector<24x1xf32>
    %c72 = arith.constant 72 : index
    %c0_306 = arith.constant 0 : index
    %260 = vector.load %arg15[%c72, %c0_306] : memref<200x25xf32, #tpu.memory_space<vmem>>, vector<24x1xf32>
    tpu.vector_store %arg15[%c72, %c0_306], %259 {strides = array<i32>} : memref<200x25xf32, #tpu.memory_space<vmem>>, vector<24x1xf32>,
    %c0_307 = arith.constant 0 : index
    %c4_308 = arith.constant 4 : index
    %261 = vector.load %arg14[%c0_307, %c4_308] : memref<40x29xf32, #tpu.memory_space<vmem>>, vector<24x1xf32>
    %c96 = arith.constant 96 : index
    %c0_309 = arith.constant 0 : index
    %262 = vector.load %arg15[%c96, %c0_309] : memref<200x25xf32, #tpu.memory_space<vmem>>, vector<24x1xf32>
    tpu.vector_store %arg15[%c96, %c0_309], %261 {strides = array<i32>} : memref<200x25xf32, #tpu.memory_space<vmem>>, vector<24x1xf32>,
    %c7_310 = arith.constant 7 : index
    %c0_311 = arith.constant 0 : index
    %c0_312 = arith.constant 0 : index
    %263 = vector.load %arg2[%c7_310, %c0_311, %c0_312] : memref<12x24x200xf32, #tpu.memory_space<vmem>>, vector<1x24x200xf32>
    %264 = vector.shape_cast %263 : vector<1x24x200xf32> to vector<24x200xf32>
    %265 = vector.extract_strided_slice %264 {offsets = [0, 0], sizes = [24, 120], strides = [1, 1]} : vector<24x200xf32> to vector<24x120xf32>
    %c0_313 = arith.constant 0 : index
    %c0_314 = arith.constant 0 : index
    %266 = vector.load %arg15[%c0_313, %c0_314] : memref<200x25xf32, #tpu.memory_space<vmem>>, vector<120x1xf32>
    %cst_315 = arith.constant dense<0.000000e+00> : vector<24x1xf32>
    %267 = tpu.matmul %265, %266, %cst_315 {dimension_numbers = #tpu.dot_dimension_numbers<[1], [0], [0], [1], [0, 0, 1, 1], [], []>} : vector<24x120xf32>, vector<120x1xf32>, vector<24x1xf32> -> vector<24x1xf32>
    %c7_316 = arith.constant 7 : index
    %c0_317 = arith.constant 0 : index
    %c0_318 = arith.constant 0 : index
    %268 = vector.load %arg3[%c7_316, %c0_317, %c0_318] : memref<12x24x1xf32, #tpu.memory_space<vmem>>, vector<1x24x1xf32>
    %269 = vector.shape_cast %268 : vector<1x24x1xf32> to vector<24x1xf32>
    %270 = arith.addf %267, %269 : vector<24x1xf32>
    %cst_319 = arith.constant 0.000000e+00 : f32
    %271 = vector.broadcast %cst_319 : f32 to vector<24x1xf32>
    %272 = arith.maximumf %270, %271 : vector<24x1xf32>
    %c0_320 = arith.constant 0 : index
    %c2_321 = arith.constant 2 : index
    %273 = vector.load %arg14[%c0_320, %c2_321] : memref<40x29xf32, #tpu.memory_space<vmem>>, vector<24x1xf32>
    tpu.vector_store %arg14[%c0_320, %c2_321], %272 {strides = array<i32>} : memref<40x29xf32, #tpu.memory_space<vmem>>, vector<24x1xf32>,
    %cst_322 = arith.constant 0.000000e+00 : f32
    %274 = vector.broadcast %cst_322 : f32 to vector<24x2xf32>
    %c0_323 = arith.constant 0 : index
    %c0_324 = arith.constant 0 : index
    %275 = vector.load %arg14[%c0_323, %c0_324] : memref<40x29xf32, #tpu.memory_space<vmem>>, vector<24x2xf32>
    tpu.vector_store %arg14[%c0_323, %c0_324], %274 {strides = array<i32>} : memref<40x29xf32, #tpu.memory_space<vmem>>, vector<24x2xf32>,
    %c0_325 = arith.constant 0 : index
    %c3_326 = arith.constant 3 : index
    %276 = vector.load %arg14[%c0_325, %c3_326] : memref<40x29xf32, #tpu.memory_space<vmem>>, vector<24x2xf32>
    tpu.vector_store %arg14[%c0_325, %c3_326], %274 {strides = array<i32>} : memref<40x29xf32, #tpu.memory_space<vmem>>, vector<24x2xf32>,
    %c0_327 = arith.constant 0 : index
    %c0_328 = arith.constant 0 : index
    %277 = vector.load %arg14[%c0_327, %c0_328] : memref<40x29xf32, #tpu.memory_space<vmem>>, vector<24x1xf32>
    %c0_329 = arith.constant 0 : index
    %c0_330 = arith.constant 0 : index
    %278 = vector.load %arg15[%c0_329, %c0_330] : memref<200x25xf32, #tpu.memory_space<vmem>>, vector<24x1xf32>
    tpu.vector_store %arg15[%c0_329, %c0_330], %277 {strides = array<i32>} : memref<200x25xf32, #tpu.memory_space<vmem>>, vector<24x1xf32>,
    %c0_331 = arith.constant 0 : index
    %c1_332 = arith.constant 1 : index
    %279 = vector.load %arg14[%c0_331, %c1_332] : memref<40x29xf32, #tpu.memory_space<vmem>>, vector<24x1xf32>
    %c24_333 = arith.constant 24 : index
    %c0_334 = arith.constant 0 : index
    %280 = vector.load %arg15[%c24_333, %c0_334] : memref<200x25xf32, #tpu.memory_space<vmem>>, vector<24x1xf32>
    tpu.vector_store %arg15[%c24_333, %c0_334], %279 {strides = array<i32>} : memref<200x25xf32, #tpu.memory_space<vmem>>, vector<24x1xf32>,
    %c0_335 = arith.constant 0 : index
    %c2_336 = arith.constant 2 : index
    %281 = vector.load %arg14[%c0_335, %c2_336] : memref<40x29xf32, #tpu.memory_space<vmem>>, vector<24x1xf32>
    %c48_337 = arith.constant 48 : index
    %c0_338 = arith.constant 0 : index
    %282 = vector.load %arg15[%c48_337, %c0_338] : memref<200x25xf32, #tpu.memory_space<vmem>>, vector<24x1xf32>
    tpu.vector_store %arg15[%c48_337, %c0_338], %281 {strides = array<i32>} : memref<200x25xf32, #tpu.memory_space<vmem>>, vector<24x1xf32>,
    %c0_339 = arith.constant 0 : index
    %c3_340 = arith.constant 3 : index
    %283 = vector.load %arg14[%c0_339, %c3_340] : memref<40x29xf32, #tpu.memory_space<vmem>>, vector<24x1xf32>
    %c72_341 = arith.constant 72 : index
    %c0_342 = arith.constant 0 : index
    %284 = vector.load %arg15[%c72_341, %c0_342] : memref<200x25xf32, #tpu.memory_space<vmem>>, vector<24x1xf32>
    tpu.vector_store %arg15[%c72_341, %c0_342], %283 {strides = array<i32>} : memref<200x25xf32, #tpu.memory_space<vmem>>, vector<24x1xf32>,
    %c0_343 = arith.constant 0 : index
    %c4_344 = arith.constant 4 : index
    %285 = vector.load %arg14[%c0_343, %c4_344] : memref<40x29xf32, #tpu.memory_space<vmem>>, vector<24x1xf32>
    %c96_345 = arith.constant 96 : index
    %c0_346 = arith.constant 0 : index
    %286 = vector.load %arg15[%c96_345, %c0_346] : memref<200x25xf32, #tpu.memory_space<vmem>>, vector<24x1xf32>
    tpu.vector_store %arg15[%c96_345, %c0_346], %285 {strides = array<i32>} : memref<200x25xf32, #tpu.memory_space<vmem>>, vector<24x1xf32>,
    %c8_347 = arith.constant 8 : index
    %c0_348 = arith.constant 0 : index
    %c0_349 = arith.constant 0 : index
    %287 = vector.load %arg2[%c8_347, %c0_348, %c0_349] : memref<12x24x200xf32, #tpu.memory_space<vmem>>, vector<1x24x200xf32>
    %288 = vector.shape_cast %287 : vector<1x24x200xf32> to vector<24x200xf32>
    %289 = vector.extract_strided_slice %288 {offsets = [0, 0], sizes = [24, 120], strides = [1, 1]} : vector<24x200xf32> to vector<24x120xf32>
    %c0_350 = arith.constant 0 : index
    %c0_351 = arith.constant 0 : index
    %290 = vector.load %arg15[%c0_350, %c0_351] : memref<200x25xf32, #tpu.memory_space<vmem>>, vector<120x1xf32>
    %cst_352 = arith.constant dense<0.000000e+00> : vector<24x1xf32>
    %291 = tpu.matmul %289, %290, %cst_352 {dimension_numbers = #tpu.dot_dimension_numbers<[1], [0], [0], [1], [0, 0, 1, 1], [], []>} : vector<24x120xf32>, vector<120x1xf32>, vector<24x1xf32> -> vector<24x1xf32>
    %c8_353 = arith.constant 8 : index
    %c0_354 = arith.constant 0 : index
    %c0_355 = arith.constant 0 : index
    %292 = vector.load %arg3[%c8_353, %c0_354, %c0_355] : memref<12x24x1xf32, #tpu.memory_space<vmem>>, vector<1x24x1xf32>
    %293 = vector.shape_cast %292 : vector<1x24x1xf32> to vector<24x1xf32>
    %294 = arith.addf %291, %293 : vector<24x1xf32>
    %cst_356 = arith.constant 0.000000e+00 : f32
    %295 = vector.broadcast %cst_356 : f32 to vector<24x1xf32>
    %296 = arith.maximumf %294, %295 : vector<24x1xf32>
    %cst_357 = arith.constant dense<0.000000e+00> : vector<24xf32>
    %297 = vector.multi_reduction <add>, %296, %cst_357 [1] : vector<24x1xf32> to vector<24xf32>
    %298 = vector.shape_cast %297 : vector<24xf32> to vector<24x1xf32>
    %cst_358 = arith.constant 1.000000e+00 : f32
    %299 = vector.broadcast %cst_358 : f32 to vector<24x1xf32>
    %300 = arith.divf %298, %299 : vector<24x1xf32>
    %c2_359 = arith.constant 2 : index
    %c0_360 = arith.constant 0 : index
    %c0_361 = arith.constant 0 : index
    %301 = vector.load %arg4[%c2_359, %c0_360, %c0_361] : memref<3x3x24xf32, #tpu.memory_space<vmem>>, vector<1x3x24xf32>
    %302 = vector.shape_cast %301 : vector<1x3x24xf32> to vector<3x24xf32>
    %cst_362 = arith.constant dense<0.000000e+00> : vector<3x1xf32>
    %303 = tpu.matmul %302, %300, %cst_362 {dimension_numbers = #tpu.dot_dimension_numbers<[1], [0], [0], [1], [0, 0, 1, 1], [], []>} : vector<3x24xf32>, vector<24x1xf32>, vector<3x1xf32> -> vector<3x1xf32>
    %c2_363 = arith.constant 2 : index
    %c0_364 = arith.constant 0 : index
    %c0_365 = arith.constant 0 : index
    %304 = vector.load %arg5[%c2_363, %c0_364, %c0_365] : memref<3x3x1xf32, #tpu.memory_space<vmem>>, vector<1x3x1xf32>
    %305 = vector.shape_cast %304 : vector<1x3x1xf32> to vector<3x1xf32>
    %306 = arith.addf %303, %305 : vector<3x1xf32>
    %cst_366 = arith.constant 0.000000e+00 : f32
    %307 = vector.broadcast %cst_366 : f32 to vector<3x1xf32>
    %308 = arith.maximumf %306, %307 : vector<3x1xf32>
    %c2_367 = arith.constant 2 : index
    %c0_368 = arith.constant 0 : index
    %c0_369 = arith.constant 0 : index
    %309 = vector.load %arg6[%c2_367, %c0_368, %c0_369] : memref<3x24x3xf32, #tpu.memory_space<vmem>>, vector<1x24x3xf32>
    %310 = vector.shape_cast %309 : vector<1x24x3xf32> to vector<24x3xf32>
    %cst_370 = arith.constant dense<0.000000e+00> : vector<24x1xf32>
    %311 = tpu.matmul %310, %308, %cst_370 {dimension_numbers = #tpu.dot_dimension_numbers<[1], [0], [0], [1], [0, 0, 1, 1], [], []>} : vector<24x3xf32>, vector<3x1xf32>, vector<24x1xf32> -> vector<24x1xf32>
    %c2_371 = arith.constant 2 : index
    %c0_372 = arith.constant 0 : index
    %c0_373 = arith.constant 0 : index
    %312 = vector.load %arg7[%c2_371, %c0_372, %c0_373] : memref<3x24x1xf32, #tpu.memory_space<vmem>>, vector<1x24x1xf32>
    %313 = vector.shape_cast %312 : vector<1x24x1xf32> to vector<24x1xf32>
    %314 = arith.addf %311, %313 : vector<24x1xf32>
    %315 = arith.negf %314 : vector<24x1xf32>
    %316 = math.exp %315 : vector<24x1xf32>
    %cst_374 = arith.constant 1.000000e+00 : f32
    %317 = vector.broadcast %cst_374 : f32 to vector<24x1xf32>
    %318 = arith.addf %317, %316 : vector<24x1xf32>
    %319 = arith.divf %317, %318 : vector<24x1xf32>
    %320 = arith.addf %296, %319 : vector<24x1xf32>
    %321 = arith.addf %248, %320 : vector<24x1xf32>
    %322 = vector.shape_cast %321 : vector<24x1xf32> to vector<24x1xf32>
    %323 = vector.broadcast %322 : vector<24x1xf32> to vector<24x5xf32>
    %c0_375 = arith.constant 0 : index
    %c2_376 = arith.constant 2 : index
    %324 = vector.load %arg14[%c0_375, %c2_376] : memref<40x29xf32, #tpu.memory_space<vmem>>, vector<24x5xf32>
    tpu.vector_store %arg14[%c0_375, %c2_376], %323 {strides = array<i32>} : memref<40x29xf32, #tpu.memory_space<vmem>>, vector<24x5xf32>,
    %c24_377 = arith.constant 24 : index
    %c2_378 = arith.constant 2 : index
    %325 = vector.load %arg14[%c24_377, %c2_378] : memref<40x29xf32, #tpu.memory_space<vmem>>, vector<16x5xf32>
    tpu.vector_store %arg14[%c24_377, %c2_378], %221 {strides = array<i32>} : memref<40x29xf32, #tpu.memory_space<vmem>>, vector<16x5xf32>,
    %cst_379 = arith.constant 0.000000e+00 : f32
    %326 = vector.broadcast %cst_379 : f32 to vector<40x2xf32>
    %c0_380 = arith.constant 0 : index
    %c0_381 = arith.constant 0 : index
    %327 = vector.load %arg14[%c0_380, %c0_381] : memref<40x29xf32, #tpu.memory_space<vmem>>, vector<40x2xf32>
    tpu.vector_store %arg14[%c0_380, %c0_381], %326 {strides = array<i32>} : memref<40x29xf32, #tpu.memory_space<vmem>>, vector<40x2xf32>,
    %c0_382 = arith.constant 0 : index
    %c7_383 = arith.constant 7 : index
    %328 = vector.load %arg14[%c0_382, %c7_383] : memref<40x29xf32, #tpu.memory_space<vmem>>, vector<40x2xf32>
    tpu.vector_store %arg14[%c0_382, %c7_383], %326 {strides = array<i32>} : memref<40x29xf32, #tpu.memory_space<vmem>>, vector<40x2xf32>,
    %c0_384 = arith.constant 0 : index
    %c0_385 = arith.constant 0 : index
    %329 = vector.load %arg14[%c0_384, %c0_385] : memref<40x29xf32, #tpu.memory_space<vmem>>, vector<40x5xf32>
    %c0_386 = arith.constant 0 : index
    %c0_387 = arith.constant 0 : index
    %330 = vector.load %arg15[%c0_386, %c0_387] : memref<200x25xf32, #tpu.memory_space<vmem>>, vector<40x5xf32>
    tpu.vector_store %arg15[%c0_386, %c0_387], %329 {strides = array<i32>} : memref<200x25xf32, #tpu.memory_space<vmem>>, vector<40x5xf32>,
    %c0_388 = arith.constant 0 : index
    %c1_389 = arith.constant 1 : index
    %331 = vector.load %arg14[%c0_388, %c1_389] : memref<40x29xf32, #tpu.memory_space<vmem>>, vector<40x5xf32>
    %c40_390 = arith.constant 40 : index
    %c0_391 = arith.constant 0 : index
    %332 = vector.load %arg15[%c40_390, %c0_391] : memref<200x25xf32, #tpu.memory_space<vmem>>, vector<40x5xf32>
    tpu.vector_store %arg15[%c40_390, %c0_391], %331 {strides = array<i32>} : memref<200x25xf32, #tpu.memory_space<vmem>>, vector<40x5xf32>,
    %c0_392 = arith.constant 0 : index
    %c2_393 = arith.constant 2 : index
    %333 = vector.load %arg14[%c0_392, %c2_393] : memref<40x29xf32, #tpu.memory_space<vmem>>, vector<40x5xf32>
    %c80 = arith.constant 80 : index
    %c0_394 = arith.constant 0 : index
    %334 = vector.load %arg15[%c80, %c0_394] : memref<200x25xf32, #tpu.memory_space<vmem>>, vector<40x5xf32>
    tpu.vector_store %arg15[%c80, %c0_394], %333 {strides = array<i32>} : memref<200x25xf32, #tpu.memory_space<vmem>>, vector<40x5xf32>,
    %c0_395 = arith.constant 0 : index
    %c3_396 = arith.constant 3 : index
    %335 = vector.load %arg14[%c0_395, %c3_396] : memref<40x29xf32, #tpu.memory_space<vmem>>, vector<40x5xf32>
    %c120 = arith.constant 120 : index
    %c0_397 = arith.constant 0 : index
    %336 = vector.load %arg15[%c120, %c0_397] : memref<200x25xf32, #tpu.memory_space<vmem>>, vector<40x5xf32>
    tpu.vector_store %arg15[%c120, %c0_397], %335 {strides = array<i32>} : memref<200x25xf32, #tpu.memory_space<vmem>>, vector<40x5xf32>,
    %c0_398 = arith.constant 0 : index
    %c4_399 = arith.constant 4 : index
    %337 = vector.load %arg14[%c0_398, %c4_399] : memref<40x29xf32, #tpu.memory_space<vmem>>, vector<40x5xf32>
    %c160 = arith.constant 160 : index
    %c0_400 = arith.constant 0 : index
    %338 = vector.load %arg15[%c160, %c0_400] : memref<200x25xf32, #tpu.memory_space<vmem>>, vector<40x5xf32>
    tpu.vector_store %arg15[%c160, %c0_400], %337 {strides = array<i32>} : memref<200x25xf32, #tpu.memory_space<vmem>>, vector<40x5xf32>,
    %c9 = arith.constant 9 : index
    %c0_401 = arith.constant 0 : index
    %c0_402 = arith.constant 0 : index
    %339 = vector.load %arg2[%c9, %c0_401, %c0_402] : memref<12x24x200xf32, #tpu.memory_space<vmem>>, vector<1x24x200xf32>
    %340 = vector.shape_cast %339 : vector<1x24x200xf32> to vector<24x200xf32>
    %341 = vector.extract_strided_slice %340 {offsets = [0, 0], sizes = [16, 200], strides = [1, 1]} : vector<24x200xf32> to vector<16x200xf32>
    %c0_403 = arith.constant 0 : index
    %c0_404 = arith.constant 0 : index
    %342 = vector.load %arg15[%c0_403, %c0_404] : memref<200x25xf32, #tpu.memory_space<vmem>>, vector<200x5xf32>
    %cst_405 = arith.constant dense<0.000000e+00> : vector<16x5xf32>
    %343 = tpu.matmul %341, %342, %cst_405 {dimension_numbers = #tpu.dot_dimension_numbers<[1], [0], [0], [1], [0, 0, 1, 1], [], []>} : vector<16x200xf32>, vector<200x5xf32>, vector<16x5xf32> -> vector<16x5xf32>
    %c9_406 = arith.constant 9 : index
    %c0_407 = arith.constant 0 : index
    %c0_408 = arith.constant 0 : index
    %344 = vector.load %arg3[%c9_406, %c0_407, %c0_408] : memref<12x24x1xf32, #tpu.memory_space<vmem>>, vector<1x24x1xf32>
    %345 = vector.shape_cast %344 : vector<1x24x1xf32> to vector<24x1xf32>
    %346 = vector.extract_strided_slice %345 {offsets = [0, 0], sizes = [16, 1], strides = [1, 1]} : vector<24x1xf32> to vector<16x1xf32>
    %347 = vector.broadcast %346 : vector<16x1xf32> to vector<16x5xf32>
    %348 = arith.addf %343, %347 : vector<16x5xf32>
    %cst_409 = arith.constant 0.000000e+00 : f32
    %349 = vector.broadcast %cst_409 : f32 to vector<16x5xf32>
    %350 = arith.maximumf %348, %349 : vector<16x5xf32>
    %c0_410 = arith.constant 0 : index
    %c0_411 = arith.constant 0 : index
    %351 = vector.load %arg12[%c0_410, %c0_411] : memref<5x25xf32, #tpu.memory_space<vmem>>, vector<5x25xf32>
    %cst_412 = arith.constant dense<0.000000e+00> : vector<16x25xf32>
    %352 = tpu.matmul %350, %351, %cst_412 {dimension_numbers = #tpu.dot_dimension_numbers<[1], [0], [0], [1], [0, 0, 1, 1], [], []>} : vector<16x5xf32>, vector<5x25xf32>, vector<16x25xf32> -> vector<16x25xf32>
    %c0_413 = arith.constant 0 : index
    %c2_414 = arith.constant 2 : index
    %353 = vector.load %arg14[%c0_413, %c2_414] : memref<40x29xf32, #tpu.memory_space<vmem>>, vector<16x25xf32>
    tpu.vector_store %arg14[%c0_413, %c2_414], %352 {strides = array<i32>} : memref<40x29xf32, #tpu.memory_space<vmem>>, vector<16x25xf32>,
    %c16_415 = arith.constant 16 : index
    %c2_416 = arith.constant 2 : index
    %354 = vector.load %arg14[%c16_415, %c2_416] : memref<40x29xf32, #tpu.memory_space<vmem>>, vector<8x25xf32>
    tpu.vector_store %arg14[%c16_415, %c2_416], %111 {strides = array<i32>} : memref<40x29xf32, #tpu.memory_space<vmem>>, vector<8x25xf32>,
    %cst_417 = arith.constant 0.000000e+00 : f32
    %355 = vector.broadcast %cst_417 : f32 to vector<24x2xf32>
    %c0_418 = arith.constant 0 : index
    %c0_419 = arith.constant 0 : index
    %356 = vector.load %arg14[%c0_418, %c0_419] : memref<40x29xf32, #tpu.memory_space<vmem>>, vector<24x2xf32>
    tpu.vector_store %arg14[%c0_418, %c0_419], %355 {strides = array<i32>} : memref<40x29xf32, #tpu.memory_space<vmem>>, vector<24x2xf32>,
    %c0_420 = arith.constant 0 : index
    %c27_421 = arith.constant 27 : index
    %357 = vector.load %arg14[%c0_420, %c27_421] : memref<40x29xf32, #tpu.memory_space<vmem>>, vector<24x2xf32>
    tpu.vector_store %arg14[%c0_420, %c27_421], %355 {strides = array<i32>} : memref<40x29xf32, #tpu.memory_space<vmem>>, vector<24x2xf32>,
    %c0_422 = arith.constant 0 : index
    %c0_423 = arith.constant 0 : index
    %358 = vector.load %arg14[%c0_422, %c0_423] : memref<40x29xf32, #tpu.memory_space<vmem>>, vector<24x25xf32>
    %c0_424 = arith.constant 0 : index
    %c0_425 = arith.constant 0 : index
    %359 = vector.load %arg15[%c0_424, %c0_425] : memref<200x25xf32, #tpu.memory_space<vmem>>, vector<24x25xf32>
    tpu.vector_store %arg15[%c0_424, %c0_425], %358 {strides = array<i32>} : memref<200x25xf32, #tpu.memory_space<vmem>>, vector<24x25xf32>,
    %c0_426 = arith.constant 0 : index
    %c1_427 = arith.constant 1 : index
    %360 = vector.load %arg14[%c0_426, %c1_427] : memref<40x29xf32, #tpu.memory_space<vmem>>, vector<24x25xf32>
    %c24_428 = arith.constant 24 : index
    %c0_429 = arith.constant 0 : index
    %361 = vector.load %arg15[%c24_428, %c0_429] : memref<200x25xf32, #tpu.memory_space<vmem>>, vector<24x25xf32>
    tpu.vector_store %arg15[%c24_428, %c0_429], %360 {strides = array<i32>} : memref<200x25xf32, #tpu.memory_space<vmem>>, vector<24x25xf32>,
    %c0_430 = arith.constant 0 : index
    %c2_431 = arith.constant 2 : index
    %362 = vector.load %arg14[%c0_430, %c2_431] : memref<40x29xf32, #tpu.memory_space<vmem>>, vector<24x25xf32>
    %c48_432 = arith.constant 48 : index
    %c0_433 = arith.constant 0 : index
    %363 = vector.load %arg15[%c48_432, %c0_433] : memref<200x25xf32, #tpu.memory_space<vmem>>, vector<24x25xf32>
    tpu.vector_store %arg15[%c48_432, %c0_433], %362 {strides = array<i32>} : memref<200x25xf32, #tpu.memory_space<vmem>>, vector<24x25xf32>,
    %c0_434 = arith.constant 0 : index
    %c3_435 = arith.constant 3 : index
    %364 = vector.load %arg14[%c0_434, %c3_435] : memref<40x29xf32, #tpu.memory_space<vmem>>, vector<24x25xf32>
    %c72_436 = arith.constant 72 : index
    %c0_437 = arith.constant 0 : index
    %365 = vector.load %arg15[%c72_436, %c0_437] : memref<200x25xf32, #tpu.memory_space<vmem>>, vector<24x25xf32>
    tpu.vector_store %arg15[%c72_436, %c0_437], %364 {strides = array<i32>} : memref<200x25xf32, #tpu.memory_space<vmem>>, vector<24x25xf32>,
    %c0_438 = arith.constant 0 : index
    %c4_439 = arith.constant 4 : index
    %366 = vector.load %arg14[%c0_438, %c4_439] : memref<40x29xf32, #tpu.memory_space<vmem>>, vector<24x25xf32>
    %c96_440 = arith.constant 96 : index
    %c0_441 = arith.constant 0 : index
    %367 = vector.load %arg15[%c96_440, %c0_441] : memref<200x25xf32, #tpu.memory_space<vmem>>, vector<24x25xf32>
    tpu.vector_store %arg15[%c96_440, %c0_441], %366 {strides = array<i32>} : memref<200x25xf32, #tpu.memory_space<vmem>>, vector<24x25xf32>,
    %c10_442 = arith.constant 10 : index
    %c0_443 = arith.constant 0 : index
    %c0_444 = arith.constant 0 : index
    %368 = vector.load %arg2[%c10_442, %c0_443, %c0_444] : memref<12x24x200xf32, #tpu.memory_space<vmem>>, vector<1x24x200xf32>
    %369 = vector.shape_cast %368 : vector<1x24x200xf32> to vector<24x200xf32>
    %370 = vector.extract_strided_slice %369 {offsets = [0, 0], sizes = [8, 120], strides = [1, 1]} : vector<24x200xf32> to vector<8x120xf32>
    %c0_445 = arith.constant 0 : index
    %c0_446 = arith.constant 0 : index
    %371 = vector.load %arg15[%c0_445, %c0_446] : memref<200x25xf32, #tpu.memory_space<vmem>>, vector<120x25xf32>
    %cst_447 = arith.constant dense<0.000000e+00> : vector<8x25xf32>
    %372 = tpu.matmul %370, %371, %cst_447 {dimension_numbers = #tpu.dot_dimension_numbers<[1], [0], [0], [1], [0, 0, 1, 1], [], []>} : vector<8x120xf32>, vector<120x25xf32>, vector<8x25xf32> -> vector<8x25xf32>
    %c10_448 = arith.constant 10 : index
    %c0_449 = arith.constant 0 : index
    %c0_450 = arith.constant 0 : index
    %373 = vector.load %arg3[%c10_448, %c0_449, %c0_450] : memref<12x24x1xf32, #tpu.memory_space<vmem>>, vector<1x24x1xf32>
    %374 = vector.shape_cast %373 : vector<1x24x1xf32> to vector<24x1xf32>
    %375 = vector.extract_strided_slice %374 {offsets = [0, 0], sizes = [8, 1], strides = [1, 1]} : vector<24x1xf32> to vector<8x1xf32>
    %376 = vector.broadcast %375 : vector<8x1xf32> to vector<8x25xf32>
    %377 = arith.addf %372, %376 : vector<8x25xf32>
    %cst_451 = arith.constant 0.000000e+00 : f32
    %378 = vector.broadcast %cst_451 : f32 to vector<8x25xf32>
    %379 = arith.maximumf %377, %378 : vector<8x25xf32>
    %c0_452 = arith.constant 0 : index
    %c2_453 = arith.constant 2 : index
    %380 = vector.load %arg14[%c0_452, %c2_453] : memref<40x29xf32, #tpu.memory_space<vmem>>, vector<8x25xf32>
    tpu.vector_store %arg14[%c0_452, %c2_453], %379 {strides = array<i32>} : memref<40x29xf32, #tpu.memory_space<vmem>>, vector<8x25xf32>,
    %cst_454 = arith.constant 0.000000e+00 : f32
    %381 = vector.broadcast %cst_454 : f32 to vector<8x2xf32>
    %c0_455 = arith.constant 0 : index
    %c0_456 = arith.constant 0 : index
    %382 = vector.load %arg14[%c0_455, %c0_456] : memref<40x29xf32, #tpu.memory_space<vmem>>, vector<8x2xf32>
    tpu.vector_store %arg14[%c0_455, %c0_456], %381 {strides = array<i32>} : memref<40x29xf32, #tpu.memory_space<vmem>>, vector<8x2xf32>,
    %c0_457 = arith.constant 0 : index
    %c27_458 = arith.constant 27 : index
    %383 = vector.load %arg14[%c0_457, %c27_458] : memref<40x29xf32, #tpu.memory_space<vmem>>, vector<8x2xf32>
    tpu.vector_store %arg14[%c0_457, %c27_458], %381 {strides = array<i32>} : memref<40x29xf32, #tpu.memory_space<vmem>>, vector<8x2xf32>,
    %c0_459 = arith.constant 0 : index
    %c0_460 = arith.constant 0 : index
    %384 = vector.load %arg14[%c0_459, %c0_460] : memref<40x29xf32, #tpu.memory_space<vmem>>, vector<8x25xf32>
    %c0_461 = arith.constant 0 : index
    %c0_462 = arith.constant 0 : index
    %385 = vector.load %arg15[%c0_461, %c0_462] : memref<200x25xf32, #tpu.memory_space<vmem>>, vector<8x25xf32>
    tpu.vector_store %arg15[%c0_461, %c0_462], %384 {strides = array<i32>} : memref<200x25xf32, #tpu.memory_space<vmem>>, vector<8x25xf32>,
    %c0_463 = arith.constant 0 : index
    %c1_464 = arith.constant 1 : index
    %386 = vector.load %arg14[%c0_463, %c1_464] : memref<40x29xf32, #tpu.memory_space<vmem>>, vector<8x25xf32>
    %c8_465 = arith.constant 8 : index
    %c0_466 = arith.constant 0 : index
    %387 = vector.load %arg15[%c8_465, %c0_466] : memref<200x25xf32, #tpu.memory_space<vmem>>, vector<8x25xf32>
    tpu.vector_store %arg15[%c8_465, %c0_466], %386 {strides = array<i32>} : memref<200x25xf32, #tpu.memory_space<vmem>>, vector<8x25xf32>,
    %c0_467 = arith.constant 0 : index
    %c2_468 = arith.constant 2 : index
    %388 = vector.load %arg14[%c0_467, %c2_468] : memref<40x29xf32, #tpu.memory_space<vmem>>, vector<8x25xf32>
    %c16_469 = arith.constant 16 : index
    %c0_470 = arith.constant 0 : index
    %389 = vector.load %arg15[%c16_469, %c0_470] : memref<200x25xf32, #tpu.memory_space<vmem>>, vector<8x25xf32>
    tpu.vector_store %arg15[%c16_469, %c0_470], %388 {strides = array<i32>} : memref<200x25xf32, #tpu.memory_space<vmem>>, vector<8x25xf32>,
    %c0_471 = arith.constant 0 : index
    %c3_472 = arith.constant 3 : index
    %390 = vector.load %arg14[%c0_471, %c3_472] : memref<40x29xf32, #tpu.memory_space<vmem>>, vector<8x25xf32>
    %c24_473 = arith.constant 24 : index
    %c0_474 = arith.constant 0 : index
    %391 = vector.load %arg15[%c24_473, %c0_474] : memref<200x25xf32, #tpu.memory_space<vmem>>, vector<8x25xf32>
    tpu.vector_store %arg15[%c24_473, %c0_474], %390 {strides = array<i32>} : memref<200x25xf32, #tpu.memory_space<vmem>>, vector<8x25xf32>,
    %c0_475 = arith.constant 0 : index
    %c4_476 = arith.constant 4 : index
    %392 = vector.load %arg14[%c0_475, %c4_476] : memref<40x29xf32, #tpu.memory_space<vmem>>, vector<8x25xf32>
    %c32_477 = arith.constant 32 : index
    %c0_478 = arith.constant 0 : index
    %393 = vector.load %arg15[%c32_477, %c0_478] : memref<200x25xf32, #tpu.memory_space<vmem>>, vector<8x25xf32>
    tpu.vector_store %arg15[%c32_477, %c0_478], %392 {strides = array<i32>} : memref<200x25xf32, #tpu.memory_space<vmem>>, vector<8x25xf32>,
    %c11 = arith.constant 11 : index
    %c0_479 = arith.constant 0 : index
    %c0_480 = arith.constant 0 : index
    %394 = vector.load %arg2[%c11, %c0_479, %c0_480] : memref<12x24x200xf32, #tpu.memory_space<vmem>>, vector<1x24x200xf32>
    %395 = vector.shape_cast %394 : vector<1x24x200xf32> to vector<24x200xf32>
    %396 = vector.extract_strided_slice %395 {offsets = [0, 0], sizes = [3, 40], strides = [1, 1]} : vector<24x200xf32> to vector<3x40xf32>
    %c0_481 = arith.constant 0 : index
    %c0_482 = arith.constant 0 : index
    %397 = vector.load %arg15[%c0_481, %c0_482] : memref<200x25xf32, #tpu.memory_space<vmem>>, vector<40x25xf32>
    %cst_483 = arith.constant dense<0.000000e+00> : vector<3x25xf32>
    %398 = tpu.matmul %396, %397, %cst_483 {dimension_numbers = #tpu.dot_dimension_numbers<[1], [0], [0], [1], [0, 0, 1, 1], [], []>} : vector<3x40xf32>, vector<40x25xf32>, vector<3x25xf32> -> vector<3x25xf32>
    %c11_484 = arith.constant 11 : index
    %c0_485 = arith.constant 0 : index
    %c0_486 = arith.constant 0 : index
    %399 = vector.load %arg3[%c11_484, %c0_485, %c0_486] : memref<12x24x1xf32, #tpu.memory_space<vmem>>, vector<1x24x1xf32>
    %400 = vector.shape_cast %399 : vector<1x24x1xf32> to vector<24x1xf32>
    %401 = vector.extract_strided_slice %400 {offsets = [0, 0], sizes = [3, 1], strides = [1, 1]} : vector<24x1xf32> to vector<3x1xf32>
    %402 = vector.broadcast %401 : vector<3x1xf32> to vector<3x25xf32>
    %403 = arith.addf %398, %402 : vector<3x25xf32>
    %cst_487 = arith.constant dense<0xFF800000> : vector<25xf32>
    %404 = vector.multi_reduction <maximumf>, %403, %cst_487 [0] : vector<3x25xf32> to vector<25xf32>
    %405 = vector.shape_cast %404 : vector<25xf32> to vector<1x25xf32>
    %406 = vector.broadcast %405 : vector<1x25xf32> to vector<3x25xf32>
    %407 = arith.subf %403, %406 : vector<3x25xf32>
    %408 = math.exp %407 : vector<3x25xf32>
    %cst_488 = arith.constant dense<0.000000e+00> : vector<25xf32>
    %409 = vector.multi_reduction <add>, %408, %cst_488 [0] : vector<3x25xf32> to vector<25xf32>
    %410 = vector.shape_cast %409 : vector<25xf32> to vector<1x25xf32>
    %411 = vector.broadcast %410 : vector<1x25xf32> to vector<3x25xf32>
    %412 = arith.divf %408, %411 : vector<3x25xf32>
    %c0_489 = arith.constant 0 : index
    %c0_490 = arith.constant 0 : index
    %c0_491 = arith.constant 0 : index
    %413 = vector.load %arg13[%c0_489, %c0_490, %c0_491] : memref<1x3x25xf32, #tpu.memory_space<vmem>>, vector<1x3x25xf32>
    %414 = vector.shape_cast %413 : vector<1x3x25xf32> to vector<3x25xf32>
    %415 = vector.shape_cast %412 : vector<3x25xf32> to vector<1x3x25xf32>
    tpu.vector_store %arg13[%c0_489, %c0_490, %c0_491], %415 {strides = array<i32>} : memref<1x3x25xf32, #tpu.memory_space<vmem>>, vector<1x3x25xf32>,
    return
  }
  func.func @transform_0(%arg0: i32) -> (i32, i32, i32) {
    %c0_i32 = arith.constant 0 : i32
    %c0_i32_0 = arith.constant 0 : i32
    %c0_i32_1 = arith.constant 0 : i32
    return %arg0, %c0_i32, %c0_i32_0 : i32, i32, i32
  }
  func.func @transform_1(%arg0: i32) -> (i32, i32, i32) {
    %c0_i32 = arith.constant 0 : i32
    %c0_i32_0 = arith.constant 0 : i32
    %c0_i32_1 = arith.constant 0 : i32
    %c0_i32_2 = arith.constant 0 : i32
    return %c0_i32, %c0_i32_0, %c0_i32_1 : i32, i32, i32
  }
  func.func @transform_2(%arg0: i32) -> (i32, i32, i32) {
    %c0_i32 = arith.constant 0 : i32
    %c0_i32_0 = arith.constant 0 : i32
    %c0_i32_1 = arith.constant 0 : i32
    %c0_i32_2 = arith.constant 0 : i32
    return %c0_i32, %c0_i32_0, %c0_i32_1 : i32, i32, i32
  }
  func.func @transform_3(%arg0: i32) -> (i32, i32, i32) {
    %c0_i32 = arith.constant 0 : i32
    %c0_i32_0 = arith.constant 0 : i32
    %c0_i32_1 = arith.constant 0 : i32
    %c0_i32_2 = arith.constant 0 : i32
    return %c0_i32, %c0_i32_0, %c0_i32_1 : i32, i32, i32
  }
  func.func @transform_4(%arg0: i32) -> (i32, i32, i32) {
    %c0_i32 = arith.constant 0 : i32
    %c0_i32_0 = arith.constant 0 : i32
    %c0_i32_1 = arith.constant 0 : i32
    %c0_i32_2 = arith.constant 0 : i32
    return %c0_i32, %c0_i32_0, %c0_i32_1 : i32, i32, i32
  }
  func.func @transform_5(%arg0: i32) -> (i32, i32, i32) {
    %c0_i32 = arith.constant 0 : i32
    %c0_i32_0 = arith.constant 0 : i32
    %c0_i32_1 = arith.constant 0 : i32
    %c0_i32_2 = arith.constant 0 : i32
    return %c0_i32, %c0_i32_0, %c0_i32_1 : i32, i32, i32
  }
  func.func @transform_6(%arg0: i32) -> (i32, i32, i32) {
    %c0_i32 = arith.constant 0 : i32
    %c0_i32_0 = arith.constant 0 : i32
    %c0_i32_1 = arith.constant 0 : i32
    %c0_i32_2 = arith.constant 0 : i32
    return %c0_i32, %c0_i32_0, %c0_i32_1 : i32, i32, i32
  }
  func.func @transform_7(%arg0: i32) -> (i32, i32) {
    %c0_i32 = arith.constant 0 : i32
    %c0_i32_0 = arith.constant 0 : i32
    %c0_i32_1 = arith.constant 0 : i32
    return %c0_i32, %c0_i32_0 : i32, i32
  }
  func.func @transform_8(%arg0: i32) -> (i32, i32) {
    %c0_i32 = arith.constant 0 : i32
    %c0_i32_0 = arith.constant 0 : i32
    %c0_i32_1 = arith.constant 0 : i32
    return %c0_i32, %c0_i32_0 : i32, i32
  }
  func.func @transform_9(%arg0: i32) -> (i32, i32) {
    %c0_i32 = arith.constant 0 : i32
    %c0_i32_0 = arith.constant 0 : i32
    %c0_i32_1 = arith.constant 0 : i32
    return %c0_i32, %c0_i32_0 : i32, i32
  }
  func.func @transform_10(%arg0: i32) -> (i32, i32) {
    %c0_i32 = arith.constant 0 : i32
    %c0_i32_0 = arith.constant 0 : i32
    %c0_i32_1 = arith.constant 0 : i32
    return %c0_i32, %c0_i32_0 : i32, i32
  }
  func.func @transform_11(%arg0: i32) -> (i32, i32) {
    %c0_i32 = arith.constant 0 : i32
    %c0_i32_0 = arith.constant 0 : i32
    %c0_i32_1 = arith.constant 0 : i32
    return %c0_i32, %c0_i32_0 : i32, i32
  }
  func.func @transform_12(%arg0: i32) -> (i32, i32, i32) {
    %c0_i32 = arith.constant 0 : i32
    %c0_i32_0 = arith.constant 0 : i32
    %c0_i32_1 = arith.constant 0 : i32
    return %arg0, %c0_i32, %c0_i32_0 : i32, i32, i32
  }
}

</mosaic_0001>

<llo_original>
// kernel: forward.1
$region0: #{forward.1}
  #allocation0 [shape = 'u32[]', space=smem, size = 0x4, offset = 0x4, fixed_abs, tag = 'smem constant byte address 0x4 - core index']
  #allocation1 [shape = 'u32[144,128]{1,0:T(1,128)}', space=vmem, size = 0x12000, scoped, tag = 'internal scratch']
  #allocation2 [shape = 'f32[40,29]{1,0:T(8,128)}', space=vmem, size = 0x5000, scoped, tag = 'scratch operand']
  #allocation3 [shape = 'f32[200,25]{1,0:T(8,128)}', space=vmem, size = 0x19000, scoped, tag = 'scratch operand']
  %s0 = inlined_call_operand.vmem [shape: f32[2,10,25], index: 0, kind: input, shape index: {}]
  %s1 = inlined_call_operand.vmem [shape: f32[12,24,200], index: 1, kind: input, shape index: {}]
  %s2 = inlined_call_operand.vmem [shape: f32[12,24,1], index: 2, kind: input, shape index: {}]
  %s3 = inlined_call_operand.vmem [shape: f32[3,3,24], index: 3, kind: input, shape index: {}]
  %s4 = inlined_call_operand.vmem [shape: f32[3,3,1], index: 4, kind: input, shape index: {}]
  %s5 = inlined_call_operand.vmem [shape: f32[3,24,3], index: 5, kind: input, shape index: {}]
  %s6 = inlined_call_operand.vmem [shape: f32[3,24,1], index: 6, kind: input, shape index: {}]
  %s7 = inlined_call_operand.vmem [shape: f32[25,5], index: 7, kind: input, shape index: {}]
  %s8 = inlined_call_operand.vmem [shape: f32[25,5], index: 8, kind: input, shape index: {}]
  %s9 = inlined_call_operand.vmem [shape: f32[5,1], index: 9, kind: input, shape index: {}]
  %s10 = inlined_call_operand.vmem [shape: f32[1,5], index: 10, kind: input, shape index: {}]
  %s11 = inlined_call_operand.vmem [shape: f32[5,25], index: 11, kind: input, shape index: {}]
  %s12 = inlined_call_operand.vmem [shape: f32[2,3,25], index: 12, kind: output, shape index: {}]
  %s13 = sld [smem:[#allocation0]]
  $region81: #{forward.1} parent=0
    _
  %s15 = ssub.s32 1, %s13
  %s16 = scalar_select 0, %s15, %s13
  loop: start=0, step=1, limit=4
  $region2: #{forward.1} parent=0 // loop_pre_header
    _
  $region3: #{forward.1} parent=0 // loop_header
    %s18 = sphi 0, %s22
    %p19 = scmp.ge.s32.totalorder %s18, 4
    %s28 = sphi 0, %s30
    %s31 = sphi 0, %s28
    %s32 = sphi 0, %s31
    %s48 = sphi 0, %s32
    %s52 = sphi 0, %s52
    %s54 = sphi 0, %s52
    %s55 = sphi 0, %s54
    %s69 = sphi 0, %s55
    %s73 = sphi 0, %s73
    %s75 = sphi 0, %s73
    %s76 = sphi 0, %s75
    %s90 = sphi 0, %s76
    %s94 = sphi 0, %s94
    %s96 = sphi 0, %s94
    %s97 = sphi 0, %s96
    %s111 = sphi 0, %s97
    %s115 = sphi 0, %s115
    %s117 = sphi 0, %s115
    %s118 = sphi 0, %s117
    %s132 = sphi 0, %s118
    %s136 = sphi 0, %s136
    %s138 = sphi 0, %s136
    %s139 = sphi 0, %s138
    %s153 = sphi 0, %s139
    %s157 = sphi 0, %s157
    %s159 = sphi 0, %s157
    %s160 = sphi 0, %s159
    %s174 = sphi 0, %s160
    %s178 = sphi 0, %s178
    %s180 = sphi 0, %s178
    %s181 = sphi 0, %s180
    %s195 = sphi 0, %s181
    %s199 = sphi 0, %s199
    %s201 = sphi 0, %s199
    %s202 = sphi 0, %s201
    %s216 = sphi 0, %s202
    %s220 = sphi 0, %s220
    %s222 = sphi 0, %s220
    %s223 = sphi 0, %s222
    %s237 = sphi 0, %s223
    %s241 = sphi 0, %s241
    %s243 = sphi 0, %s241
    %s244 = sphi 0, %s243
    %s258 = sphi 0, %s244
    %s262 = sphi 0, %s262
    %s264 = sphi 0, %s262
    %s265 = sphi 0, %s264
    %s279 = sphi 0, %s265
    %s285 = sphi 0, %s287
    %s288 = sphi 0, %s285
    %s289 = sphi 0, %s288
    %s305 = sphi 0, %s289
  $region4: #{forward.1} parent=0 // loop_header_branch
    %21 = sbr.rel (%p19) target = $region8
  $region5: #{forward.1} parent=0 // loop_body
    %s23 = ssub.s32 %s18, 1
    %s24 = ssub.s32 %s18, 2
    %s25 = sadd.s32 %s18, 1
    %s26 = ssub.s32 %s18, %s25
    %p27 = scmp.eq.s32.totalorder %s26, 0
    %s29 = sadd.s32 %s28, 1
    %s30 = scalar_select %p27, %s28, %s29
    %p33 = pneg %p27
    %p34 = scmp.eq.s32.totalorder %s18, 1
    %p35 = por %p33, %p34
    %p36 = scmp.ne.s32.totalorder %s28, %s31
    %p37 = scmp.eq.s32.totalorder %s18, 0
    %p38 = por %p36, %p37
    %p39 = scmp.ne.s32.totalorder %s28, %s31
    %p40 = scmp.eq.s32.totalorder %s23, 1
    %p41 = por %p39, %p40
    %p42 = scmp.ne.s32.totalorder %s31, %s32
    %p43 = scmp.eq.s32.totalorder %s23, 0
    %p44 = por %p42, %p43
    %p45 = scmp.ne.s32.totalorder %s31, %s32
    %p46 = scmp.eq.s32.totalorder %s24, 1
    %p47 = por %p45, %p46
    %p49 = scmp.ne.s32.totalorder %s32, %s48
    %p50 = scmp.eq.s32.totalorder %s24, 0
    %p51 = por %p49, %p50
    %s53 = sadd.s32 %s52, 1
    %p56 = scmp.eq.s32.totalorder %s18, 1
    %p57 = scmp.ne.s32.totalorder %s52, %s54
    %p58 = scmp.eq.s32.totalorder %s18, 0
    %p59 = por %p57, %p58
    %p60 = scmp.ne.s32.totalorder %s52, %s54
    %p61 = scmp.eq.s32.totalorder %s23, 1
    %p62 = por %p60, %p61
    %p63 = scmp.ne.s32.totalorder %s54, %s55
    %p64 = scmp.eq.s32.totalorder %s23, 0
    %p65 = por %p63, %p64
    %p66 = scmp.ne.s32.totalorder %s54, %s55
    %p67 = scmp.eq.s32.totalorder %s24, 1
    %p68 = por %p66, %p67
    %p70 = scmp.ne.s32.totalorder %s55, %s69
    %p71 = scmp.eq.s32.totalorder %s24, 0
    %p72 = por %p70, %p71
    %s74 = sadd.s32 %s73, 1
    %p77 = scmp.eq.s32.totalorder %s18, 1
    %p78 = scmp.ne.s32.totalorder %s73, %s75
    %p79 = scmp.eq.s32.totalorder %s18, 0
    %p80 = por %p78, %p79
    %p81 = scmp.ne.s32.totalorder %s73, %s75
    %p82 = scmp.eq.s32.totalorder %s23, 1
    %p83 = por %p81, %p82
    %p84 = scmp.ne.s32.totalorder %s75, %s76
    %p85 = scmp.eq.s32.totalorder %s23, 0
    %p86 = por %p84, %p85
    %p87 = scmp.ne.s32.totalorder %s75, %s76
    %p88 = scmp.eq.s32.totalorder %s24, 1
    %p89 = por %p87, %p88
    %p91 = scmp.ne.s32.totalorder %s76, %s90
    %p92 = scmp.eq.s32.totalorder %s24, 0
    %p93 = por %p91, %p92
    %s95 = sadd.s32 %s94, 1
    %p98 = scmp.eq.s32.totalorder %s18, 1
    %p99 = scmp.ne.s32.totalorder %s94, %s96
    %p100 = scmp.eq.s32.totalorder %s18, 0
    %p101 = por %p99, %p100
    %p102 = scmp.ne.s32.totalorder %s94, %s96
    %p103 = scmp.eq.s32.totalorder %s23, 1
    %p104 = por %p102, %p103
    %p105 = scmp.ne.s32.totalorder %s96, %s97
    %p106 = scmp.eq.s32.totalorder %s23, 0
    %p107 = por %p105, %p106
    %p108 = scmp.ne.s32.totalorder %s96, %s97
    %p109 = scmp.eq.s32.totalorder %s24, 1
    %p110 = por %p108, %p109
    %p112 = scmp.ne.s32.totalorder %s97, %s111
    %p113 = scmp.eq.s32.totalorder %s24, 0
    %p114 = por %p112, %p113
    %s116 = sadd.s32 %s115, 1
    %p119 = scmp.eq.s32.totalorder %s18, 1
    %p120 = scmp.ne.s32.totalorder %s115, %s117
    %p121 = scmp.eq.s32.totalorder %s18, 0
    %p122 = por %p120, %p121
    %p123 = scmp.ne.s32.totalorder %s115, %s117
    %p124 = scmp.eq.s32.totalorder %s23, 1
    %p125 = por %p123, %p124
    %p126 = scmp.ne.s32.totalorder %s117, %s118
    %p127 = scmp.eq.s32.totalorder %s23, 0
    %p128 = por %p126, %p127
    %p129 = scmp.ne.s32.totalorder %s117, %s118
    %p130 = scmp.eq.s32.totalorder %s24, 1
    %p131 = por %p129, %p130
    %p133 = scmp.ne.s32.totalorder %s118, %s132
    %p134 = scmp.eq.s32.totalorder %s24, 0
    %p135 = por %p133, %p134
    %s137 = sadd.s32 %s136, 1
    %p140 = scmp.eq.s32.totalorder %s18, 1
    %p141 = scmp.ne.s32.totalorder %s136, %s138
    %p142 = scmp.eq.s32.totalorder %s18, 0
    %p143 = por %p141, %p142
    %p144 = scmp.ne.s32.totalorder %s136, %s138
    %p145 = scmp.eq.s32.totalorder %s23, 1
    %p146 = por %p144, %p145
    %p147 = scmp.ne.s32.totalorder %s138, %s139
    %p148 = scmp.eq.s32.totalorder %s23, 0
    %p149 = por %p147, %p148
    %p150 = scmp.ne.s32.totalorder %s138, %s139
    %p151 = scmp.eq.s32.totalorder %s24, 1
    %p152 = por %p150, %p151
    %p154 = scmp.ne.s32.totalorder %s139, %s153
    %p155 = scmp.eq.s32.totalorder %s24, 0
    %p156 = por %p154, %p155
    %s158 = sadd.s32 %s157, 1
    %p161 = scmp.eq.s32.totalorder %s18, 1
    %p162 = scmp.ne.s32.totalorder %s157, %s159
    %p163 = scmp.eq.s32.totalorder %s18, 0
    %p164 = por %p162, %p163
    %p165 = scmp.ne.s32.totalorder %s157, %s159
    %p166 = scmp.eq.s32.totalorder %s23, 1
    %p167 = por %p165, %p166
    %p168 = scmp.ne.s32.totalorder %s159, %s160
    %p169 = scmp.eq.s32.totalorder %s23, 0
    %p170 = por %p168, %p169
    %p171 = scmp.ne.s32.totalorder %s159, %s160
    %p172 = scmp.eq.s32.totalorder %s24, 1
    %p173 = por %p171, %p172
    %p175 = scmp.ne.s32.totalorder %s160, %s174
    %p176 = scmp.eq.s32.totalorder %s24, 0
    %p177 = por %p175, %p176
    %s179 = sadd.s32 %s178, 1
    %p182 = scmp.eq.s32.totalorder %s18, 1
    %p183 = scmp.ne.s32.totalorder %s178, %s180
    %p184 = scmp.eq.s32.totalorder %s18, 0
    %p185 = por %p183, %p184
    %p186 = scmp.ne.s32.totalorder %s178, %s180
    %p187 = scmp.eq.s32.totalorder %s23, 1
    %p188 = por %p186, %p187
    %p189 = scmp.ne.s32.totalorder %s180, %s181
    %p190 = scmp.eq.s32.totalorder %s23, 0
    %p191 = por %p189, %p190
    %p192 = scmp.ne.s32.totalorder %s180, %s181
    %p193 = scmp.eq.s32.totalorder %s24, 1
    %p194 = por %p192, %p193
    %p196 = scmp.ne.s32.totalorder %s181, %s195
    %p197 = scmp.eq.s32.totalorder %s24, 0
    %p198 = por %p196, %p197
    %s200 = sadd.s32 %s199, 1
    %p203 = scmp.eq.s32.totalorder %s18, 1
    %p204 = scmp.ne.s32.totalorder %s199, %s201
    %p205 = scmp.eq.s32.totalorder %s18, 0
    %p206 = por %p204, %p205
    %p207 = scmp.ne.s32.totalorder %s199, %s201
    %p208 = scmp.eq.s32.totalorder %s23, 1
    %p209 = por %p207, %p208
    %p210 = scmp.ne.s32.totalorder %s201, %s202
    %p211 = scmp.eq.s32.totalorder %s23, 0
    %p212 = por %p210, %p211
    %p213 = scmp.ne.s32.totalorder %s201, %s202
    %p214 = scmp.eq.s32.totalorder %s24, 1
    %p215 = por %p213, %p214
    %p217 = scmp.ne.s32.totalorder %s202, %s216
    %p218 = scmp.eq.s32.totalorder %s24, 0
    %p219 = por %p217, %p218
    %s221 = sadd.s32 %s220, 1
    %p224 = scmp.eq.s32.totalorder %s18, 1
    %p225 = scmp.ne.s32.totalorder %s220, %s222
    %p226 = scmp.eq.s32.totalorder %s18, 0
    %p227 = por %p225, %p226
    %p228 = scmp.ne.s32.totalorder %s220, %s222
    %p229 = scmp.eq.s32.totalorder %s23, 1
    %p230 = por %p228, %p229
    %p231 = scmp.ne.s32.totalorder %s222, %s223
    %p232 = scmp.eq.s32.totalorder %s23, 0
    %p233 = por %p231, %p232
    %p234 = scmp.ne.s32.totalorder %s222, %s223
    %p235 = scmp.eq.s32.totalorder %s24, 1
    %p236 = por %p234, %p235
    %p238 = scmp.ne.s32.totalorder %s223, %s237
    %p239 = scmp.eq.s32.totalorder %s24, 0
    %p240 = por %p238, %p239
    %s242 = sadd.s32 %s241, 1
    %p245 = scmp.eq.s32.totalorder %s18, 1
    %p246 = scmp.ne.s32.totalorder %s241, %s243
    %p247 = scmp.eq.s32.totalorder %s18, 0
    %p248 = por %p246, %p247
    %p249 = scmp.ne.s32.totalorder %s241, %s243
    %p250 = scmp.eq.s32.totalorder %s23, 1
    %p251 = por %p249, %p250
    %p252 = scmp.ne.s32.totalorder %s243, %s244
    %p253 = scmp.eq.s32.totalorder %s23, 0
    %p254 = por %p252, %p253
    %p255 = scmp.ne.s32.totalorder %s243, %s244
    %p256 = scmp.eq.s32.totalorder %s24, 1
    %p257 = por %p255, %p256
    %p259 = scmp.ne.s32.totalorder %s244, %s258
    %p260 = scmp.eq.s32.totalorder %s24, 0
    %p261 = por %p259, %p260
    %s263 = sadd.s32 %s262, 1
    %p266 = scmp.eq.s32.totalorder %s18, 1
    %p267 = scmp.ne.s32.totalorder %s262, %s264
    %p268 = scmp.eq.s32.totalorder %s18, 0
    %p269 = por %p267, %p268
    %p270 = scmp.ne.s32.totalorder %s262, %s264
    %p271 = scmp.eq.s32.totalorder %s23, 1
    %p272 = por %p270, %p271
    %p273 = scmp.ne.s32.totalorder %s264, %s265
    %p274 = scmp.eq.s32.totalorder %s23, 0
    %p275 = por %p273, %p274
    %p276 = scmp.ne.s32.totalorder %s264, %s265
    %p277 = scmp.eq.s32.totalorder %s24, 1
    %p278 = por %p276, %p277
    %p280 = scmp.ne.s32.totalorder %s265, %s279
    %p281 = scmp.eq.s32.totalorder %s24, 0
    %p282 = por %p280, %p281
    %s283 = ssub.s32 %s18, %s25
    %p284 = scmp.eq.s32.totalorder %s283, 0
    %s286 = sadd.s32 %s285, 1
    %s287 = scalar_select %p284, %s285, %s286
    %p290 = pneg %p284
    %p291 = scmp.eq.s32.totalorder %s18, 1
    %p292 = por %p290, %p291
    %p293 = scmp.ne.s32.totalorder %s285, %s288
    %p294 = scmp.eq.s32.totalorder %s18, 0
    %p295 = por %p293, %p294
    %p296 = scmp.ne.s32.totalorder %s285, %s288
    %p297 = scmp.eq.s32.totalorder %s23, 1
    %p298 = por %p296, %p297
    %p299 = scmp.ne.s32.totalorder %s288, %s289
    %p300 = scmp.eq.s32.totalorder %s23, 0
    %p301 = por %p299, %p300
    %p302 = scmp.ne.s32.totalorder %s288, %s289
    %p303 = scmp.eq.s32.totalorder %s24, 1
    %p304 = por %p302, %p303
    %p306 = scmp.ne.s32.totalorder %s289, %s305
    %p307 = scmp.eq.s32.totalorder %s24, 0
    %p308 = por %p306, %p307
    %p309 = scmp.le.s32.totalorder 1, %s18
    %p310 = scmp.lt.s32.totalorder %s18, 3
    %p311 = pnand %p309, %p310
    %p312 = pneg %p311
    // Predicated region
    $region9: #{forward.1} parent=5 // pred_check
      _
    $region10: #{forward.1} parent=5 // pred_check_branch
      %314 = sbr.rel (%p311) target = $region12
    $region11: #{forward.1} parent=5 // pred_region
      %s315 = ssub.s32 %s18, 1
      // Predicated region
      $region13: #{forward.1} parent=11 // pred_check
        %p316 = pneg %p65
      $region14: #{forward.1} parent=11 // pred_check_branch
        %318 = sbr.rel (%p316) target = $region16
      $region15: #{forward.1} parent=11 // pred_region
        _
      $region16: #{forward.1} parent=11 // pred_fallthru
        _
      // Predicated region
      $region17: #{forward.1} parent=11 // pred_check
        %p319 = pneg %p86
      $region18: #{forward.1} parent=11 // pred_check_branch
        %321 = sbr.rel (%p319) target = $region20
      $region19: #{forward.1} parent=11 // pred_region
        _
      $region20: #{forward.1} parent=11 // pred_fallthru
        _
      // Predicated region
      $region21: #{forward.1} parent=11 // pred_check
        %p322 = pneg %p107
      $region22: #{forward.1} parent=11 // pred_check_branch
        %324 = sbr.rel (%p322) target = $region24
      $region23: #{forward.1} parent=11 // pred_region
        _
      $region24: #{forward.1} parent=11 // pred_fallthru
        _
      // Predicated region
      $region25: #{forward.1} parent=11 // pred_check
        %p325 = pneg %p128
      $region26: #{forward.1} parent=11 // pred_check_branch
        %327 = sbr.rel (%p325) target = $region28
      $region27: #{forward.1} parent=11 // pred_region
        _
      $region28: #{forward.1} parent=11 // pred_fallthru
        _
      // Predicated region
      $region29: #{forward.1} parent=11 // pred_check
        %p328 = pneg %p149
      $region30: #{forward.1} parent=11 // pred_check_branch
        %330 = sbr.rel (%p328) target = $region32
      $region31: #{forward.1} parent=11 // pred_region
        _
      $region32: #{forward.1} parent=11 // pred_fallthru
        _
      // Predicated region
      $region33: #{forward.1} parent=11 // pred_check
        %p331 = pneg %p170
      $region34: #{forward.1} parent=11 // pred_check_branch
        %333 = sbr.rel (%p331) target = $region36
      $region35: #{forward.1} parent=11 // pred_region
        _
      $region36: #{forward.1} parent=11 // pred_fallthru
        _
      // Predicated region
      $region37: #{forward.1} parent=11 // pred_check
        %p334 = pneg %p191
      $region38: #{forward.1} parent=11 // pred_check_branch
        %336 = sbr.rel (%p334) target = $region40
      $region39: #{forward.1} parent=11 // pred_region
        _
      $region40: #{forward.1} parent=11 // pred_fallthru
        _
      // Predicated region
      $region41: #{forward.1} parent=11 // pred_check
        %p337 = pneg %p212
      $region42: #{forward.1} parent=11 // pred_check_branch
        %339 = sbr.rel (%p337) target = $region44
      $region43: #{forward.1} parent=11 // pred_region
        _
      $region44: #{forward.1} parent=11 // pred_fallthru
        _
      // Predicated region
      $region45: #{forward.1} parent=11 // pred_check
        %p340 = pneg %p233
      $region46: #{forward.1} parent=11 // pred_check_branch
        %342 = sbr.rel (%p340) target = $region48
      $region47: #{forward.1} parent=11 // pred_region
        _
      $region48: #{forward.1} parent=11 // pred_fallthru
        _
      // Predicated region
      $region49: #{forward.1} parent=11 // pred_check
        %p343 = pneg %p254
      $region50: #{forward.1} parent=11 // pred_check_branch
        %345 = sbr.rel (%p343) target = $region52
      $region51: #{forward.1} parent=11 // pred_region
        _
      $region52: #{forward.1} parent=11 // pred_fallthru
        _
      // Predicated region
      $region53: #{forward.1} parent=11 // pred_check
        %p346 = pneg %p275
      $region54: #{forward.1} parent=11 // pred_check_branch
        %348 = sbr.rel (%p346) target = $region56
      $region55: #{forward.1} parent=11 // pred_region
        _
      $region56: #{forward.1} parent=11 // pred_fallthru
        _
    $region12: #{forward.1} parent=5 // pred_fallthru
      _
    %p349 = scmp.lt.s32.totalorder %s18, 2
    // Predicated region
    $region57: #{forward.1} parent=5 // pred_check
      %p350 = pneg %p349
    $region58: #{forward.1} parent=5 // pred_check_branch
      %352 = sbr.rel (%p350) target = $region60
    $region59: #{forward.1} parent=5 // pred_region
      // Predicated region
      $region61: #{forward.1} parent=59 // pred_check
        %p353 = pneg %p38
      $region62: #{forward.1} parent=59 // pred_check_branch
        %355 = sbr.rel (%p353) target = $region64
      $region63: #{forward.1} parent=59 // pred_region
        %p356 = scmp.lt.s32.totalorder %s18, 1
        %s357 = scalar_select %p356, %s18, 1
        %s358 = smul.addr %s357, 2
        %s359 = smul.addr %s358, 8
        %s360 = scalar_lea.vmem %s0, %s359
      $region64: #{forward.1} parent=59 // pred_fallthru
        _
    $region60: #{forward.1} parent=5 // pred_fallthru
      _
    %p361 = scmp.le.s32.totalorder 1, %s18
    %p362 = scmp.lt.s32.totalorder %s18, 3
    %p363 = pnand %p361, %p362
    %p364 = pneg %p363
    // Predicated region
    $region65: #{forward.1} parent=5 // pred_check
      _
    $region66: #{forward.1} parent=5 // pred_check_branch
      %366 = sbr.rel (%p363) target = $region68
    $region67: #{forward.1} parent=5 // pred_region
      %s367 = ssub.s32 %s18, 1
      %p368 = scmp.lt.s32.totalorder %s23, 1
      %s369 = scalar_select %p368, %s23, 1
      %s370 = smul.addr %s369, 2
      %s371 = smul.addr %s370, 8
      %s372 = scalar_lea.vmem %s0, %s371
      %p373 = pneg %p44
      %p374 = pneg %p41
      %p375 = pneg %p65
      %p376 = pneg %p62
      %p377 = pneg %p86
      %p378 = pneg %p83
      %p379 = pneg %p107
      %p380 = pneg %p104
      %p381 = pneg %p128
      %p382 = pneg %p125
      %p383 = pneg %p149
      %p384 = pneg %p146
      %p385 = pneg %p170
      %p386 = pneg %p167
      %p387 = pneg %p191
      %p388 = pneg %p188
      %p389 = pneg %p212
      %p390 = pneg %p209
      %p391 = pneg %p233
      %p392 = pneg %p230
      %p393 = pneg %p254
      %p394 = pneg %p251
      %p395 = pneg %p275
      %p396 = pneg %p272
      %p397 = pneg %p301
      %p398 = pneg %p298
      %p399 = scmp.lt.s32.totalorder %s23, 1
      %s400 = scalar_select %p399, %s23, 1
      %s401 = smul.addr %s400, 4
      %s402 = scalar_lea.vmem %s12, %s401
      %p403 = scmp.lt.s32.totalorder %s23, 1
      %s404 = scalar_select %p403, %s23, 1
      %s405 = smul.addr %s404, 2
      %s406 = smul.addr %s405, 8
      %s407 = scalar_lea.vmem %s0, %s406
      %p408 = scmp.lt.s32.totalorder %s23, 1
      %s409 = scalar_select %p408, %s23, 1
      %s410 = smul.addr %s409, 4
      %s411 = scalar_lea.vmem %s12, %s410
      %v412 = vld [vmem:[%s407] sm:$0xff]
      %v413 = vld [vmem:[%s407 + $0x8] sm:$0x3]
      %v414 = vld [vmem:[%s7] sm:$0xff]
      %v415 = vld [vmem:[%s7 + $0x8] sm:$0xff]
      %v416 = vld [vmem:[%s7 + $0x10] sm:$0xff]
      %v417 = vld [vmem:[%s7 + $0x18] sm:$0x1]
      %vm418 = vcmask 203776
      %v420 = vsel %vm418, %v412, 0
      %v423 = vsel %vm418, %v413, 0
      %vm425 = vcmask 1040384
      %v427 = vsel %vm425, %v417, 0
      %429 = vmatprep.subr.mxu0 0.0
      %430 = vmatpush1.msra.mxu0 0.0
      %431 = vmatprep.subr.mxu0 0.0
      %432 = vmatpush1.msra.mxu0 0.0
      %433 = vmatprep.subr.mxu0 0.0
      %434 = vmatpush1.msra.mxu0 0.0
      %435 = vmatprep.subr.mxu0 0.0
      %436 = vmatpush1.msra.mxu0 0.0
      %437 = vmatprep.subr.mxu0 0.0
      %438 = vmatpush1.msra.mxu0 0.0
      %439 = vmatprep.subr.mxu0 0.0
      %440 = vmatpush1.msra.mxu0 0.0
      %441 = vmatprep.subr.mxu0 0.0
      %442 = vmatpush1.msra.mxu0 0.0
      %443 = vmatprep.subr.mxu0 0.0
      %444 = vmatpush1.msra.mxu0 0.0
      %445 = vmatprep.subr.mxu0 0.0
      %446 = vmatpush1.msra.mxu0 0.0
      %447 = vmatprep.subr.mxu0 0.0
      %448 = vmatpush1.msra.mxu0 0.0
      %449 = vmatprep.subr.mxu0 0.0
      %450 = vmatpush1.msra.mxu0 0.0
      %451 = vmatprep.subr.mxu0 0.0
      %452 = vmatpush1.msra.mxu0 0.0
      %453 = vmatprep.subr.mxu0 0.0
      %454 = vmatpush1.msra.mxu0 %v427
      %455 = vmatprep.subr.mxu0 0.0
      %456 = vmatpush1.msra.mxu0 %v416
      %457 = vmatprep.subr.mxu0 0.0
      %458 = vmatpush1.msra.mxu0 %v415
      %459 = vmatprep.subr.mxu0 0.0
      %460 = vmatpush1.msra.mxu0 %v414
      %461 = vmatprep.subr.mxu0 0.0
      %462 = vmatpush2.msra.mxu0 0.0
      %463 = vmatprep.subr.mxu0 0.0
      %464 = vmatpush2.msra.mxu0 0.0
      %465 = vmatprep.subr.mxu0 0.0
      %466 = vmatpush2.msra.mxu0 0.0
      %467 = vmatprep.subr.mxu0 0.0
      %468 = vmatpush2.msra.mxu0 0.0
      %469 = vmatprep.subr.mxu0 0.0
      %470 = vmatpush2.msra.mxu0 0.0
      %471 = vmatprep.subr.mxu0 0.0
      %472 = vmatpush2.msra.mxu0 0.0
      %473 = vmatprep.subr.mxu0 0.0
      %474 = vmatpush2.msra.mxu0 0.0
      %475 = vmatprep.subr.mxu0 0.0
      %476 = vmatpush2.msra.mxu0 0.0
      %477 = vmatprep.subr.mxu0 0.0
      %478 = vmatpush2.msra.mxu0 0.0
      %479 = vmatprep.subr.mxu0 0.0
      %480 = vmatpush2.msra.mxu0 0.0
      %481 = vmatprep.subr.mxu0 0.0
      %482 = vmatpush2.msra.mxu0 0.0
      %483 = vmatprep.subr.mxu0 0.0
      %484 = vmatpush2.msra.mxu0 0.0
      %485 = vmatprep.subr.mxu0 0.0
      %486 = vmatpush2.msra.mxu0 0.0
      %487 = vmatprep.subr.mxu0 0.0
      %488 = vmatpush2.msra.mxu0 0.0
      %489 = vmatprep.subr.mxu0 0.0
      %490 = vmatpush2.msra.mxu0 0.0
      %491 = vmatprep.subr.mxu0 0.0
      %492 = vmatpush2.msra.mxu0 0.0
      %493 = vmatprep.mubr.f32.mxu0 0.0
      %494 = vmatmul.mubr.f32.gmra.mxu0 %v420
      %v495 = vpop.f32.mrf.mxu0
      %v496 = vadd.f32 0.0, %v495
      %v497 = vpop.f32.mrf.mxu0
      %498 = vmatprep.mubr.f32.mxu0 0.0
      %499 = vmatmul.mubr.f32.gmra.mxu0 %v423
      %v500 = vpop.f32.mrf.mxu0
      %v501 = vadd.f32 0.0, %v500
      %v502 = vpop.f32.mrf.mxu0
      %503 = vdwg.mxu0
      %504 = vrot.lane.b32.xlu0 %v412, 2
      %v505 = vpop.permute.xlu0 %504
      %506 = vrot.lane.b32.xlu0 %v413, 2
      %v507 = vpop.permute.xlu0 %506
      %vm510 = vcmask 220176
      %511 = vst.msk [vmem:[#allocation2] sm:$0xff] %vm510, %v505
      %vm512 = vcmask 214032
      %513 = vst.msk [vmem:[#allocation2 + $0x8] sm:$0x3] %vm512, %v507
      %vm514 = vcmask 15360
      %515 = vst.msk [vmem:[#allocation2] sm:$0xff] %vm514, 0.0
      %vm516 = vcmask 9216
      %517 = vst.msk [vmem:[#allocation2 + $0x8] sm:$0x3] %vm516, 0.0
      %vm518 = vcmask 236760
      %519 = vst.msk [vmem:[#allocation2] sm:$0xff] %vm518, 0.0
      %vm520 = vcmask 230616
      %521 = vst.msk [vmem:[#allocation2 + $0x8] sm:$0x3] %vm520, 0.0
      %v522 = vld [vmem:[#allocation2] sm:$0xff]
      %v523 = vld [vmem:[#allocation2 + $0x8] sm:$0x3]
      %524 = vst.msk [vmem:[#allocation3] sm:$0xff] %vm418, %v522
      %vm525 = vcmask 197632
      %526 = vst.msk [vmem:[#allocation3 + $0x8] sm:$0x3] %vm525, %v523
      %v527 = vld [vmem:[#allocation2] sm:$0xff]
      %v528 = vld [vmem:[#allocation2 + $0x8] sm:$0x3]
      %531 = vrot.lane.b32.xlu0 %v527, 127
      %v532 = vpop.permute.xlu0 %531
      %533 = vrot.lane.b32.xlu0 %v528, 127
      %v534 = vpop.permute.xlu0 %533
      %537 = vst.msk [vmem:[#allocation3 + $0xa] sm:$0xff] %vm418, %v532
      %538 = vst.msk [vmem:[#allocation3 + $0x12] sm:$0x3] %vm525, %v534
      %v539 = vld [vmem:[#allocation2] sm:$0xff]
      %v540 = vld [vmem:[#allocation2 + $0x8] sm:$0x3]
      %543 = vrot.lane.b32.xlu0 %v539, 126
      %v544 = vpop.permute.xlu0 %543
      %545 = vrot.lane.b32.xlu0 %v540, 126
      %v546 = vpop.permute.xlu0 %545
      %549 = vst.msk [vmem:[#allocation3 + $0x14] sm:$0xff] %vm418, %v544
      %550 = vst.msk [vmem:[#allocation3 + $0x1c] sm:$0x3] %vm525, %v546
      %v551 = vld [vmem:[#allocation2] sm:$0xff]
      %v552 = vld [vmem:[#allocation2 + $0x8] sm:$0x3]
      %555 = vrot.lane.b32.xlu0 %v551, 125
      %v556 = vpop.permute.xlu0 %555
      %557 = vrot.lane.b32.xlu0 %v552, 125
      %v558 = vpop.permute.xlu0 %557
      %561 = vst.msk [vmem:[#allocation3 + $0x1e] sm:$0xff] %vm418, %v556
      %562 = vst.msk [vmem:[#allocation3 + $0x26] sm:$0x3] %vm525, %v558
      %v563 = vld [vmem:[#allocation2] sm:$0xff]
      %v564 = vld [vmem:[#allocation2 + $0x8] sm:$0x3]
      %567 = vrot.lane.b32.xlu0 %v563, 124
      %v568 = vpop.permute.xlu0 %567
      %569 = vrot.lane.b32.xlu0 %v564, 124
      %v570 = vpop.permute.xlu0 %569
      %573 = vst.msk [vmem:[#allocation3 + $0x28] sm:$0xff] %vm418, %v568
      %574 = vst.msk [vmem:[#allocation3 + $0x30] sm:$0x3] %vm525, %v570
      %v575 = vld [vmem:[%s1] sm:$0xff]
      %v576 = vld [vmem:[#allocation3] sm:$0xff]
      %v577 = vld [vmem:[#allocation3 + $0x8] sm:$0xff]
      %v578 = vld [vmem:[#allocation3 + $0x10] sm:$0xff]
      %v579 = vld [vmem:[#allocation3 + $0x18] sm:$0xff]
      %v580 = vld [vmem:[#allocation3 + $0x20] sm:$0xff]
      %v581 = vld [vmem:[#allocation3 + $0x28] sm:$0xff]
      %v582 = vld [vmem:[#allocation3 + $0x30] sm:$0x3]
      %v583 = vld [vmem:[%s2] sm:$0xff]
      %585 = vset.pattern.permute.xlu0 0
      %586 = vperm.xlu0 %585, %v583
      %v587 = vpop.permute.xlu0 %586
      %vm589 = vcmask 408576
      %v591 = vsel %vm589, %v575, 0
      %vm593 = vcmask 1041408
      %v595 = vsel %vm593, %v582, 0
      %597 = vmatprep.subr.mxu0 0.0
      %598 = vmatpush1.msra.mxu0 0.0
      %599 = vmatprep.subr.mxu0 0.0
      %600 = vmatpush1.msra.mxu0 0.0
      %601 = vmatprep.subr.mxu0 0.0
      %602 = vmatpush1.msra.mxu0 0.0
      %603 = vmatprep.subr.mxu0 0.0
      %604 = vmatpush1.msra.mxu0 0.0
      %605 = vmatprep.subr.mxu0 0.0
      %606 = vmatpush1.msra.mxu0 0.0
      %607 = vmatprep.subr.mxu0 0.0
      %608 = vmatpush1.msra.mxu0 0.0
      %609 = vmatprep.subr.mxu0 0.0
      %610 = vmatpush1.msra.mxu0 0.0
      %611 = vmatprep.subr.mxu0 0.0
      %612 = vmatpush1.msra.mxu0 0.0
      %613 = vmatprep.subr.mxu0 0.0
      %614 = vmatpush1.msra.mxu0 0.0
      %615 = vmatprep.subr.mxu0 0.0
      %616 = vmatpush1.msra.mxu0 %v595
      %617 = vmatprep.subr.mxu0 0.0
      %618 = vmatpush1.msra.mxu0 %v581
      %619 = vmatprep.subr.mxu0 0.0
      %620 = vmatpush1.msra.mxu0 %v580
      %621 = vmatprep.subr.mxu0 0.0
      %622 = vmatpush1.msra.mxu0 %v579
      %623 = vmatprep.subr.mxu0 0.0
      %624 = vmatpush1.msra.mxu0 %v578
      %625 = vmatprep.subr.mxu0 0.0
      %626 = vmatpush1.msra.mxu0 %v577
      %627 = vmatprep.subr.mxu0 0.0
      %628 = vmatpush1.msra.mxu0 %v576
      %629 = vmatprep.subr.mxu0 0.0
      %630 = vmatpush2.msra.mxu0 0.0
      %631 = vmatprep.subr.mxu0 0.0
      %632 = vmatpush2.msra.mxu0 0.0
      %633 = vmatprep.subr.mxu0 0.0
      %634 = vmatpush2.msra.mxu0 0.0
      %635 = vmatprep.subr.mxu0 0.0
      %636 = vmatpush2.msra.mxu0 0.0
      %637 = vmatprep.subr.mxu0 0.0
      %638 = vmatpush2.msra.mxu0 0.0
      %639 = vmatprep.subr.mxu0 0.0
      %640 = vmatpush2.msra.mxu0 0.0
      %641 = vmatprep.subr.mxu0 0.0
      %642 = vmatpush2.msra.mxu0 0.0
      %643 = vmatprep.subr.mxu0 0.0
      %644 = vmatpush2.msra.mxu0 0.0
      %645 = vmatprep.subr.mxu0 0.0
      %646 = vmatpush2.msra.mxu0 0.0
      %647 = vmatprep.subr.mxu0 0.0
      %648 = vmatpush2.msra.mxu0 0.0
      %649 = vmatprep.subr.mxu0 0.0
      %650 = vmatpush2.msra.mxu0 0.0
      %651 = vmatprep.subr.mxu0 0.0
      %652 = vmatpush2.msra.mxu0 0.0
      %653 = vmatprep.subr.mxu0 0.0
      %654 = vmatpush2.msra.mxu0 0.0
      %655 = vmatprep.subr.mxu0 0.0
      %656 = vmatpush2.msra.mxu0 0.0
      %657 = vmatprep.subr.mxu0 0.0
      %658 = vmatpush2.msra.mxu0 0.0
      %659 = vmatprep.subr.mxu0 0.0
      %660 = vmatpush2.msra.mxu0 0.0
      %661 = vmatprep.mubr.f32.mxu0 0.0
      %662 = vmatmul.mubr.f32.gmra.mxu0 %v591
      %v663 = vpop.f32.mrf.mxu0
      %v664 = vadd.f32 %v587, %v663
      %v665 = vpop.f32.mrf.mxu0
      %666 = vdwg.mxu0
      %v667 = vmax.f32 %v664, 0.0
      %669 = vrot.lane.b32.xlu0 %v667, 2
      %v670 = vpop.permute.xlu0 %669
      %672 = vst.msk [vmem:[#allocation2] sm:$0xff] %vm510, %v670
      %673 = vst.msk [vmem:[#allocation2] sm:$0xff] %vm514, 0.0
      %674 = vst.msk [vmem:[#allocation2] sm:$0xff] %vm518, 0.0
      %v675 = vld [vmem:[#allocation2] sm:$0xff]
      %676 = vst.msk [vmem:[#allocation3] sm:$0xff] %vm418, %v675
      %v677 = vld [vmem:[#allocation2] sm:$0xff]
      %679 = vrot.lane.b32.xlu0 %v677, 127
      %v680 = vpop.permute.xlu0 %679
      %682 = vst.msk [vmem:[#allocation3 + $0x8] sm:$0xff] %vm418, %v680
      %v683 = vld [vmem:[#allocation2] sm:$0xff]
      %685 = vrot.lane.b32.xlu0 %v683, 126
      %v686 = vpop.permute.xlu0 %685
      %688 = vst.msk [vmem:[#allocation3 + $0x10] sm:$0xff] %vm418, %v686
      %v689 = vld [vmem:[#allocation2] sm:$0xff]
      %691 = vrot.lane.b32.xlu0 %v689, 125
      %v692 = vpop.permute.xlu0 %691
      %694 = vst.msk [vmem:[#allocation3 + $0x18] sm:$0xff] %vm418, %v692
      %v695 = vld [vmem:[#allocation2] sm:$0xff]
      %697 = vrot.lane.b32.xlu0 %v695, 124
      %v698 = vpop.permute.xlu0 %697
      %700 = vst.msk [vmem:[#allocation3 + $0x20] sm:$0xff] %vm418, %v698
      %s701 = scalar_lea.vmem %s1, 48
      %v702 = vld [vmem:[%s701] sm:$0xff]
      %v703 = vld [vmem:[#allocation3] sm:$0xff]
      %v704 = vld [vmem:[#allocation3 + $0x8] sm:$0xff]
      %v705 = vld [vmem:[#allocation3 + $0x10] sm:$0xff]
      %v706 = vld [vmem:[#allocation3 + $0x18] sm:$0xff]
      %v707 = vld [vmem:[#allocation3 + $0x20] sm:$0xff]
      %s708 = scalar_lea.vmem %s2, 24
      %v709 = vld [vmem:[%s708] sm:$0xff]
      %711 = vset.pattern.permute.xlu0 0
      %712 = vperm.xlu0 %711, %v709
      %v713 = vpop.permute.xlu0 %712
      %vm715 = vcmask 326656
      %v717 = vsel %vm715, %v702, 0
      %719 = vmatprep.subr.mxu0 0.0
      %720 = vmatpush1.msra.mxu0 0.0
      %721 = vmatprep.subr.mxu0 0.0
      %722 = vmatpush1.msra.mxu0 0.0
      %723 = vmatprep.subr.mxu0 0.0
      %724 = vmatpush1.msra.mxu0 0.0
      %725 = vmatprep.subr.mxu0 0.0
      %726 = vmatpush1.msra.mxu0 0.0
      %727 = vmatprep.subr.mxu0 0.0
      %728 = vmatpush1.msra.mxu0 0.0
      %729 = vmatprep.subr.mxu0 0.0
      %730 = vmatpush1.msra.mxu0 0.0
      %731 = vmatprep.subr.mxu0 0.0
      %732 = vmatpush1.msra.mxu0 0.0
      %733 = vmatprep.subr.mxu0 0.0
      %734 = vmatpush1.msra.mxu0 0.0
      %735 = vmatprep.subr.mxu0 0.0
      %736 = vmatpush1.msra.mxu0 0.0
      %737 = vmatprep.subr.mxu0 0.0
      %738 = vmatpush1.msra.mxu0 0.0
      %739 = vmatprep.subr.mxu0 0.0
      %740 = vmatpush1.msra.mxu0 0.0
      %741 = vmatprep.subr.mxu0 0.0
      %742 = vmatpush1.msra.mxu0 %v707
      %743 = vmatprep.subr.mxu0 0.0
      %744 = vmatpush1.msra.mxu0 %v706
      %745 = vmatprep.subr.mxu0 0.0
      %746 = vmatpush1.msra.mxu0 %v705
      %747 = vmatprep.subr.mxu0 0.0
      %748 = vmatpush1.msra.mxu0 %v704
      %749 = vmatprep.subr.mxu0 0.0
      %750 = vmatpush1.msra.mxu0 %v703
      %751 = vmatprep.subr.mxu0 0.0
      %752 = vmatpush2.msra.mxu0 0.0
      %753 = vmatprep.subr.mxu0 0.0
      %754 = vmatpush2.msra.mxu0 0.0
      %755 = vmatprep.subr.mxu0 0.0
      %756 = vmatpush2.msra.mxu0 0.0
      %757 = vmatprep.subr.mxu0 0.0
      %758 = vmatpush2.msra.mxu0 0.0
      %759 = vmatprep.subr.mxu0 0.0
      %760 = vmatpush2.msra.mxu0 0.0
      %761 = vmatprep.subr.mxu0 0.0
      %762 = vmatpush2.msra.mxu0 0.0
      %763 = vmatprep.subr.mxu0 0.0
      %764 = vmatpush2.msra.mxu0 0.0
      %765 = vmatprep.subr.mxu0 0.0
      %766 = vmatpush2.msra.mxu0 0.0
      %767 = vmatprep.subr.mxu0 0.0
      %768 = vmatpush2.msra.mxu0 0.0
      %769 = vmatprep.subr.mxu0 0.0
      %770 = vmatpush2.msra.mxu0 0.0
      %771 = vmatprep.subr.mxu0 0.0
      %772 = vmatpush2.msra.mxu0 0.0
      %773 = vmatprep.subr.mxu0 0.0
      %774 = vmatpush2.msra.mxu0 0.0
      %775 = vmatprep.subr.mxu0 0.0
      %776 = vmatpush2.msra.mxu0 0.0
      %777 = vmatprep.subr.mxu0 0.0
      %778 = vmatpush2.msra.mxu0 0.0
      %779 = vmatprep.subr.mxu0 0.0
      %780 = vmatpush2.msra.mxu0 0.0
      %781 = vmatprep.subr.mxu0 0.0
      %782 = vmatpush2.msra.mxu0 0.0
      %783 = vmatprep.mubr.f32.mxu0 0.0
      %784 = vmatmul.mubr.f32.gmra.mxu0 %v717
      %v785 = vpop.f32.mrf.mxu0
      %v786 = vadd.f32 %v713, %v785
      %v787 = vpop.f32.mrf.mxu0
      %788 = vdwg.mxu0
      %v789 = vmax.f32 %v786, 0.0
      %791 = vrot.lane.b32.xlu0 %v789, 2
      %v792 = vpop.permute.xlu0 %791
      %794 = vst.msk [vmem:[#allocation2] sm:$0xff] %vm510, %v792
      %795 = vst.msk [vmem:[#allocation2] sm:$0xff] %vm514, 0.0
      %796 = vst.msk [vmem:[#allocation2] sm:$0xff] %vm518, 0.0
      %v797 = vld [vmem:[#allocation2] sm:$0xff]
      %798 = vst.msk [vmem:[#allocation3] sm:$0xff] %vm418, %v797
      %v799 = vld [vmem:[#allocation2] sm:$0xff]
      %801 = vrot.lane.b32.xlu0 %v799, 127
      %v802 = vpop.permute.xlu0 %801
      %804 = vst.msk [vmem:[#allocation3 + $0x8] sm:$0xff] %vm418, %v802
      %v805 = vld [vmem:[#allocation2] sm:$0xff]
      %807 = vrot.lane.b32.xlu0 %v805, 126
      %v808 = vpop.permute.xlu0 %807
      %810 = vst.msk [vmem:[#allocation3 + $0x10] sm:$0xff] %vm418, %v808
      %v811 = vld [vmem:[#allocation2] sm:$0xff]
      %813 = vrot.lane.b32.xlu0 %v811, 125
      %v814 = vpop.permute.xlu0 %813
      %816 = vst.msk [vmem:[#allocation3 + $0x18] sm:$0xff] %vm418, %v814
      %v817 = vld [vmem:[#allocation2] sm:$0xff]
      %819 = vrot.lane.b32.xlu0 %v817, 124
      %v820 = vpop.permute.xlu0 %819
      %822 = vst.msk [vmem:[#allocation3 + $0x20] sm:$0xff] %vm418, %v820
      %s823 = scalar_lea.vmem %s1, 96
      %v824 = vld [vmem:[%s823] sm:$0xff]
      %v825 = vld [vmem:[#allocation3] sm:$0xff]
      %v826 = vld [vmem:[#allocation3 + $0x8] sm:$0xff]
      %v827 = vld [vmem:[#allocation3 + $0x10] sm:$0xff]
      %v828 = vld [vmem:[#allocation3 + $0x18] sm:$0xff]
      %v829 = vld [vmem:[#allocation3 + $0x20] sm:$0xff]
      %s830 = scalar_lea.vmem %s2, 48
      %v831 = vld [vmem:[%s830] sm:$0xff]
      %833 = vset.pattern.permute.xlu0 0
      %834 = vperm.xlu0 %833, %v831
      %v835 = vpop.permute.xlu0 %834
      %v838 = vsel %vm715, %v824, 0
      %840 = vmatprep.subr.mxu0 0.0
      %841 = vmatpush1.msra.mxu0 0.0
      %842 = vmatprep.subr.mxu0 0.0
      %843 = vmatpush1.msra.mxu0 0.0
      %844 = vmatprep.subr.mxu0 0.0
      %845 = vmatpush1.msra.mxu0 0.0
      %846 = vmatprep.subr.mxu0 0.0
      %847 = vmatpush1.msra.mxu0 0.0
      %848 = vmatprep.subr.mxu0 0.0
      %849 = vmatpush1.msra.mxu0 0.0
      %850 = vmatprep.subr.mxu0 0.0
      %851 = vmatpush1.msra.mxu0 0.0
      %852 = vmatprep.subr.mxu0 0.0
      %853 = vmatpush1.msra.mxu0 0.0
      %854 = vmatprep.subr.mxu0 0.0
      %855 = vmatpush1.msra.mxu0 0.0
      %856 = vmatprep.subr.mxu0 0.0
      %857 = vmatpush1.msra.mxu0 0.0
      %858 = vmatprep.subr.mxu0 0.0
      %859 = vmatpush1.msra.mxu0 0.0
      %860 = vmatprep.subr.mxu0 0.0
      %861 = vmatpush1.msra.mxu0 0.0
      %862 = vmatprep.subr.mxu0 0.0
      %863 = vmatpush1.msra.mxu0 %v829
      %864 = vmatprep.subr.mxu0 0.0
      %865 = vmatpush1.msra.mxu0 %v828
      %866 = vmatprep.subr.mxu0 0.0
      %867 = vmatpush1.msra.mxu0 %v827
      %868 = vmatprep.subr.mxu0 0.0
      %869 = vmatpush1.msra.mxu0 %v826
      %870 = vmatprep.subr.mxu0 0.0
      %871 = vmatpush1.msra.mxu0 %v825
      %872 = vmatprep.subr.mxu0 0.0
      %873 = vmatpush2.msra.mxu0 0.0
      %874 = vmatprep.subr.mxu0 0.0
      %875 = vmatpush2.msra.mxu0 0.0
      %876 = vmatprep.subr.mxu0 0.0
      %877 = vmatpush2.msra.mxu0 0.0
      %878 = vmatprep.subr.mxu0 0.0
      %879 = vmatpush2.msra.mxu0 0.0
      %880 = vmatprep.subr.mxu0 0.0
      %881 = vmatpush2.msra.mxu0 0.0
      %882 = vmatprep.subr.mxu0 0.0
      %883 = vmatpush2.msra.mxu0 0.0
      %884 = vmatprep.subr.mxu0 0.0
      %885 = vmatpush2.msra.mxu0 0.0
      %886 = vmatprep.subr.mxu0 0.0
      %887 = vmatpush2.msra.mxu0 0.0
      %888 = vmatprep.subr.mxu0 0.0
      %889 = vmatpush2.msra.mxu0 0.0
      %890 = vmatprep.subr.mxu0 0.0
      %891 = vmatpush2.msra.mxu0 0.0
      %892 = vmatprep.subr.mxu0 0.0
      %893 = vmatpush2.msra.mxu0 0.0
      %894 = vmatprep.subr.mxu0 0.0
      %895 = vmatpush2.msra.mxu0 0.0
      %896 = vmatprep.subr.mxu0 0.0
      %897 = vmatpush2.msra.mxu0 0.0
      %898 = vmatprep.subr.mxu0 0.0
      %899 = vmatpush2.msra.mxu0 0.0
      %900 = vmatprep.subr.mxu0 0.0
      %901 = vmatpush2.msra.mxu0 0.0
      %902 = vmatprep.subr.mxu0 0.0
      %903 = vmatpush2.msra.mxu0 0.0
      %904 = vmatprep.mubr.f32.mxu0 0.0
      %905 = vmatmul.mubr.f32.gmra.mxu0 %v838
      %v906 = vpop.f32.mrf.mxu0
      %v907 = vadd.f32 %v835, %v906
      %v908 = vpop.f32.mrf.mxu0
      %909 = vdwg.mxu0
      %v910 = vmax.f32 %v907, 0.0
      %v911 = vsel %vm418, %v910, 0.0
      %912 = vadd.xlane.f32.xlu0 %v911
      %v913 = vpop.xlane.xlu0 %912
      %v914 = vrcp.pop 25.0
      %v915 = vmul.f32 %v913, %v914
      %v916 = vld [vmem:[%s3] sm:$0x7]
      %v917 = vld [vmem:[%s4] sm:$0x7]
      %vm918 = vcmask 64512
      %v920 = vsel %vm918, %v916, 0
      %922 = vmatprep.subr.mxu0 0.0
      %923 = vmatpush1.msra.mxu0 0.0
      %924 = vmatprep.subr.mxu0 0.0
      %925 = vmatpush1.msra.mxu0 0.0
      %926 = vmatprep.subr.mxu0 0.0
      %927 = vmatpush1.msra.mxu0 0.0
      %928 = vmatprep.subr.mxu0 0.0
      %929 = vmatpush1.msra.mxu0 0.0
      %930 = vmatprep.subr.mxu0 0.0
      %931 = vmatpush1.msra.mxu0 0.0
      %932 = vmatprep.subr.mxu0 0.0
      %933 = vmatpush1.msra.mxu0 0.0
      %934 = vmatprep.subr.mxu0 0.0
      %935 = vmatpush1.msra.mxu0 0.0
      %936 = vmatprep.subr.mxu0 0.0
      %937 = vmatpush1.msra.mxu0 0.0
      %938 = vmatprep.subr.mxu0 0.0
      %939 = vmatpush1.msra.mxu0 0.0
      %940 = vmatprep.subr.mxu0 0.0
      %941 = vmatpush1.msra.mxu0 0.0
      %942 = vmatprep.subr.mxu0 0.0
      %943 = vmatpush1.msra.mxu0 0.0
      %944 = vmatprep.subr.mxu0 0.0
      %945 = vmatpush1.msra.mxu0 0.0
      %946 = vmatprep.subr.mxu0 0.0
      %947 = vmatpush1.msra.mxu0 0.0
      %948 = vmatprep.subr.mxu0 0.0
      %949 = vmatpush1.msra.mxu0 0.0
      %950 = vmatprep.subr.mxu0 0.0
      %951 = vmatpush1.msra.mxu0 0.0
      %952 = vmatprep.subr.mxu0 0.0
      %953 = vmatpush1.msra.mxu0 %v915
      %954 = vmatprep.subr.mxu0 0.0
      %955 = vmatpush2.msra.mxu0 0.0
      %956 = vmatprep.subr.mxu0 0.0
      %957 = vmatpush2.msra.mxu0 0.0
      %958 = vmatprep.subr.mxu0 0.0
      %959 = vmatpush2.msra.mxu0 0.0
      %960 = vmatprep.subr.mxu0 0.0
      %961 = vmatpush2.msra.mxu0 0.0
      %962 = vmatprep.subr.mxu0 0.0
      %963 = vmatpush2.msra.mxu0 0.0
      %964 = vmatprep.subr.mxu0 0.0
      %965 = vmatpush2.msra.mxu0 0.0
      %966 = vmatprep.subr.mxu0 0.0
      %967 = vmatpush2.msra.mxu0 0.0
      %968 = vmatprep.subr.mxu0 0.0
      %969 = vmatpush2.msra.mxu0 0.0
      %970 = vmatprep.subr.mxu0 0.0
      %971 = vmatpush2.msra.mxu0 0.0
      %972 = vmatprep.subr.mxu0 0.0
      %973 = vmatpush2.msra.mxu0 0.0
      %974 = vmatprep.subr.mxu0 0.0
      %975 = vmatpush2.msra.mxu0 0.0
      %976 = vmatprep.subr.mxu0 0.0
      %977 = vmatpush2.msra.mxu0 0.0
      %978 = vmatprep.subr.mxu0 0.0
      %979 = vmatpush2.msra.mxu0 0.0
      %980 = vmatprep.subr.mxu0 0.0
      %981 = vmatpush2.msra.mxu0 0.0
      %982 = vmatprep.subr.mxu0 0.0
      %983 = vmatpush2.msra.mxu0 0.0
      %984 = vmatprep.subr.mxu0 0.0
      %985 = vmatpush2.msra.mxu0 0.0
      %986 = vmatprep.mubr.f32.mxu0 0.0
      %987 = vmatmul.mubr.f32.gmra.mxu0 %v920
      %v988 = vpop.f32.mrf.mxu0
      %v989 = vadd.f32 %v917, %v988
      %v990 = vpop.f32.mrf.mxu0
      %991 = vdwg.mxu0
      %v992 = vmax.f32 %v989, 0.0
      %v993 = vld [vmem:[%s5] sm:$0xff]
      %v994 = vld [vmem:[%s6] sm:$0xff]
      %vm995 = vcmask 7168
      %v997 = vsel %vm995, %v993, 0
      %v1000 = vsel %vm425, %v992, 0
      %1002 = vmatprep.subr.mxu0 0.0
      %1003 = vmatpush1.msra.mxu0 0.0
      %1004 = vmatprep.subr.mxu0 0.0
      %1005 = vmatpush1.msra.mxu0 0.0
      %1006 = vmatprep.subr.mxu0 0.0
      %1007 = vmatpush1.msra.mxu0 0.0
      %1008 = vmatprep.subr.mxu0 0.0
      %1009 = vmatpush1.msra.mxu0 0.0
      %1010 = vmatprep.subr.mxu0 0.0
      %1011 = vmatpush1.msra.mxu0 0.0
      %1012 = vmatprep.subr.mxu0 0.0
      %1013 = vmatpush1.msra.mxu0 0.0
      %1014 = vmatprep.subr.mxu0 0.0
      %1015 = vmatpush1.msra.mxu0 0.0
      %1016 = vmatprep.subr.mxu0 0.0
      %1017 = vmatpush1.msra.mxu0 0.0
      %1018 = vmatprep.subr.mxu0 0.0
      %1019 = vmatpush1.msra.mxu0 0.0
      %1020 = vmatprep.subr.mxu0 0.0
      %1021 = vmatpush1.msra.mxu0 0.0
      %1022 = vmatprep.subr.mxu0 0.0
      %1023 = vmatpush1.msra.mxu0 0.0
      %1024 = vmatprep.subr.mxu0 0.0
      %1025 = vmatpush1.msra.mxu0 0.0
      %1026 = vmatprep.subr.mxu0 0.0
      %1027 = vmatpush1.msra.mxu0 0.0
      %1028 = vmatprep.subr.mxu0 0.0
      %1029 = vmatpush1.msra.mxu0 0.0
      %1030 = vmatprep.subr.mxu0 0.0
      %1031 = vmatpush1.msra.mxu0 0.0
      %1032 = vmatprep.subr.mxu0 0.0
      %1033 = vmatpush1.msra.mxu0 %v1000
      %1034 = vmatprep.subr.mxu0 0.0
      %1035 = vmatpush2.msra.mxu0 0.0
      %1036 = vmatprep.subr.mxu0 0.0
      %1037 = vmatpush2.msra.mxu0 0.0
      %1038 = vmatprep.subr.mxu0 0.0
      %1039 = vmatpush2.msra.mxu0 0.0
      %1040 = vmatprep.subr.mxu0 0.0
      %1041 = vmatpush2.msra.mxu0 0.0
      %1042 = vmatprep.subr.mxu0 0.0
      %1043 = vmatpush2.msra.mxu0 0.0
      %1044 = vmatprep.subr.mxu0 0.0
      %1045 = vmatpush2.msra.mxu0 0.0
      %1046 = vmatprep.subr.mxu0 0.0
      %1047 = vmatpush2.msra.mxu0 0.0
      %1048 = vmatprep.subr.mxu0 0.0
      %1049 = vmatpush2.msra.mxu0 0.0
      %1050 = vmatprep.subr.mxu0 0.0
      %1051 = vmatpush2.msra.mxu0 0.0
      %1052 = vmatprep.subr.mxu0 0.0
      %1053 = vmatpush2.msra.mxu0 0.0
      %1054 = vmatprep.subr.mxu0 0.0
      %1055 = vmatpush2.msra.mxu0 0.0
      %1056 = vmatprep.subr.mxu0 0.0
      %1057 = vmatpush2.msra.mxu0 0.0
      %1058 = vmatprep.subr.mxu0 0.0
      %1059 = vmatpush2.msra.mxu0 0.0
      %1060 = vmatprep.subr.mxu0 0.0
      %1061 = vmatpush2.msra.mxu0 0.0
      %1062 = vmatprep.subr.mxu0 0.0
      %1063 = vmatpush2.msra.mxu0 0.0
      %1064 = vmatprep.subr.mxu0 0.0
      %1065 = vmatpush2.msra.mxu0 0.0
      %1066 = vmatprep.mubr.f32.mxu0 0.0
      %1067 = vmatmul.mubr.f32.gmra.mxu0 %v997
      %v1068 = vpop.f32.mrf.mxu0
      %v1069 = vadd.f32 %v994, %v1068
      %v1070 = vpop.f32.mrf.mxu0
      %1071 = vdwg.mxu0
      %v1072 = vxor.u32 %v1069, 2147483648
      %v1073 = vmul.f32 %v1072, 1.442695
      %v1074 = vpow.pop %v1073
      %v1075 = vadd.f32 %v1074, 1.0
      %v1076 = vrcp.pop %v1075
      %v1077 = vmul.f32 1.0, %v1076
      %1079 = vset.pattern.permute.xlu0 0
      %1080 = vperm.xlu0 %1079, %v1077
      %v1081 = vpop.permute.xlu0 %1080
      %v1083 = vadd.f32 %v910, %v1081
      %v1084 = vadd.f32 %v667, %v1083
      %v1085 = vld [vmem:[%s8] sm:$0xff]
      %v1086 = vld [vmem:[%s8 + $0x8] sm:$0xff]
      %v1087 = vld [vmem:[%s8 + $0x10] sm:$0xff]
      %v1088 = vld [vmem:[%s8 + $0x18] sm:$0x1]
      %1090 = vrot.lane.b32.xlu0 %v1084, 2
      %v1091 = vpop.permute.xlu0 %1090
      %1093 = vst.msk [vmem:[#allocation2] sm:$0xff] %vm510, %v1091
      %1094 = vst.msk [vmem:[#allocation2] sm:$0xff] %vm514, 0.0
      %1095 = vst.msk [vmem:[#allocation2] sm:$0xff] %vm518, 0.0
      %v1096 = vld [vmem:[#allocation2] sm:$0xff]
      %1097 = vst.msk [vmem:[#allocation3] sm:$0xff] %vm418, %v1096
      %v1098 = vld [vmem:[#allocation2] sm:$0xff]
      %1100 = vrot.lane.b32.xlu0 %v1098, 127
      %v1101 = vpop.permute.xlu0 %1100
      %1103 = vst.msk [vmem:[#allocation3 + $0x8] sm:$0xff] %vm418, %v1101
      %v1104 = vld [vmem:[#allocation2] sm:$0xff]
      %1106 = vrot.lane.b32.xlu0 %v1104, 126
      %v1107 = vpop.permute.xlu0 %1106
      %1109 = vst.msk [vmem:[#allocation3 + $0x10] sm:$0xff] %vm418, %v1107
      %v1110 = vld [vmem:[#allocation2] sm:$0xff]
      %1112 = vrot.lane.b32.xlu0 %v1110, 125
      %v1113 = vpop.permute.xlu0 %1112
      %1115 = vst.msk [vmem:[#allocation3 + $0x18] sm:$0xff] %vm418, %v1113
      %v1116 = vld [vmem:[#allocation2] sm:$0xff]
      %1118 = vrot.lane.b32.xlu0 %v1116, 124
      %v1119 = vpop.permute.xlu0 %1118
      %1121 = vst.msk [vmem:[#allocation3 + $0x20] sm:$0xff] %vm418, %v1119
      %s1122 = scalar_lea.vmem %s1, 144
      %v1123 = vld [vmem:[%s1122] sm:$0xff]
      %v1124 = vld [vmem:[%s1122 + $0x10] sm:$0xff]
      %v1125 = vld [vmem:[#allocation3] sm:$0xff]
      %v1126 = vld [vmem:[#allocation3 + $0x8] sm:$0xff]
      %v1127 = vld [vmem:[#allocation3 + $0x10] sm:$0xff]
      %v1128 = vld [vmem:[#allocation3 + $0x18] sm:$0xff]
      %v1129 = vld [vmem:[#allocation3 + $0x20] sm:$0xff]
      %v1131 = vsel %vm715, %v1123, 0
      %v1134 = vsel %vm715, %v1124, 0
      %1136 = vmatprep.subr.mxu0 0.0
      %1137 = vmatpush1.msra.mxu0 0.0
      %1138 = vmatprep.subr.mxu0 0.0
      %1139 = vmatpush1.msra.mxu0 0.0
      %1140 = vmatprep.subr.mxu0 0.0
      %1141 = vmatpush1.msra.mxu0 0.0
      %1142 = vmatprep.subr.mxu0 0.0
      %1143 = vmatpush1.msra.mxu0 0.0
      %1144 = vmatprep.subr.mxu0 0.0
      %1145 = vmatpush1.msra.mxu0 0.0
      %1146 = vmatprep.subr.mxu0 0.0
      %1147 = vmatpush1.msra.mxu0 0.0
      %1148 = vmatprep.subr.mxu0 0.0
      %1149 = vmatpush1.msra.mxu0 0.0
      %1150 = vmatprep.subr.mxu0 0.0
      %1151 = vmatpush1.msra.mxu0 0.0
      %1152 = vmatprep.subr.mxu0 0.0
      %1153 = vmatpush1.msra.mxu0 0.0
      %1154 = vmatprep.subr.mxu0 0.0
      %1155 = vmatpush1.msra.mxu0 0.0
      %1156 = vmatprep.subr.mxu0 0.0
      %1157 = vmatpush1.msra.mxu0 0.0
      %1158 = vmatprep.subr.mxu0 0.0
      %1159 = vmatpush1.msra.mxu0 %v1129
      %1160 = vmatprep.subr.mxu0 0.0
      %1161 = vmatpush1.msra.mxu0 %v1128
      %1162 = vmatprep.subr.mxu0 0.0
      %1163 = vmatpush1.msra.mxu0 %v1127
      %1164 = vmatprep.subr.mxu0 0.0
      %1165 = vmatpush1.msra.mxu0 %v1126
      %1166 = vmatprep.subr.mxu0 0.0
      %1167 = vmatpush1.msra.mxu0 %v1125
      %1168 = vmatprep.subr.mxu0 0.0
      %1169 = vmatpush2.msra.mxu0 0.0
      %1170 = vmatprep.subr.mxu0 0.0
      %1171 = vmatpush2.msra.mxu0 0.0
      %1172 = vmatprep.subr.mxu0 0.0
      %1173 = vmatpush2.msra.mxu0 0.0
      %1174 = vmatprep.subr.mxu0 0.0
      %1175 = vmatpush2.msra.mxu0 0.0
      %1176 = vmatprep.subr.mxu0 0.0
      %1177 = vmatpush2.msra.mxu0 0.0
      %1178 = vmatprep.subr.mxu0 0.0
      %1179 = vmatpush2.msra.mxu0 0.0
      %1180 = vmatprep.subr.mxu0 0.0
      %1181 = vmatpush2.msra.mxu0 0.0
      %1182 = vmatprep.subr.mxu0 0.0
      %1183 = vmatpush2.msra.mxu0 0.0
      %1184 = vmatprep.subr.mxu0 0.0
      %1185 = vmatpush2.msra.mxu0 0.0
      %1186 = vmatprep.subr.mxu0 0.0
      %1187 = vmatpush2.msra.mxu0 0.0
      %1188 = vmatprep.subr.mxu0 0.0
      %1189 = vmatpush2.msra.mxu0 0.0
      %1190 = vmatprep.subr.mxu0 0.0
      %1191 = vmatpush2.msra.mxu0 0.0
      %1192 = vmatprep.subr.mxu0 0.0
      %1193 = vmatpush2.msra.mxu0 0.0
      %1194 = vmatprep.subr.mxu0 0.0
      %1195 = vmatpush2.msra.mxu0 0.0
      %1196 = vmatprep.subr.mxu0 0.0
      %1197 = vmatpush2.msra.mxu0 0.0
      %1198 = vmatprep.subr.mxu0 0.0
      %1199 = vmatpush2.msra.mxu0 0.0
      %1200 = vmatprep.mubr.f32.mxu0 0.0
      %1201 = vmatmul.mubr.f32.gmra.mxu0 %v1131
      %v1202 = vpop.f32.mrf.mxu0
      %v1203 = vadd.f32 0.0, %v1202
      %v1204 = vpop.f32.mrf.mxu0
      %1205 = vmatprep.mubr.f32.mxu0 0.0
      %1206 = vmatmul.mubr.f32.gmra.mxu0 %v1134
      %v1207 = vpop.f32.mrf.mxu0
      %v1208 = vadd.f32 0.0, %v1207
      %v1209 = vpop.f32.mrf.mxu0
      %1210 = vdwg.mxu0
      %s1211 = scalar_lea.vmem %s2, 72
      %v1212 = vld [vmem:[%s1211] sm:$0xff]
      %v1213 = vld [vmem:[%s1211 + $0x8] sm:$0xff]
      %1215 = vset.pattern.permute.xlu0 0
      %1216 = vperm.xlu0 %1215, %v1212
      %v1217 = vpop.permute.xlu0 %1216
      %1220 = vset.pattern.permute.xlu0 0
      %1221 = vperm.xlu0 %1220, %v1213
      %v1222 = vpop.permute.xlu0 %1221
      %v1225 = vsel %vm418, %v1203, 0
      %v1228 = vsel %vm418, %v1208, 0
      %v1231 = vsel %vm425, %v1088, 0
      %1233 = vmatprep.subr.mxu0 0.0
      %1234 = vmatpush1.msra.mxu0 0.0
      %1235 = vmatprep.subr.mxu0 0.0
      %1236 = vmatpush1.msra.mxu0 0.0
      %1237 = vmatprep.subr.mxu0 0.0
      %1238 = vmatpush1.msra.mxu0 0.0
      %1239 = vmatprep.subr.mxu0 0.0
      %1240 = vmatpush1.msra.mxu0 0.0
      %1241 = vmatprep.subr.mxu0 0.0
      %1242 = vmatpush1.msra.mxu0 0.0
      %1243 = vmatprep.subr.mxu0 0.0
      %1244 = vmatpush1.msra.mxu0 0.0
      %1245 = vmatprep.subr.mxu0 0.0
      %1246 = vmatpush1.msra.mxu0 0.0
      %1247 = vmatprep.subr.mxu0 0.0
      %1248 = vmatpush1.msra.mxu0 0.0
      %1249 = vmatprep.subr.mxu0 0.0
      %1250 = vmatpush1.msra.mxu0 0.0
      %1251 = vmatprep.subr.mxu0 0.0
      %1252 = vmatpush1.msra.mxu0 0.0
      %1253 = vmatprep.subr.mxu0 0.0
      %1254 = vmatpush1.msra.mxu0 0.0
      %1255 = vmatprep.subr.mxu0 0.0
      %1256 = vmatpush1.msra.mxu0 0.0
      %1257 = vmatprep.subr.mxu0 0.0
      %1258 = vmatpush1.msra.mxu0 %v1231
      %1259 = vmatprep.subr.mxu0 0.0
      %1260 = vmatpush1.msra.mxu0 %v1087
      %1261 = vmatprep.subr.mxu0 0.0
      %1262 = vmatpush1.msra.mxu0 %v1086
      %1263 = vmatprep.subr.mxu0 0.0
      %1264 = vmatpush1.msra.mxu0 %v1085
      %1265 = vmatprep.subr.mxu0 0.0
      %1266 = vmatpush2.msra.mxu0 0.0
      %1267 = vmatprep.subr.mxu0 0.0
      %1268 = vmatpush2.msra.mxu0 0.0
      %1269 = vmatprep.subr.mxu0 0.0
      %1270 = vmatpush2.msra.mxu0 0.0
      %1271 = vmatprep.subr.mxu0 0.0
      %1272 = vmatpush2.msra.mxu0 0.0
      %1273 = vmatprep.subr.mxu0 0.0
      %1274 = vmatpush2.msra.mxu0 0.0
      %1275 = vmatprep.subr.mxu0 0.0
      %1276 = vmatpush2.msra.mxu0 0.0
      %1277 = vmatprep.subr.mxu0 0.0
      %1278 = vmatpush2.msra.mxu0 0.0
      %1279 = vmatprep.subr.mxu0 0.0
      %1280 = vmatpush2.msra.mxu0 0.0
      %1281 = vmatprep.subr.mxu0 0.0
      %1282 = vmatpush2.msra.mxu0 0.0
      %1283 = vmatprep.subr.mxu0 0.0
      %1284 = vmatpush2.msra.mxu0 0.0
      %1285 = vmatprep.subr.mxu0 0.0
      %1286 = vmatpush2.msra.mxu0 0.0
      %1287 = vmatprep.subr.mxu0 0.0
      %1288 = vmatpush2.msra.mxu0 0.0
      %1289 = vmatprep.subr.mxu0 0.0
      %1290 = vmatpush2.msra.mxu0 0.0
      %1291 = vmatprep.subr.mxu0 0.0
      %1292 = vmatpush2.msra.mxu0 0.0
      %1293 = vmatprep.subr.mxu0 0.0
      %1294 = vmatpush2.msra.mxu0 0.0
      %1295 = vmatprep.subr.mxu0 0.0
      %1296 = vmatpush2.msra.mxu0 0.0
      %1297 = vmatprep.mubr.f32.mxu0 0.0
      %1298 = vmatmul.mubr.f32.gmra.mxu0 %v1225
      %v1299 = vpop.f32.mrf.mxu0
      %v1300 = vadd.f32 %v1217, %v1299
      %v1301 = vpop.f32.mrf.mxu0
      %1302 = vmatprep.mubr.f32.mxu0 0.0
      %1303 = vmatmul.mubr.f32.gmra.mxu0 %v1228
      %v1304 = vpop.f32.mrf.mxu0
      %v1305 = vadd.f32 %v1222, %v1304
      %v1306 = vpop.f32.mrf.mxu0
      %1307 = vdwg.mxu0
      %v1308 = vmax.f32 %v1300, 0.0
      %v1309 = vmax.f32 %v1305, 0.0
      %1312 = vrot.lane.b32.xlu0 %v1308, 2
      %v1313 = vpop.permute.xlu0 %1312
      %1314 = vrot.lane.b32.xlu0 %v1309, 2
      %v1315 = vpop.permute.xlu0 %1314
      %vm1318 = vcmask 56336
      %1319 = vst.msk [vmem:[#allocation2] sm:$0xff] %vm1318, %v1313
      %1320 = vst.msk [vmem:[#allocation2 + $0x8] sm:$0xff] %vm1318, %v1315
      %1321 = vst.msk [vmem:[#allocation2] sm:$0xff] %vm514, 0.0
      %1322 = vst.msk [vmem:[#allocation2 + $0x8] sm:$0xff] %vm514, 0.0
      %vm1323 = vcmask 72760
      %1324 = vst.msk [vmem:[#allocation2] sm:$0xff] %vm1323, 0.0
      %1325 = vst.msk [vmem:[#allocation2 + $0x8] sm:$0xff] %vm1323, 0.0
      %v1326 = vld [vmem:[#allocation2] sm:$0xff]
      %v1327 = vld [vmem:[#allocation2 + $0x8] sm:$0xff]
      %vm1328 = vcmask 39936
      %1329 = vst.msk [vmem:[#allocation3] sm:$0xff] %vm1328, %v1326
      %1330 = vst.msk [vmem:[#allocation3 + $0x8] sm:$0xff] %vm1328, %v1327
      %v1331 = vld [vmem:[#allocation2] sm:$0xff]
      %v1332 = vld [vmem:[#allocation2 + $0x8] sm:$0xff]
      %1335 = vrot.lane.b32.xlu0 %v1331, 127
      %v1336 = vpop.permute.xlu0 %1335
      %1337 = vrot.lane.b32.xlu0 %v1332, 127
      %v1338 = vpop.permute.xlu0 %1337
      %1341 = vst.msk [vmem:[#allocation3 + $0x10] sm:$0xff] %vm1328, %v1336
      %1342 = vst.msk [vmem:[#allocation3 + $0x18] sm:$0xff] %vm1328, %v1338
      %v1343 = vld [vmem:[#allocation2] sm:$0xff]
      %v1344 = vld [vmem:[#allocation2 + $0x8] sm:$0xff]
      %1347 = vrot.lane.b32.xlu0 %v1343, 126
      %v1348 = vpop.permute.xlu0 %1347
      %1349 = vrot.lane.b32.xlu0 %v1344, 126
      %v1350 = vpop.permute.xlu0 %1349
      %1353 = vst.msk [vmem:[#allocation3 + $0x20] sm:$0xff] %vm1328, %v1348
      %1354 = vst.msk [vmem:[#allocation3 + $0x28] sm:$0xff] %vm1328, %v1350
      %v1355 = vld [vmem:[#allocation2] sm:$0xff]
      %v1356 = vld [vmem:[#allocation2 + $0x8] sm:$0xff]
      %1359 = vrot.lane.b32.xlu0 %v1355, 125
      %v1360 = vpop.permute.xlu0 %1359
      %1361 = vrot.lane.b32.xlu0 %v1356, 125
      %v1362 = vpop.permute.xlu0 %1361
      %1365 = vst.msk [vmem:[#allocation3 + $0x30] sm:$0xff] %vm1328, %v1360
      %1366 = vst.msk [vmem:[#allocation3 + $0x38] sm:$0xff] %vm1328, %v1362
      %v1367 = vld [vmem:[#allocation2] sm:$0xff]
      %v1368 = vld [vmem:[#allocation2 + $0x8] sm:$0xff]
      %1371 = vrot.lane.b32.xlu0 %v1367, 124
      %v1372 = vpop.permute.xlu0 %1371
      %1373 = vrot.lane.b32.xlu0 %v1368, 124
      %v1374 = vpop.permute.xlu0 %1373
      %1377 = vst.msk [vmem:[#allocation3 + $0x40] sm:$0xff] %vm1328, %v1372
      %1378 = vst.msk [vmem:[#allocation3 + $0x48] sm:$0xff] %vm1328, %v1374
      %s1379 = scalar_lea.vmem %s1, 192
      %v1380 = vld [vmem:[%s1379] sm:$0xff]
      %v1381 = vld [vmem:[%s1379 + $0x10] sm:$0xff]
      %v1382 = vld [vmem:[#allocation3] sm:$0xff]
      %v1383 = vld [vmem:[#allocation3 + $0x8] sm:$0xff]
      %v1384 = vld [vmem:[#allocation3 + $0x10] sm:$0xff]
      %v1385 = vld [vmem:[#allocation3 + $0x18] sm:$0xff]
      %v1386 = vld [vmem:[#allocation3 + $0x20] sm:$0xff]
      %v1387 = vld [vmem:[#allocation3 + $0x28] sm:$0xff]
      %v1388 = vld [vmem:[#allocation3 + $0x30] sm:$0xff]
      %v1389 = vld [vmem:[#allocation3 + $0x38] sm:$0xff]
      %v1390 = vld [vmem:[#allocation3 + $0x40] sm:$0xff]
      %v1391 = vld [vmem:[#allocation3 + $0x48] sm:$0xff]
      %s1392 = scalar_lea.vmem %s2, 96
      %v1393 = vld [vmem:[%s1392] sm:$0xff]
      %v1394 = vld [vmem:[%s1392 + $0x8] sm:$0xff]
      %1396 = vset.pattern.permute.xlu0 0
      %1397 = vperm.xlu0 %1396, %v1393
      %v1398 = vpop.permute.xlu0 %1397
      %1401 = vset.pattern.permute.xlu0 0
      %1402 = vperm.xlu0 %1401, %v1394
      %v1403 = vpop.permute.xlu0 %1402
      %vm1405 = vcmask 654336
      %v1407 = vsel %vm1405, %v1380, 0
      %v1410 = vsel %vm1405, %v1381, 0
      %1412 = vmatprep.subr.mxu0 0.0
      %1413 = vmatpush1.msra.mxu0 0.0
      %1414 = vmatprep.subr.mxu0 0.0
      %1415 = vmatpush1.msra.mxu0 0.0
      %1416 = vmatprep.subr.mxu0 0.0
      %1417 = vmatpush1.msra.mxu0 0.0
      %1418 = vmatprep.subr.mxu0 0.0
      %1419 = vmatpush1.msra.mxu0 0.0
      %1420 = vmatprep.subr.mxu0 0.0
      %1421 = vmatpush1.msra.mxu0 0.0
      %1422 = vmatprep.subr.mxu0 0.0
      %1423 = vmatpush1.msra.mxu0 0.0
      %1424 = vmatprep.subr.mxu0 0.0
      %1425 = vmatpush1.msra.mxu0 %v1391
      %1426 = vmatprep.subr.mxu0 0.0
      %1427 = vmatpush1.msra.mxu0 %v1390
      %1428 = vmatprep.subr.mxu0 0.0
      %1429 = vmatpush1.msra.mxu0 %v1389
      %1430 = vmatprep.subr.mxu0 0.0
      %1431 = vmatpush1.msra.mxu0 %v1388
      %1432 = vmatprep.subr.mxu0 0.0
      %1433 = vmatpush1.msra.mxu0 %v1387
      %1434 = vmatprep.subr.mxu0 0.0
      %1435 = vmatpush1.msra.mxu0 %v1386
      %1436 = vmatprep.subr.mxu0 0.0
      %1437 = vmatpush1.msra.mxu0 %v1385
      %1438 = vmatprep.subr.mxu0 0.0
      %1439 = vmatpush1.msra.mxu0 %v1384
      %1440 = vmatprep.subr.mxu0 0.0
      %1441 = vmatpush1.msra.mxu0 %v1383
      %1442 = vmatprep.subr.mxu0 0.0
      %1443 = vmatpush1.msra.mxu0 %v1382
      %1444 = vmatprep.subr.mxu0 0.0
      %1445 = vmatpush2.msra.mxu0 0.0
      %1446 = vmatprep.subr.mxu0 0.0
      %1447 = vmatpush2.msra.mxu0 0.0
      %1448 = vmatprep.subr.mxu0 0.0
      %1449 = vmatpush2.msra.mxu0 0.0
      %1450 = vmatprep.subr.mxu0 0.0
      %1451 = vmatpush2.msra.mxu0 0.0
      %1452 = vmatprep.subr.mxu0 0.0
      %1453 = vmatpush2.msra.mxu0 0.0
      %1454 = vmatprep.subr.mxu0 0.0
      %1455 = vmatpush2.msra.mxu0 0.0
      %1456 = vmatprep.subr.mxu0 0.0
      %1457 = vmatpush2.msra.mxu0 0.0
      %1458 = vmatprep.subr.mxu0 0.0
      %1459 = vmatpush2.msra.mxu0 0.0
      %1460 = vmatprep.subr.mxu0 0.0
      %1461 = vmatpush2.msra.mxu0 0.0
      %1462 = vmatprep.subr.mxu0 0.0
      %1463 = vmatpush2.msra.mxu0 0.0
      %1464 = vmatprep.subr.mxu0 0.0
      %1465 = vmatpush2.msra.mxu0 0.0
      %1466 = vmatprep.subr.mxu0 0.0
      %1467 = vmatpush2.msra.mxu0 0.0
      %1468 = vmatprep.subr.mxu0 0.0
      %1469 = vmatpush2.msra.mxu0 0.0
      %1470 = vmatprep.subr.mxu0 0.0
      %1471 = vmatpush2.msra.mxu0 0.0
      %1472 = vmatprep.subr.mxu0 0.0
      %1473 = vmatpush2.msra.mxu0 0.0
      %1474 = vmatprep.subr.mxu0 0.0
      %1475 = vmatpush2.msra.mxu0 0.0
      %1476 = vmatprep.mubr.f32.mxu0 0.0
      %1477 = vmatmul.mubr.f32.gmra.mxu0 %v1407
      %v1478 = vpop.f32.mrf.mxu0
      %v1479 = vadd.f32 %v1398, %v1478
      %v1480 = vpop.f32.mrf.mxu0
      %1481 = vmatprep.mubr.f32.mxu0 0.0
      %1482 = vmatmul.mubr.f32.gmra.mxu0 %v1410
      %v1483 = vpop.f32.mrf.mxu0
      %v1484 = vadd.f32 %v1403, %v1483
      %v1485 = vpop.f32.mrf.mxu0
      %1486 = vdwg.mxu0
      %v1487 = vmax.f32 %v1479, 0.0
      %v1488 = vmax.f32 %v1484, 0.0
      %1491 = vrot.lane.b32.xlu0 %v1487, 2
      %v1492 = vpop.permute.xlu0 %1491
      %1493 = vrot.lane.b32.xlu0 %v1488, 2
      %v1494 = vpop.permute.xlu0 %1493
      %1497 = vst.msk [vmem:[#allocation2] sm:$0xff] %vm1318, %v1492
      %1498 = vst.msk [vmem:[#allocation2 + $0x8] sm:$0xff] %vm1318, %v1494
      %1499 = vst.msk [vmem:[#allocation2] sm:$0xff] %vm514, 0.0
      %1500 = vst.msk [vmem:[#allocation2 + $0x8] sm:$0xff] %vm514, 0.0
      %1501 = vst.msk [vmem:[#allocation2] sm:$0xff] %vm1323, 0.0
      %1502 = vst.msk [vmem:[#allocation2 + $0x8] sm:$0xff] %vm1323, 0.0
      %v1503 = vld [vmem:[#allocation2] sm:$0xff]
      %v1504 = vld [vmem:[#allocation2 + $0x8] sm:$0xff]
      %1505 = vst.msk [vmem:[#allocation3] sm:$0xff] %vm1328, %v1503
      %1506 = vst.msk [vmem:[#allocation3 + $0x8] sm:$0xff] %vm1328, %v1504
      %v1507 = vld [vmem:[#allocation2] sm:$0xff]
      %v1508 = vld [vmem:[#allocation2 + $0x8] sm:$0xff]
      %1511 = vrot.lane.b32.xlu0 %v1507, 127
      %v1512 = vpop.permute.xlu0 %1511
      %1513 = vrot.lane.b32.xlu0 %v1508, 127
      %v1514 = vpop.permute.xlu0 %1513
      %1517 = vst.msk [vmem:[#allocation3 + $0x10] sm:$0xff] %vm1328, %v1512
      %1518 = vst.msk [vmem:[#allocation3 + $0x18] sm:$0xff] %vm1328, %v1514
      %v1519 = vld [vmem:[#allocation2] sm:$0xff]
      %v1520 = vld [vmem:[#allocation2 + $0x8] sm:$0xff]
      %1523 = vrot.lane.b32.xlu0 %v1519, 126
      %v1524 = vpop.permute.xlu0 %1523
      %1525 = vrot.lane.b32.xlu0 %v1520, 126
      %v1526 = vpop.permute.xlu0 %1525
      %1529 = vst.msk [vmem:[#allocation3 + $0x20] sm:$0xff] %vm1328, %v1524
      %1530 = vst.msk [vmem:[#allocation3 + $0x28] sm:$0xff] %vm1328, %v1526
      %v1531 = vld [vmem:[#allocation2] sm:$0xff]
      %v1532 = vld [vmem:[#allocation2 + $0x8] sm:$0xff]
      %1535 = vrot.lane.b32.xlu0 %v1531, 125
      %v1536 = vpop.permute.xlu0 %1535
      %1537 = vrot.lane.b32.xlu0 %v1532, 125
      %v1538 = vpop.permute.xlu0 %1537
      %1541 = vst.msk [vmem:[#allocation3 + $0x30] sm:$0xff] %vm1328, %v1536
      %1542 = vst.msk [vmem:[#allocation3 + $0x38] sm:$0xff] %vm1328, %v1538
      %v1543 = vld [vmem:[#allocation2] sm:$0xff]
      %v1544 = vld [vmem:[#allocation2 + $0x8] sm:$0xff]
      %1547 = vrot.lane.b32.xlu0 %v1543, 124
      %v1548 = vpop.permute.xlu0 %1547
      %1549 = vrot.lane.b32.xlu0 %v1544, 124
      %v1550 = vpop.permute.xlu0 %1549
      %1553 = vst.msk [vmem:[#allocation3 + $0x40] sm:$0xff] %vm1328, %v1548
      %1554 = vst.msk [vmem:[#allocation3 + $0x48] sm:$0xff] %vm1328, %v1550
      %s1555 = scalar_lea.vmem %s1, 240
      %v1556 = vld [vmem:[%s1555] sm:$0xff]
      %v1557 = vld [vmem:[%s1555 + $0x10] sm:$0xff]
      %v1558 = vld [vmem:[#allocation3] sm:$0xff]
      %v1559 = vld [vmem:[#allocation3 + $0x8] sm:$0xff]
      %v1560 = vld [vmem:[#allocation3 + $0x10] sm:$0xff]
      %v1561 = vld [vmem:[#allocation3 + $0x18] sm:$0xff]
      %v1562 = vld [vmem:[#allocation3 + $0x20] sm:$0xff]
      %v1563 = vld [vmem:[#allocation3 + $0x28] sm:$0xff]
      %v1564 = vld [vmem:[#allocation3 + $0x30] sm:$0xff]
      %v1565 = vld [vmem:[#allocation3 + $0x38] sm:$0xff]
      %v1566 = vld [vmem:[#allocation3 + $0x40] sm:$0xff]
      %v1567 = vld [vmem:[#allocation3 + $0x48] sm:$0xff]
      %s1568 = scalar_lea.vmem %s2, 120
      %v1569 = vld [vmem:[%s1568] sm:$0xff]
      %v1570 = vld [vmem:[%s1568 + $0x8] sm:$0xff]
      %1572 = vset.pattern.permute.xlu0 0
      %1573 = vperm.xlu0 %1572, %v1569
      %v1574 = vpop.permute.xlu0 %1573
      %1577 = vset.pattern.permute.xlu0 0
      %1578 = vperm.xlu0 %1577, %v1570
      %v1579 = vpop.permute.xlu0 %1578
      %v1582 = vsel %vm1405, %v1556, 0
      %v1585 = vsel %vm1405, %v1557, 0
      %1587 = vmatprep.subr.mxu0 0.0
      %1588 = vmatpush1.msra.mxu0 0.0
      %1589 = vmatprep.subr.mxu0 0.0
      %1590 = vmatpush1.msra.mxu0 0.0
      %1591 = vmatprep.subr.mxu0 0.0
      %1592 = vmatpush1.msra.mxu0 0.0
      %1593 = vmatprep.subr.mxu0 0.0
      %1594 = vmatpush1.msra.mxu0 0.0
      %1595 = vmatprep.subr.mxu0 0.0
      %1596 = vmatpush1.msra.mxu0 0.0
      %1597 = vmatprep.subr.mxu0 0.0
      %1598 = vmatpush1.msra.mxu0 0.0
      %1599 = vmatprep.subr.mxu0 0.0
      %1600 = vmatpush1.msra.mxu0 %v1567
      %1601 = vmatprep.subr.mxu0 0.0
      %1602 = vmatpush1.msra.mxu0 %v1566
      %1603 = vmatprep.subr.mxu0 0.0
      %1604 = vmatpush1.msra.mxu0 %v1565
      %1605 = vmatprep.subr.mxu0 0.0
      %1606 = vmatpush1.msra.mxu0 %v1564
      %1607 = vmatprep.subr.mxu0 0.0
      %1608 = vmatpush1.msra.mxu0 %v1563
      %1609 = vmatprep.subr.mxu0 0.0
      %1610 = vmatpush1.msra.mxu0 %v1562
      %1611 = vmatprep.subr.mxu0 0.0
      %1612 = vmatpush1.msra.mxu0 %v1561
      %1613 = vmatprep.subr.mxu0 0.0
      %1614 = vmatpush1.msra.mxu0 %v1560
      %1615 = vmatprep.subr.mxu0 0.0
      %1616 = vmatpush1.msra.mxu0 %v1559
      %1617 = vmatprep.subr.mxu0 0.0
      %1618 = vmatpush1.msra.mxu0 %v1558
      %1619 = vmatprep.subr.mxu0 0.0
      %1620 = vmatpush2.msra.mxu0 0.0
      %1621 = vmatprep.subr.mxu0 0.0
      %1622 = vmatpush2.msra.mxu0 0.0
      %1623 = vmatprep.subr.mxu0 0.0
      %1624 = vmatpush2.msra.mxu0 0.0
      %1625 = vmatprep.subr.mxu0 0.0
      %1626 = vmatpush2.msra.mxu0 0.0
      %1627 = vmatprep.subr.mxu0 0.0
      %1628 = vmatpush2.msra.mxu0 0.0
      %1629 = vmatprep.subr.mxu0 0.0
      %1630 = vmatpush2.msra.mxu0 0.0
      %1631 = vmatprep.subr.mxu0 0.0
      %1632 = vmatpush2.msra.mxu0 0.0
      %1633 = vmatprep.subr.mxu0 0.0
      %1634 = vmatpush2.msra.mxu0 0.0
      %1635 = vmatprep.subr.mxu0 0.0
      %1636 = vmatpush2.msra.mxu0 0.0
      %1637 = vmatprep.subr.mxu0 0.0
      %1638 = vmatpush2.msra.mxu0 0.0
      %1639 = vmatprep.subr.mxu0 0.0
      %1640 = vmatpush2.msra.mxu0 0.0
      %1641 = vmatprep.subr.mxu0 0.0
      %1642 = vmatpush2.msra.mxu0 0.0
      %1643 = vmatprep.subr.mxu0 0.0
      %1644 = vmatpush2.msra.mxu0 0.0
      %1645 = vmatprep.subr.mxu0 0.0
      %1646 = vmatpush2.msra.mxu0 0.0
      %1647 = vmatprep.subr.mxu0 0.0
      %1648 = vmatpush2.msra.mxu0 0.0
      %1649 = vmatprep.subr.mxu0 0.0
      %1650 = vmatpush2.msra.mxu0 0.0
      %1651 = vmatprep.mubr.f32.mxu0 0.0
      %1652 = vmatmul.mubr.f32.gmra.mxu0 %v1582
      %v1653 = vpop.f32.mrf.mxu0
      %v1654 = vadd.f32 %v1574, %v1653
      %v1655 = vpop.f32.mrf.mxu0
      %1656 = vmatprep.mubr.f32.mxu0 0.0
      %1657 = vmatmul.mubr.f32.gmra.mxu0 %v1585
      %v1658 = vpop.f32.mrf.mxu0
      %v1659 = vadd.f32 %v1579, %v1658
      %v1660 = vpop.f32.mrf.mxu0
      %1661 = vdwg.mxu0
      %v1662 = vmax.f32 %v1654, 0.0
      %v1663 = vmax.f32 %v1659, 0.0
      %v1664 = vsel %vm1328, %v1662, 0.0
      %1665 = vadd.xlane.f32.xlu0 %v1664
      %v1666 = vpop.xlane.xlu0 %1665
      %v1667 = vsel %vm1328, %v1663, 0.0
      %1668 = vadd.xlane.f32.xlu0 %v1667
      %v1669 = vpop.xlane.xlu0 %1668
      %v1670 = vrcp.pop 5.0
      %v1671 = vmul.f32 %v1666, %v1670
      %v1672 = vmul.f32 %v1669, %v1670
      %s1673 = scalar_lea.vmem %s3, 4
      %v1674 = vld [vmem:[%s1673] sm:$0x7]
      %s1675 = scalar_lea.vmem %s4, 4
      %v1676 = vld [vmem:[%s1675] sm:$0x7]
      %vm1677 = vcmask 130048
      %v1679 = vsel %vm1677, %v1674, 0
      %1681 = vmatprep.subr.mxu0 0.0
      %1682 = vmatpush1.msra.mxu0 0.0
      %1683 = vmatprep.subr.mxu0 0.0
      %1684 = vmatpush1.msra.mxu0 0.0
      %1685 = vmatprep.subr.mxu0 0.0
      %1686 = vmatpush1.msra.mxu0 0.0
      %1687 = vmatprep.subr.mxu0 0.0
      %1688 = vmatpush1.msra.mxu0 0.0
      %1689 = vmatprep.subr.mxu0 0.0
      %1690 = vmatpush1.msra.mxu0 0.0
      %1691 = vmatprep.subr.mxu0 0.0
      %1692 = vmatpush1.msra.mxu0 0.0
      %1693 = vmatprep.subr.mxu0 0.0
      %1694 = vmatpush1.msra.mxu0 0.0
      %1695 = vmatprep.subr.mxu0 0.0
      %1696 = vmatpush1.msra.mxu0 0.0
      %1697 = vmatprep.subr.mxu0 0.0
      %1698 = vmatpush1.msra.mxu0 0.0
      %1699 = vmatprep.subr.mxu0 0.0
      %1700 = vmatpush1.msra.mxu0 0.0
      %1701 = vmatprep.subr.mxu0 0.0
      %1702 = vmatpush1.msra.mxu0 0.0
      %1703 = vmatprep.subr.mxu0 0.0
      %1704 = vmatpush1.msra.mxu0 0.0
      %1705 = vmatprep.subr.mxu0 0.0
      %1706 = vmatpush1.msra.mxu0 0.0
      %1707 = vmatprep.subr.mxu0 0.0
      %1708 = vmatpush1.msra.mxu0 0.0
      %1709 = vmatprep.subr.mxu0 0.0
      %1710 = vmatpush1.msra.mxu0 %v1672
      %1711 = vmatprep.subr.mxu0 0.0
      %1712 = vmatpush1.msra.mxu0 %v1671
      %1713 = vmatprep.subr.mxu0 0.0
      %1714 = vmatpush2.msra.mxu0 0.0
      %1715 = vmatprep.subr.mxu0 0.0
      %1716 = vmatpush2.msra.mxu0 0.0
      %1717 = vmatprep.subr.mxu0 0.0
      %1718 = vmatpush2.msra.mxu0 0.0
      %1719 = vmatprep.subr.mxu0 0.0
      %1720 = vmatpush2.msra.mxu0 0.0
      %1721 = vmatprep.subr.mxu0 0.0
      %1722 = vmatpush2.msra.mxu0 0.0
      %1723 = vmatprep.subr.mxu0 0.0
      %1724 = vmatpush2.msra.mxu0 0.0
      %1725 = vmatprep.subr.mxu0 0.0
      %1726 = vmatpush2.msra.mxu0 0.0
      %1727 = vmatprep.subr.mxu0 0.0
      %1728 = vmatpush2.msra.mxu0 0.0
      %1729 = vmatprep.subr.mxu0 0.0
      %1730 = vmatpush2.msra.mxu0 0.0
      %1731 = vmatprep.subr.mxu0 0.0
      %1732 = vmatpush2.msra.mxu0 0.0
      %1733 = vmatprep.subr.mxu0 0.0
      %1734 = vmatpush2.msra.mxu0 0.0
      %1735 = vmatprep.subr.mxu0 0.0
      %1736 = vmatpush2.msra.mxu0 0.0
      %1737 = vmatprep.subr.mxu0 0.0
      %1738 = vmatpush2.msra.mxu0 0.0
      %1739 = vmatprep.subr.mxu0 0.0
      %1740 = vmatpush2.msra.mxu0 0.0
      %1741 = vmatprep.subr.mxu0 0.0
      %1742 = vmatpush2.msra.mxu0 0.0
      %1743 = vmatprep.subr.mxu0 0.0
      %1744 = vmatpush2.msra.mxu0 0.0
      %1745 = vmatprep.mubr.f32.mxu0 0.0
      %1746 = vmatmul.mubr.f32.gmra.mxu0 %v1679
      %v1747 = vpop.f32.mrf.mxu0
      %v1748 = vadd.f32 %v1676, %v1747
      %v1749 = vpop.f32.mrf.mxu0
      %1750 = vdwg.mxu0
      %v1751 = vmax.f32 %v1748, 0.0
      %s1752 = scalar_lea.vmem %s5, 24
      %v1753 = vld [vmem:[%s1752] sm:$0xff]
      %v1754 = vld [vmem:[%s1752 + $0x8] sm:$0xff]
      %s1755 = scalar_lea.vmem %s6, 24
      %v1756 = vld [vmem:[%s1755] sm:$0xff]
      %v1757 = vld [vmem:[%s1755 + $0x8] sm:$0xff]
      %v1759 = vsel %vm514, %v1753, 0
      %v1762 = vsel %vm514, %v1754, 0
      %v1765 = vsel %vm593, %v1751, 0
      %1767 = vmatprep.subr.mxu0 0.0
      %1768 = vmatpush1.msra.mxu0 0.0
      %1769 = vmatprep.subr.mxu0 0.0
      %1770 = vmatpush1.msra.mxu0 0.0
      %1771 = vmatprep.subr.mxu0 0.0
      %1772 = vmatpush1.msra.mxu0 0.0
      %1773 = vmatprep.subr.mxu0 0.0
      %1774 = vmatpush1.msra.mxu0 0.0
      %1775 = vmatprep.subr.mxu0 0.0
      %1776 = vmatpush1.msra.mxu0 0.0
      %1777 = vmatprep.subr.mxu0 0.0
      %1778 = vmatpush1.msra.mxu0 0.0
      %1779 = vmatprep.subr.mxu0 0.0
      %1780 = vmatpush1.msra.mxu0 0.0
      %1781 = vmatprep.subr.mxu0 0.0
      %1782 = vmatpush1.msra.mxu0 0.0
      %1783 = vmatprep.subr.mxu0 0.0
      %1784 = vmatpush1.msra.mxu0 0.0
      %1785 = vmatprep.subr.mxu0 0.0
      %1786 = vmatpush1.msra.mxu0 0.0
      %1787 = vmatprep.subr.mxu0 0.0
      %1788 = vmatpush1.msra.mxu0 0.0
      %1789 = vmatprep.subr.mxu0 0.0
      %1790 = vmatpush1.msra.mxu0 0.0
      %1791 = vmatprep.subr.mxu0 0.0
      %1792 = vmatpush1.msra.mxu0 0.0
      %1793 = vmatprep.subr.mxu0 0.0
      %1794 = vmatpush1.msra.mxu0 0.0
      %1795 = vmatprep.subr.mxu0 0.0
      %1796 = vmatpush1.msra.mxu0 0.0
      %1797 = vmatprep.subr.mxu0 0.0
      %1798 = vmatpush1.msra.mxu0 %v1765
      %1799 = vmatprep.subr.mxu0 0.0
      %1800 = vmatpush2.msra.mxu0 0.0
      %1801 = vmatprep.subr.mxu0 0.0
      %1802 = vmatpush2.msra.mxu0 0.0
      %1803 = vmatprep.subr.mxu0 0.0
      %1804 = vmatpush2.msra.mxu0 0.0
      %1805 = vmatprep.subr.mxu0 0.0
      %1806 = vmatpush2.msra.mxu0 0.0
      %1807 = vmatprep.subr.mxu0 0.0
      %1808 = vmatpush2.msra.mxu0 0.0
      %1809 = vmatprep.subr.mxu0 0.0
      %1810 = vmatpush2.msra.mxu0 0.0
      %1811 = vmatprep.subr.mxu0 0.0
      %1812 = vmatpush2.msra.mxu0 0.0
      %1813 = vmatprep.subr.mxu0 0.0
      %1814 = vmatpush2.msra.mxu0 0.0
      %1815 = vmatprep.subr.mxu0 0.0
      %1816 = vmatpush2.msra.mxu0 0.0
      %1817 = vmatprep.subr.mxu0 0.0
      %1818 = vmatpush2.msra.mxu0 0.0
      %1819 = vmatprep.subr.mxu0 0.0
      %1820 = vmatpush2.msra.mxu0 0.0
      %1821 = vmatprep.subr.mxu0 0.0
      %1822 = vmatpush2.msra.mxu0 0.0
      %1823 = vmatprep.subr.mxu0 0.0
      %1824 = vmatpush2.msra.mxu0 0.0
      %1825 = vmatprep.subr.mxu0 0.0
      %1826 = vmatpush2.msra.mxu0 0.0
      %1827 = vmatprep.subr.mxu0 0.0
      %1828 = vmatpush2.msra.mxu0 0.0
      %1829 = vmatprep.subr.mxu0 0.0
      %1830 = vmatpush2.msra.mxu0 0.0
      %1831 = vmatprep.mubr.f32.mxu0 0.0
      %1832 = vmatmul.mubr.f32.gmra.mxu0 %v1759
      %v1833 = vpop.f32.mrf.mxu0
      %v1834 = vadd.f32 %v1756, %v1833
      %v1835 = vpop.f32.mrf.mxu0
      %1836 = vmatprep.mubr.f32.mxu0 0.0
      %1837 = vmatmul.mubr.f32.gmra.mxu0 %v1762
      %v1838 = vpop.f32.mrf.mxu0
      %v1839 = vadd.f32 %v1757, %v1838
      %v1840 = vpop.f32.mrf.mxu0
      %1841 = vdwg.mxu0
      %v1842 = vxor.u32 %v1834, 2147483648
      %v1843 = vxor.u32 %v1839, 2147483648
      %v1844 = vmul.f32 %v1842, 1.442695
      %v1845 = vpow.pop %v1844
      %v1846 = vmul.f32 %v1843, 1.442695
      %v1847 = vpow.pop %v1846
      %v1848 = vadd.f32 %v1845, 1.0
      %v1849 = vadd.f32 %v1847, 1.0
      %v1850 = vrcp.pop %v1848
      %v1851 = vmul.f32 1.0, %v1850
      %v1852 = vrcp.pop %v1849
      %v1853 = vmul.f32 1.0, %v1852
      %1855 = vset.pattern.permute.xlu0 0
      %1856 = vperm.xlu0 %1855, %v1851
      %v1857 = vpop.permute.xlu0 %1856
      %1860 = vset.pattern.permute.xlu0 0
      %1861 = vperm.xlu0 %1860, %v1853
      %v1862 = vpop.permute.xlu0 %1861
      %v1864 = vadd.f32 %v1662, %v1857
      %v1865 = vadd.f32 %v1663, %v1862
      %v1866 = vadd.f32 %v1308, %v1864
      %v1867 = vadd.f32 %v1309, %v1865
      %v1868 = vld [vmem:[%s9] sm:$0x1f]
      %1871 = vrot.lane.b32.xlu0 %v1866, 2
      %v1872 = vpop.permute.xlu0 %1871
      %1873 = vrot.lane.b32.xlu0 %v1867, 2
      %v1874 = vpop.permute.xlu0 %1873
      %1877 = vst.msk [vmem:[#allocation2] sm:$0xff] %vm1318, %v1872
      %1878 = vst.msk [vmem:[#allocation2 + $0x8] sm:$0xff] %vm1318, %v1874
      %1881 = vrot.lane.b32.xlu0 %v496, 2
      %v1882 = vpop.permute.xlu0 %1881
      %1883 = vrot.lane.b32.xlu0 %v501, 2
      %v1884 = vpop.permute.xlu0 %1883
      %1887 = vst.msk [vmem:[#allocation2 + $0x10] sm:$0xff] %vm1318, %v1882
      %vm1888 = vcmask 50192
      %1889 = vst.msk [vmem:[#allocation2 + $0x18] sm:$0x3] %vm1888, %v1884
      %1890 = vst.msk [vmem:[#allocation2] sm:$0xff] %vm514, 0.0
      %1891 = vst.msk [vmem:[#allocation2 + $0x8] sm:$0xff] %vm514, 0.0
      %1892 = vst.msk [vmem:[#allocation2 + $0x10] sm:$0xff] %vm514, 0.0
      %1893 = vst.msk [vmem:[#allocation2 + $0x18] sm:$0x3] %vm516, 0.0
      %1894 = vst.msk [vmem:[#allocation2] sm:$0xff] %vm1323, 0.0
      %1895 = vst.msk [vmem:[#allocation2 + $0x8] sm:$0xff] %vm1323, 0.0
      %1896 = vst.msk [vmem:[#allocation2 + $0x10] sm:$0xff] %vm1323, 0.0
      %vm1897 = vcmask 66616
      %1898 = vst.msk [vmem:[#allocation2 + $0x18] sm:$0x3] %vm1897, 0.0
      %v1899 = vld [vmem:[#allocation2] sm:$0xff]
      %v1900 = vld [vmem:[#allocation2 + $0x8] sm:$0xff]
      %v1901 = vld [vmem:[#allocation2 + $0x10] sm:$0xff]
      %v1902 = vld [vmem:[#allocation2 + $0x18] sm:$0x3]
      %1903 = vst.msk [vmem:[#allocation3] sm:$0xff] %vm1328, %v1899
      %1904 = vst.msk [vmem:[#allocation3 + $0x8] sm:$0xff] %vm1328, %v1900
      %1905 = vst.msk [vmem:[#allocation3 + $0x10] sm:$0xff] %vm1328, %v1901
      %vm1906 = vcmask 33792
      %1907 = vst.msk [vmem:[#allocation3 + $0x18] sm:$0x3] %vm1906, %v1902
      %v1908 = vld [vmem:[#allocation2] sm:$0xff]
      %v1909 = vld [vmem:[#allocation2 + $0x8] sm:$0xff]
      %v1910 = vld [vmem:[#allocation2 + $0x10] sm:$0xff]
      %v1911 = vld [vmem:[#allocation2 + $0x18] sm:$0x3]
      %1916 = vrot.lane.b32.xlu0 %v1908, 127
      %v1917 = vpop.permute.xlu0 %1916
      %1918 = vrot.lane.b32.xlu0 %v1909, 127
      %v1919 = vpop.permute.xlu0 %1918
      %1920 = vrot.lane.b32.xlu0 %v1910, 127
      %v1921 = vpop.permute.xlu0 %1920
      %1922 = vrot.lane.b32.xlu0 %v1911, 127
      %v1923 = vpop.permute.xlu0 %1922
      %1928 = vst.msk [vmem:[#allocation3 + $0x1a] sm:$0xff] %vm1328, %v1917
      %1929 = vst.msk [vmem:[#allocation3 + $0x22] sm:$0xff] %vm1328, %v1919
      %1930 = vst.msk [vmem:[#allocation3 + $0x2a] sm:$0xff] %vm1328, %v1921
      %1931 = vst.msk [vmem:[#allocation3 + $0x32] sm:$0x3] %vm1906, %v1923
      %v1932 = vld [vmem:[#allocation2] sm:$0xff]
      %v1933 = vld [vmem:[#allocation2 + $0x8] sm:$0xff]
      %v1934 = vld [vmem:[#allocation2 + $0x10] sm:$0xff]
      %v1935 = vld [vmem:[#allocation2 + $0x18] sm:$0x3]
      %1940 = vrot.lane.b32.xlu0 %v1932, 126
      %v1941 = vpop.permute.xlu0 %1940
      %1942 = vrot.lane.b32.xlu0 %v1933, 126
      %v1943 = vpop.permute.xlu0 %1942
      %1944 = vrot.lane.b32.xlu0 %v1934, 126
      %v1945 = vpop.permute.xlu0 %1944
      %1946 = vrot.lane.b32.xlu0 %v1935, 126
      %v1947 = vpop.permute.xlu0 %1946
      %1952 = vst.msk [vmem:[#allocation3 + $0x34] sm:$0xff] %vm1328, %v1941
      %1953 = vst.msk [vmem:[#allocation3 + $0x3c] sm:$0xff] %vm1328, %v1943
      %1954 = vst.msk [vmem:[#allocation3 + $0x44] sm:$0xff] %vm1328, %v1945
      %1955 = vst.msk [vmem:[#allocation3 + $0x4c] sm:$0x3] %vm1906, %v1947
      %v1956 = vld [vmem:[#allocation2] sm:$0xff]
      %v1957 = vld [vmem:[#allocation2 + $0x8] sm:$0xff]
      %v1958 = vld [vmem:[#allocation2 + $0x10] sm:$0xff]
      %v1959 = vld [vmem:[#allocation2 + $0x18] sm:$0x3]
      %1964 = vrot.lane.b32.xlu0 %v1956, 125
      %v1965 = vpop.permute.xlu0 %1964
      %1966 = vrot.lane.b32.xlu0 %v1957, 125
      %v1967 = vpop.permute.xlu0 %1966
      %1968 = vrot.lane.b32.xlu0 %v1958, 125
      %v1969 = vpop.permute.xlu0 %1968
      %1970 = vrot.lane.b32.xlu0 %v1959, 125
      %v1971 = vpop.permute.xlu0 %1970
      %1976 = vst.msk [vmem:[#allocation3 + $0x4e] sm:$0xff] %vm1328, %v1965
      %1977 = vst.msk [vmem:[#allocation3 + $0x56] sm:$0xff] %vm1328, %v1967
      %1978 = vst.msk [vmem:[#allocation3 + $0x5e] sm:$0xff] %vm1328, %v1969
      %1979 = vst.msk [vmem:[#allocation3 + $0x66] sm:$0x3] %vm1906, %v1971
      %v1980 = vld [vmem:[#allocation2] sm:$0xff]
      %v1981 = vld [vmem:[#allocation2 + $0x8] sm:$0xff]
      %v1982 = vld [vmem:[#allocation2 + $0x10] sm:$0xff]
      %v1983 = vld [vmem:[#allocation2 + $0x18] sm:$0x3]
      %1988 = vrot.lane.b32.xlu0 %v1980, 124
      %v1989 = vpop.permute.xlu0 %1988
      %1990 = vrot.lane.b32.xlu0 %v1981, 124
      %v1991 = vpop.permute.xlu0 %1990
      %1992 = vrot.lane.b32.xlu0 %v1982, 124
      %v1993 = vpop.permute.xlu0 %1992
      %1994 = vrot.lane.b32.xlu0 %v1983, 124
      %v1995 = vpop.permute.xlu0 %1994
      %2000 = vst.msk [vmem:[#allocation3 + $0x68] sm:$0xff] %vm1328, %v1989
      %2001 = vst.msk [vmem:[#allocation3 + $0x70] sm:$0xff] %vm1328, %v1991
      %2002 = vst.msk [vmem:[#allocation3 + $0x78] sm:$0xff] %vm1328, %v1993
      %2003 = vst.msk [vmem:[#allocation3 + $0x80] sm:$0x3] %vm1906, %v1995
      %s2004 = scalar_lea.vmem %s1, 288
      %v2005 = vld [vmem:[%s2004] sm:$0xff]
      %v2006 = vld [vmem:[%s2004 + $0x8] sm:$0xff]
      %v2007 = vld [vmem:[%s2004 + $0x10] sm:$0xff]
      %v2008 = vld [vmem:[%s2004 + $0x18] sm:$0xff]
      %v2009 = vld [vmem:[%s2004 + $0x20] sm:$0xff]
      %v2010 = vld [vmem:[%s2004 + $0x28] sm:$0xff]
      %v2011 = vld [vmem:[#allocation3] sm:$0xff]
      %v2012 = vld [vmem:[#allocation3 + $0x8] sm:$0xff]
      %v2013 = vld [vmem:[#allocation3 + $0x10] sm:$0xff]
      %v2014 = vld [vmem:[#allocation3 + $0x18] sm:$0xff]
      %v2015 = vld [vmem:[#allocation3 + $0x20] sm:$0xff]
      %v2016 = vld [vmem:[#allocation3 + $0x28] sm:$0xff]
      %v2017 = vld [vmem:[#allocation3 + $0x30] sm:$0xff]
      %v2018 = vld [vmem:[#allocation3 + $0x38] sm:$0xff]
      %v2019 = vld [vmem:[#allocation3 + $0x40] sm:$0xff]
      %v2020 = vld [vmem:[#allocation3 + $0x48] sm:$0xff]
      %v2021 = vld [vmem:[#allocation3 + $0x50] sm:$0xff]
      %v2022 = vld [vmem:[#allocation3 + $0x58] sm:$0xff]
      %v2023 = vld [vmem:[#allocation3 + $0x60] sm:$0xff]
      %v2024 = vld [vmem:[#allocation3 + $0x68] sm:$0xff]
      %v2025 = vld [vmem:[#allocation3 + $0x70] sm:$0xff]
      %v2026 = vld [vmem:[#allocation3 + $0x78] sm:$0xff]
      %v2027 = vld [vmem:[#allocation3 + $0x80] sm:$0x3]
      %v2029 = vsel %vm514, %v2006, 0
      %v2032 = vsel %vm514, %v2008, 0
      %v2035 = vsel %vm514, %v2010, 0
      %v2038 = vsel %vm593, %v2027, 0
      %2040 = vmatprep.subr.mxu0 0.0
      %2041 = vmatpush1.msra.mxu0 %v2026
      %2042 = vmatprep.subr.mxu0 0.0
      %2043 = vmatpush1.msra.mxu0 %v2025
      %2044 = vmatprep.subr.mxu0 0.0
      %2045 = vmatpush1.msra.mxu0 %v2024
      %2046 = vmatprep.subr.mxu0 0.0
      %2047 = vmatpush1.msra.mxu0 %v2023
      %2048 = vmatprep.subr.mxu0 0.0
      %2049 = vmatpush1.msra.mxu0 %v2022
      %2050 = vmatprep.subr.mxu0 0.0
      %2051 = vmatpush1.msra.mxu0 %v2021
      %2052 = vmatprep.subr.mxu0 0.0
      %2053 = vmatpush1.msra.mxu0 %v2020
      %2054 = vmatprep.subr.mxu0 0.0
      %2055 = vmatpush1.msra.mxu0 %v2019
      %2056 = vmatprep.subr.mxu0 0.0
      %2057 = vmatpush1.msra.mxu0 %v2018
      %2058 = vmatprep.subr.mxu0 0.0
      %2059 = vmatpush1.msra.mxu0 %v2017
      %2060 = vmatprep.subr.mxu0 0.0
      %2061 = vmatpush1.msra.mxu0 %v2016
      %2062 = vmatprep.subr.mxu0 0.0
      %2063 = vmatpush1.msra.mxu0 %v2015
      %2064 = vmatprep.subr.mxu0 0.0
      %2065 = vmatpush1.msra.mxu0 %v2014
      %2066 = vmatprep.subr.mxu0 0.0
      %2067 = vmatpush1.msra.mxu0 %v2013
      %2068 = vmatprep.subr.mxu0 0.0
      %2069 = vmatpush1.msra.mxu0 %v2012
      %2070 = vmatprep.subr.mxu0 0.0
      %2071 = vmatpush1.msra.mxu0 %v2011
      %2072 = vmatprep.subr.mxu0 0.0
      %2073 = vmatpush2.msra.mxu0 0.0
      %2074 = vmatprep.subr.mxu0 0.0
      %2075 = vmatpush2.msra.mxu0 0.0
      %2076 = vmatprep.subr.mxu0 0.0
      %2077 = vmatpush2.msra.mxu0 0.0
      %2078 = vmatprep.subr.mxu0 0.0
      %2079 = vmatpush2.msra.mxu0 0.0
      %2080 = vmatprep.subr.mxu0 0.0
      %2081 = vmatpush2.msra.mxu0 0.0
      %2082 = vmatprep.subr.mxu0 0.0
      %2083 = vmatpush2.msra.mxu0 0.0
      %2084 = vmatprep.subr.mxu0 0.0
      %2085 = vmatpush2.msra.mxu0 0.0
      %2086 = vmatprep.subr.mxu0 0.0
      %2087 = vmatpush2.msra.mxu0 0.0
      %2088 = vmatprep.subr.mxu0 0.0
      %2089 = vmatpush2.msra.mxu0 0.0
      %2090 = vmatprep.subr.mxu0 0.0
      %2091 = vmatpush2.msra.mxu0 0.0
      %2092 = vmatprep.subr.mxu0 0.0
      %2093 = vmatpush2.msra.mxu0 0.0
      %2094 = vmatprep.subr.mxu0 0.0
      %2095 = vmatpush2.msra.mxu0 0.0
      %2096 = vmatprep.subr.mxu0 0.0
      %2097 = vmatpush2.msra.mxu0 0.0
      %2098 = vmatprep.subr.mxu0 0.0
      %2099 = vmatpush2.msra.mxu0 0.0
      %2100 = vmatprep.subr.mxu0 0.0
      %2101 = vmatpush2.msra.mxu0 0.0
      %2102 = vmatprep.subr.mxu0 0.0
      %2103 = vmatpush2.msra.mxu0 %v2038
      %2104 = vmatprep.mubr.f32.mxu0 %v2029
      %2105 = vmatmul.mubr.f32.gmra.mxu0 %v2005
      %v2106 = vpop.f32.mrf.mxu0
      %v2107 = vadd.f32 0.0, %v2106
      %v2108 = vpop.f32.mrf.mxu0
      %2109 = vmatprep.mubr.f32.mxu0 %v2032
      %2110 = vmatmul.mubr.f32.gmra.mxu0 %v2007
      %v2111 = vpop.f32.mrf.mxu0
      %v2112 = vadd.f32 0.0, %v2111
      %v2113 = vpop.f32.mrf.mxu0
      %2114 = vmatprep.mubr.f32.mxu0 %v2035
      %2115 = vmatmul.mubr.f32.gmra.mxu0 %v2009
      %v2116 = vpop.f32.mrf.mxu0
      %v2117 = vadd.f32 0.0, %v2116
      %v2118 = vpop.f32.mrf.mxu0
      %2119 = vdwg.mxu0
      %s2120 = scalar_lea.vmem %s2, 144
      %v2121 = vld [vmem:[%s2120] sm:$0xff]
      %v2122 = vld [vmem:[%s2120 + $0x8] sm:$0xff]
      %v2123 = vld [vmem:[%s2120 + $0x10] sm:$0xff]
      %v2125 = vsel %vm1328, %v2107, 0
      %v2128 = vsel %vm1328, %v2112, 0
      %v2131 = vsel %vm1328, %v2117, 0
      %vm2133 = vcmask 1044480
      %v2135 = vsel %vm2133, %v1868, 0
      %2137 = vmatprep.subr.mxu0 0.0
      %2138 = vmatpush1.msra.mxu0 0.0
      %2139 = vmatprep.subr.mxu0 0.0
      %2140 = vmatpush1.msra.mxu0 0.0
      %2141 = vmatprep.subr.mxu0 0.0
      %2142 = vmatpush1.msra.mxu0 0.0
      %2143 = vmatprep.subr.mxu0 0.0
      %2144 = vmatpush1.msra.mxu0 0.0
      %2145 = vmatprep.subr.mxu0 0.0
      %2146 = vmatpush1.msra.mxu0 0.0
      %2147 = vmatprep.subr.mxu0 0.0
      %2148 = vmatpush1.msra.mxu0 0.0
      %2149 = vmatprep.subr.mxu0 0.0
      %2150 = vmatpush1.msra.mxu0 0.0
      %2151 = vmatprep.subr.mxu0 0.0
      %2152 = vmatpush1.msra.mxu0 0.0
      %2153 = vmatprep.subr.mxu0 0.0
      %2154 = vmatpush1.msra.mxu0 0.0
      %2155 = vmatprep.subr.mxu0 0.0
      %2156 = vmatpush1.msra.mxu0 0.0
      %2157 = vmatprep.subr.mxu0 0.0
      %2158 = vmatpush1.msra.mxu0 0.0
      %2159 = vmatprep.subr.mxu0 0.0
      %2160 = vmatpush1.msra.mxu0 0.0
      %2161 = vmatprep.subr.mxu0 0.0
      %2162 = vmatpush1.msra.mxu0 0.0
      %2163 = vmatprep.subr.mxu0 0.0
      %2164 = vmatpush1.msra.mxu0 0.0
      %2165 = vmatprep.subr.mxu0 0.0
      %2166 = vmatpush1.msra.mxu0 0.0
      %2167 = vmatprep.subr.mxu0 0.0
      %2168 = vmatpush1.msra.mxu0 %v2135
      %2169 = vmatprep.subr.mxu0 0.0
      %2170 = vmatpush2.msra.mxu0 0.0
      %2171 = vmatprep.subr.mxu0 0.0
      %2172 = vmatpush2.msra.mxu0 0.0
      %2173 = vmatprep.subr.mxu0 0.0
      %2174 = vmatpush2.msra.mxu0 0.0
      %2175 = vmatprep.subr.mxu0 0.0
      %2176 = vmatpush2.msra.mxu0 0.0
      %2177 = vmatprep.subr.mxu0 0.0
      %2178 = vmatpush2.msra.mxu0 0.0
      %2179 = vmatprep.subr.mxu0 0.0
      %2180 = vmatpush2.msra.mxu0 0.0
      %2181 = vmatprep.subr.mxu0 0.0
      %2182 = vmatpush2.msra.mxu0 0.0
      %2183 = vmatprep.subr.mxu0 0.0
      %2184 = vmatpush2.msra.mxu0 0.0
      %2185 = vmatprep.subr.mxu0 0.0
      %2186 = vmatpush2.msra.mxu0 0.0
      %2187 = vmatprep.subr.mxu0 0.0
      %2188 = vmatpush2.msra.mxu0 0.0
      %2189 = vmatprep.subr.mxu0 0.0
      %2190 = vmatpush2.msra.mxu0 0.0
      %2191 = vmatprep.subr.mxu0 0.0
      %2192 = vmatpush2.msra.mxu0 0.0
      %2193 = vmatprep.subr.mxu0 0.0
      %2194 = vmatpush2.msra.mxu0 0.0
      %2195 = vmatprep.subr.mxu0 0.0
      %2196 = vmatpush2.msra.mxu0 0.0
      %2197 = vmatprep.subr.mxu0 0.0
      %2198 = vmatpush2.msra.mxu0 0.0
      %2199 = vmatprep.subr.mxu0 0.0
      %2200 = vmatpush2.msra.mxu0 0.0
      %2201 = vmatprep.mubr.f32.mxu0 0.0
      %2202 = vmatmul.mubr.f32.gmra.mxu0 %v2125
      %v2203 = vpop.f32.mrf.mxu0
      %v2204 = vadd.f32 %v2121, %v2203
      %v2205 = vpop.f32.mrf.mxu0
      %2206 = vmatprep.mubr.f32.mxu0 0.0
      %2207 = vmatmul.mubr.f32.gmra.mxu0 %v2128
      %v2208 = vpop.f32.mrf.mxu0
      %v2209 = vadd.f32 %v2122, %v2208
      %v2210 = vpop.f32.mrf.mxu0
      %2211 = vmatprep.mubr.f32.mxu0 0.0
      %2212 = vmatmul.mubr.f32.gmra.mxu0 %v2131
      %v2213 = vpop.f32.mrf.mxu0
      %v2214 = vadd.f32 %v2123, %v2213
      %v2215 = vpop.f32.mrf.mxu0
      %2216 = vdwg.mxu0
      %v2217 = vmax.f32 %v2204, 0.0
      %v2218 = vmax.f32 %v2209, 0.0
      %v2219 = vmax.f32 %v2214, 0.0
      %2223 = vrot.lane.b32.xlu0 %v2217, 2
      %v2224 = vpop.permute.xlu0 %2223
      %2225 = vrot.lane.b32.xlu0 %v2218, 2
      %v2226 = vpop.permute.xlu0 %2225
      %2227 = vrot.lane.b32.xlu0 %v2219, 2
      %v2228 = vpop.permute.xlu0 %2227
      %vm2232 = vcmask 23568
      %2233 = vst.msk [vmem:[#allocation2] sm:$0xff] %vm2232, %v2224
      %2234 = vst.msk [vmem:[#allocation2 + $0x8] sm:$0xff] %vm2232, %v2226
      %2235 = vst.msk [vmem:[#allocation2 + $0x10] sm:$0xff] %vm2232, %v2228
      %2236 = vst.msk [vmem:[#allocation2] sm:$0xff] %vm514, 0.0
      %2237 = vst.msk [vmem:[#allocation2 + $0x8] sm:$0xff] %vm514, 0.0
      %2238 = vst.msk [vmem:[#allocation2 + $0x10] sm:$0xff] %vm514, 0.0
      %vm2239 = vcmask 39960
      %2240 = vst.msk [vmem:[#allocation2] sm:$0xff] %vm2239, 0.0
      %2241 = vst.msk [vmem:[#allocation2 + $0x8] sm:$0xff] %vm2239, 0.0
      %2242 = vst.msk [vmem:[#allocation2 + $0x10] sm:$0xff] %vm2239, 0.0
      %v2243 = vld [vmem:[#allocation2] sm:$0xff]
      %v2244 = vld [vmem:[#allocation2 + $0x8] sm:$0xff]
      %v2245 = vld [vmem:[#allocation2 + $0x10] sm:$0xff]
      %2246 = vst.msk [vmem:[#allocation3] sm:$0xff] %vm995, %v2243
      %2247 = vst.msk [vmem:[#allocation3 + $0x8] sm:$0xff] %vm995, %v2244
      %2248 = vst.msk [vmem:[#allocation3 + $0x10] sm:$0xff] %vm995, %v2245
      %v2249 = vld [vmem:[#allocation2] sm:$0xff]
      %v2250 = vld [vmem:[#allocation2 + $0x8] sm:$0xff]
      %v2251 = vld [vmem:[#allocation2 + $0x10] sm:$0xff]
      %2255 = vrot.lane.b32.xlu0 %v2249, 127
      %v2256 = vpop.permute.xlu0 %2255
      %2257 = vrot.lane.b32.xlu0 %v2250, 127
      %v2258 = vpop.permute.xlu0 %2257
      %2259 = vrot.lane.b32.xlu0 %v2251, 127
      %v2260 = vpop.permute.xlu0 %2259
      %2264 = vst.msk [vmem:[#allocation3 + $0x18] sm:$0xff] %vm995, %v2256
      %2265 = vst.msk [vmem:[#allocation3 + $0x20] sm:$0xff] %vm995, %v2258
      %2266 = vst.msk [vmem:[#allocation3 + $0x28] sm:$0xff] %vm995, %v2260
      %v2267 = vld [vmem:[#allocation2] sm:$0xff]
      %v2268 = vld [vmem:[#allocation2 + $0x8] sm:$0xff]
      %v2269 = vld [vmem:[#allocation2 + $0x10] sm:$0xff]
      %2273 = vrot.lane.b32.xlu0 %v2267, 126
      %v2274 = vpop.permute.xlu0 %2273
      %2275 = vrot.lane.b32.xlu0 %v2268, 126
      %v2276 = vpop.permute.xlu0 %2275
      %2277 = vrot.lane.b32.xlu0 %v2269, 126
      %v2278 = vpop.permute.xlu0 %2277
      %2282 = vst.msk [vmem:[#allocation3 + $0x30] sm:$0xff] %vm995, %v2274
      %2283 = vst.msk [vmem:[#allocation3 + $0x38] sm:$0xff] %vm995, %v2276
      %2284 = vst.msk [vmem:[#allocation3 + $0x40] sm:$0xff] %vm995, %v2278
      %v2285 = vld [vmem:[#allocation2] sm:$0xff]
      %v2286 = vld [vmem:[#allocation2 + $0x8] sm:$0xff]
      %v2287 = vld [vmem:[#allocation2 + $0x10] sm:$0xff]
      %2291 = vrot.lane.b32.xlu0 %v2285, 125
      %v2292 = vpop.permute.xlu0 %2291
      %2293 = vrot.lane.b32.xlu0 %v2286, 125
      %v2294 = vpop.permute.xlu0 %2293
      %2295 = vrot.lane.b32.xlu0 %v2287, 125
      %v2296 = vpop.permute.xlu0 %2295
      %2300 = vst.msk [vmem:[#allocation3 + $0x48] sm:$0xff] %vm995, %v2292
      %2301 = vst.msk [vmem:[#allocation3 + $0x50] sm:$0xff] %vm995, %v2294
      %2302 = vst.msk [vmem:[#allocation3 + $0x58] sm:$0xff] %vm995, %v2296
      %v2303 = vld [vmem:[#allocation2] sm:$0xff]
      %v2304 = vld [vmem:[#allocation2 + $0x8] sm:$0xff]
      %v2305 = vld [vmem:[#allocation2 + $0x10] sm:$0xff]
      %2309 = vrot.lane.b32.xlu0 %v2303, 124
      %v2310 = vpop.permute.xlu0 %2309
      %2311 = vrot.lane.b32.xlu0 %v2304, 124
      %v2312 = vpop.permute.xlu0 %2311
      %2313 = vrot.lane.b32.xlu0 %v2305, 124
      %v2314 = vpop.permute.xlu0 %2313
      %2318 = vst.msk [vmem:[#allocation3 + $0x60] sm:$0xff] %vm995, %v2310
      %2319 = vst.msk [vmem:[#allocation3 + $0x68] sm:$0xff] %vm995, %v2312
      %2320 = vst.msk [vmem:[#allocation3 + $0x70] sm:$0xff] %vm995, %v2314
      %s2321 = scalar_lea.vmem %s1, 336
      %v2322 = vld [vmem:[%s2321] sm:$0xff]
      %v2323 = vld [vmem:[%s2321 + $0x10] sm:$0xff]
      %v2324 = vld [vmem:[%s2321 + $0x20] sm:$0xff]
      %v2325 = vld [vmem:[#allocation3] sm:$0xff]
      %v2326 = vld [vmem:[#allocation3 + $0x8] sm:$0xff]
      %v2327 = vld [vmem:[#allocation3 + $0x10] sm:$0xff]
      %v2328 = vld [vmem:[#allocation3 + $0x18] sm:$0xff]
      %v2329 = vld [vmem:[#allocation3 + $0x20] sm:$0xff]
      %v2330 = vld [vmem:[#allocation3 + $0x28] sm:$0xff]
      %v2331 = vld [vmem:[#allocation3 + $0x30] sm:$0xff]
      %v2332 = vld [vmem:[#allocation3 + $0x38] sm:$0xff]
      %v2333 = vld [vmem:[#allocation3 + $0x40] sm:$0xff]
      %v2334 = vld [vmem:[#allocation3 + $0x48] sm:$0xff]
      %v2335 = vld [vmem:[#allocation3 + $0x50] sm:$0xff]
      %v2336 = vld [vmem:[#allocation3 + $0x58] sm:$0xff]
      %v2337 = vld [vmem:[#allocation3 + $0x60] sm:$0xff]
      %v2338 = vld [vmem:[#allocation3 + $0x68] sm:$0xff]
      %v2339 = vld [vmem:[#allocation3 + $0x70] sm:$0xff]
      %s2340 = scalar_lea.vmem %s2, 168
      %v2341 = vld [vmem:[%s2340] sm:$0xff]
      %v2342 = vld [vmem:[%s2340 + $0x8] sm:$0xff]
      %v2343 = vld [vmem:[%s2340 + $0x10] sm:$0xff]
      %vm2344 = vcmask 982016
      %v2346 = vsel %vm2344, %v2322, 0
      %v2349 = vsel %vm2344, %v2323, 0
      %v2352 = vsel %vm2344, %v2324, 0
      %2354 = vmatprep.subr.mxu0 0.0
      %2355 = vmatpush1.msra.mxu0 0.0
      %2356 = vmatprep.subr.mxu0 0.0
      %2357 = vmatpush1.msra.mxu0 %v2339
      %2358 = vmatprep.subr.mxu0 0.0
      %2359 = vmatpush1.msra.mxu0 %v2338
      %2360 = vmatprep.subr.mxu0 0.0
      %2361 = vmatpush1.msra.mxu0 %v2337
      %2362 = vmatprep.subr.mxu0 0.0
      %2363 = vmatpush1.msra.mxu0 %v2336
      %2364 = vmatprep.subr.mxu0 0.0
      %2365 = vmatpush1.msra.mxu0 %v2335
      %2366 = vmatprep.subr.mxu0 0.0
      %2367 = vmatpush1.msra.mxu0 %v2334
      %2368 = vmatprep.subr.mxu0 0.0
      %2369 = vmatpush1.msra.mxu0 %v2333
      %2370 = vmatprep.subr.mxu0 0.0
      %2371 = vmatpush1.msra.mxu0 %v2332
      %2372 = vmatprep.subr.mxu0 0.0
      %2373 = vmatpush1.msra.mxu0 %v2331
      %2374 = vmatprep.subr.mxu0 0.0
      %2375 = vmatpush1.msra.mxu0 %v2330
      %2376 = vmatprep.subr.mxu0 0.0
      %2377 = vmatpush1.msra.mxu0 %v2329
      %2378 = vmatprep.subr.mxu0 0.0
      %2379 = vmatpush1.msra.mxu0 %v2328
      %2380 = vmatprep.subr.mxu0 0.0
      %2381 = vmatpush1.msra.mxu0 %v2327
      %2382 = vmatprep.subr.mxu0 0.0
      %2383 = vmatpush1.msra.mxu0 %v2326
      %2384 = vmatprep.subr.mxu0 0.0
      %2385 = vmatpush1.msra.mxu0 %v2325
      %2386 = vmatprep.subr.mxu0 0.0
      %2387 = vmatpush2.msra.mxu0 0.0
      %2388 = vmatprep.subr.mxu0 0.0
      %2389 = vmatpush2.msra.mxu0 0.0
      %2390 = vmatprep.subr.mxu0 0.0
      %2391 = vmatpush2.msra.mxu0 0.0
      %2392 = vmatprep.subr.mxu0 0.0
      %2393 = vmatpush2.msra.mxu0 0.0
      %2394 = vmatprep.subr.mxu0 0.0
      %2395 = vmatpush2.msra.mxu0 0.0
      %2396 = vmatprep.subr.mxu0 0.0
      %2397 = vmatpush2.msra.mxu0 0.0
      %2398 = vmatprep.subr.mxu0 0.0
      %2399 = vmatpush2.msra.mxu0 0.0
      %2400 = vmatprep.subr.mxu0 0.0
      %2401 = vmatpush2.msra.mxu0 0.0
      %2402 = vmatprep.subr.mxu0 0.0
      %2403 = vmatpush2.msra.mxu0 0.0
      %2404 = vmatprep.subr.mxu0 0.0
      %2405 = vmatpush2.msra.mxu0 0.0
      %2406 = vmatprep.subr.mxu0 0.0
      %2407 = vmatpush2.msra.mxu0 0.0
      %2408 = vmatprep.subr.mxu0 0.0
      %2409 = vmatpush2.msra.mxu0 0.0
      %2410 = vmatprep.subr.mxu0 0.0
      %2411 = vmatpush2.msra.mxu0 0.0
      %2412 = vmatprep.subr.mxu0 0.0
      %2413 = vmatpush2.msra.mxu0 0.0
      %2414 = vmatprep.subr.mxu0 0.0
      %2415 = vmatpush2.msra.mxu0 0.0
      %2416 = vmatprep.subr.mxu0 0.0
      %2417 = vmatpush2.msra.mxu0 0.0
      %2418 = vmatprep.mubr.f32.mxu0 0.0
      %2419 = vmatmul.mubr.f32.gmra.mxu0 %v2346
      %v2420 = vpop.f32.mrf.mxu0
      %v2421 = vadd.f32 %v2341, %v2420
      %v2422 = vpop.f32.mrf.mxu0
      %2423 = vmatprep.mubr.f32.mxu0 0.0
      %2424 = vmatmul.mubr.f32.gmra.mxu0 %v2349
      %v2425 = vpop.f32.mrf.mxu0
      %v2426 = vadd.f32 %v2342, %v2425
      %v2427 = vpop.f32.mrf.mxu0
      %2428 = vmatprep.mubr.f32.mxu0 0.0
      %2429 = vmatmul.mubr.f32.gmra.mxu0 %v2352
      %v2430 = vpop.f32.mrf.mxu0
      %v2431 = vadd.f32 %v2343, %v2430
      %v2432 = vpop.f32.mrf.mxu0
      %2433 = vdwg.mxu0
      %v2434 = vmax.f32 %v2421, 0.0
      %v2435 = vmax.f32 %v2426, 0.0
      %v2436 = vmax.f32 %v2431, 0.0
      %2440 = vrot.lane.b32.xlu0 %v2434, 2
      %v2441 = vpop.permute.xlu0 %2440
      %2442 = vrot.lane.b32.xlu0 %v2435, 2
      %v2443 = vpop.permute.xlu0 %2442
      %2444 = vrot.lane.b32.xlu0 %v2436, 2
      %v2445 = vpop.permute.xlu0 %2444
      %2449 = vst.msk [vmem:[#allocation2] sm:$0xff] %vm2232, %v2441
      %2450 = vst.msk [vmem:[#allocation2 + $0x8] sm:$0xff] %vm2232, %v2443
      %2451 = vst.msk [vmem:[#allocation2 + $0x10] sm:$0xff] %vm2232, %v2445
      %2452 = vst.msk [vmem:[#allocation2] sm:$0xff] %vm514, 0.0
      %2453 = vst.msk [vmem:[#allocation2 + $0x8] sm:$0xff] %vm514, 0.0
      %2454 = vst.msk [vmem:[#allocation2 + $0x10] sm:$0xff] %vm514, 0.0
      %2455 = vst.msk [vmem:[#allocation2] sm:$0xff] %vm2239, 0.0
      %2456 = vst.msk [vmem:[#allocation2 + $0x8] sm:$0xff] %vm2239, 0.0
      %2457 = vst.msk [vmem:[#allocation2 + $0x10] sm:$0xff] %vm2239, 0.0
      %v2458 = vld [vmem:[#allocation2] sm:$0xff]
      %v2459 = vld [vmem:[#allocation2 + $0x8] sm:$0xff]
      %v2460 = vld [vmem:[#allocation2 + $0x10] sm:$0xff]
      %2461 = vst.msk [vmem:[#allocation3] sm:$0xff] %vm995, %v2458
      %2462 = vst.msk [vmem:[#allocation3 + $0x8] sm:$0xff] %vm995, %v2459
      %2463 = vst.msk [vmem:[#allocation3 + $0x10] sm:$0xff] %vm995, %v2460
      %v2464 = vld [vmem:[#allocation2] sm:$0xff]
      %v2465 = vld [vmem:[#allocation2 + $0x8] sm:$0xff]
      %v2466 = vld [vmem:[#allocation2 + $0x10] sm:$0xff]
      %2470 = vrot.lane.b32.xlu0 %v2464, 127
      %v2471 = vpop.permute.xlu0 %2470
      %2472 = vrot.lane.b32.xlu0 %v2465, 127
      %v2473 = vpop.permute.xlu0 %2472
      %2474 = vrot.lane.b32.xlu0 %v2466, 127
      %v2475 = vpop.permute.xlu0 %2474
      %2479 = vst.msk [vmem:[#allocation3 + $0x18] sm:$0xff] %vm995, %v2471
      %2480 = vst.msk [vmem:[#allocation3 + $0x20] sm:$0xff] %vm995, %v2473
      %2481 = vst.msk [vmem:[#allocation3 + $0x28] sm:$0xff] %vm995, %v2475
      %v2482 = vld [vmem:[#allocation2] sm:$0xff]
      %v2483 = vld [vmem:[#allocation2 + $0x8] sm:$0xff]
      %v2484 = vld [vmem:[#allocation2 + $0x10] sm:$0xff]
      %2488 = vrot.lane.b32.xlu0 %v2482, 126
      %v2489 = vpop.permute.xlu0 %2488
      %2490 = vrot.lane.b32.xlu0 %v2483, 126
      %v2491 = vpop.permute.xlu0 %2490
      %2492 = vrot.lane.b32.xlu0 %v2484, 126
      %v2493 = vpop.permute.xlu0 %2492
      %2497 = vst.msk [vmem:[#allocation3 + $0x30] sm:$0xff] %vm995, %v2489
      %2498 = vst.msk [vmem:[#allocation3 + $0x38] sm:$0xff] %vm995, %v2491
      %2499 = vst.msk [vmem:[#allocation3 + $0x40] sm:$0xff] %vm995, %v2493
      %v2500 = vld [vmem:[#allocation2] sm:$0xff]
      %v2501 = vld [vmem:[#allocation2 + $0x8] sm:$0xff]
      %v2502 = vld [vmem:[#allocation2 + $0x10] sm:$0xff]
      %2506 = vrot.lane.b32.xlu0 %v2500, 125
      %v2507 = vpop.permute.xlu0 %2506
      %2508 = vrot.lane.b32.xlu0 %v2501, 125
      %v2509 = vpop.permute.xlu0 %2508
      %2510 = vrot.lane.b32.xlu0 %v2502, 125
      %v2511 = vpop.permute.xlu0 %2510
      %2515 = vst.msk [vmem:[#allocation3 + $0x48] sm:$0xff] %vm995, %v2507
      %2516 = vst.msk [vmem:[#allocation3 + $0x50] sm:$0xff] %vm995, %v2509
      %2517 = vst.msk [vmem:[#allocation3 + $0x58] sm:$0xff] %vm995, %v2511
      %v2518 = vld [vmem:[#allocation2] sm:$0xff]
      %v2519 = vld [vmem:[#allocation2 + $0x8] sm:$0xff]
      %v2520 = vld [vmem:[#allocation2 + $0x10] sm:$0xff]
      %2524 = vrot.lane.b32.xlu0 %v2518, 124
      %v2525 = vpop.permute.xlu0 %2524
      %2526 = vrot.lane.b32.xlu0 %v2519, 124
      %v2527 = vpop.permute.xlu0 %2526
      %2528 = vrot.lane.b32.xlu0 %v2520, 124
      %v2529 = vpop.permute.xlu0 %2528
      %2533 = vst.msk [vmem:[#allocation3 + $0x60] sm:$0xff] %vm995, %v2525
      %2534 = vst.msk [vmem:[#allocation3 + $0x68] sm:$0xff] %vm995, %v2527
      %2535 = vst.msk [vmem:[#allocation3 + $0x70] sm:$0xff] %vm995, %v2529
      %s2536 = scalar_lea.vmem %s1, 384
      %v2537 = vld [vmem:[%s2536] sm:$0xff]
      %v2538 = vld [vmem:[%s2536 + $0x10] sm:$0xff]
      %v2539 = vld [vmem:[%s2536 + $0x20] sm:$0xff]
      %v2540 = vld [vmem:[#allocation3] sm:$0xff]
      %v2541 = vld [vmem:[#allocation3 + $0x8] sm:$0xff]
      %v2542 = vld [vmem:[#allocation3 + $0x10] sm:$0xff]
      %v2543 = vld [vmem:[#allocation3 + $0x18] sm:$0xff]
      %v2544 = vld [vmem:[#allocation3 + $0x20] sm:$0xff]
      %v2545 = vld [vmem:[#allocation3 + $0x28] sm:$0xff]
      %v2546 = vld [vmem:[#allocation3 + $0x30] sm:$0xff]
      %v2547 = vld [vmem:[#allocation3 + $0x38] sm:$0xff]
      %v2548 = vld [vmem:[#allocation3 + $0x40] sm:$0xff]
      %v2549 = vld [vmem:[#allocation3 + $0x48] sm:$0xff]
      %v2550 = vld [vmem:[#allocation3 + $0x50] sm:$0xff]
      %v2551 = vld [vmem:[#allocation3 + $0x58] sm:$0xff]
      %v2552 = vld [vmem:[#allocation3 + $0x60] sm:$0xff]
      %v2553 = vld [vmem:[#allocation3 + $0x68] sm:$0xff]
      %v2554 = vld [vmem:[#allocation3 + $0x70] sm:$0xff]
      %s2555 = scalar_lea.vmem %s2, 192
      %v2556 = vld [vmem:[%s2555] sm:$0xff]
      %v2557 = vld [vmem:[%s2555 + $0x8] sm:$0xff]
      %v2558 = vld [vmem:[%s2555 + $0x10] sm:$0xff]
      %v2560 = vsel %vm2344, %v2537, 0
      %v2563 = vsel %vm2344, %v2538, 0
      %v2566 = vsel %vm2344, %v2539, 0
      %2568 = vmatprep.subr.mxu0 0.0
      %2569 = vmatpush1.msra.mxu0 0.0
      %2570 = vmatprep.subr.mxu0 0.0
      %2571 = vmatpush1.msra.mxu0 %v2554
      %2572 = vmatprep.subr.mxu0 0.0
      %2573 = vmatpush1.msra.mxu0 %v2553
      %2574 = vmatprep.subr.mxu0 0.0
      %2575 = vmatpush1.msra.mxu0 %v2552
      %2576 = vmatprep.subr.mxu0 0.0
      %2577 = vmatpush1.msra.mxu0 %v2551
      %2578 = vmatprep.subr.mxu0 0.0
      %2579 = vmatpush1.msra.mxu0 %v2550
      %2580 = vmatprep.subr.mxu0 0.0
      %2581 = vmatpush1.msra.mxu0 %v2549
      %2582 = vmatprep.subr.mxu0 0.0
      %2583 = vmatpush1.msra.mxu0 %v2548
      %2584 = vmatprep.subr.mxu0 0.0
      %2585 = vmatpush1.msra.mxu0 %v2547
      %2586 = vmatprep.subr.mxu0 0.0
      %2587 = vmatpush1.msra.mxu0 %v2546
      %2588 = vmatprep.subr.mxu0 0.0
      %2589 = vmatpush1.msra.mxu0 %v2545
      %2590 = vmatprep.subr.mxu0 0.0
      %2591 = vmatpush1.msra.mxu0 %v2544
      %2592 = vmatprep.subr.mxu0 0.0
      %2593 = vmatpush1.msra.mxu0 %v2543
      %2594 = vmatprep.subr.mxu0 0.0
      %2595 = vmatpush1.msra.mxu0 %v2542
      %2596 = vmatprep.subr.mxu0 0.0
      %2597 = vmatpush1.msra.mxu0 %v2541
      %2598 = vmatprep.subr.mxu0 0.0
      %2599 = vmatpush1.msra.mxu0 %v2540
      %2600 = vmatprep.subr.mxu0 0.0
      %2601 = vmatpush2.msra.mxu0 0.0
      %2602 = vmatprep.subr.mxu0 0.0
      %2603 = vmatpush2.msra.mxu0 0.0
      %2604 = vmatprep.subr.mxu0 0.0
      %2605 = vmatpush2.msra.mxu0 0.0
      %2606 = vmatprep.subr.mxu0 0.0
      %2607 = vmatpush2.msra.mxu0 0.0
      %2608 = vmatprep.subr.mxu0 0.0
      %2609 = vmatpush2.msra.mxu0 0.0
      %2610 = vmatprep.subr.mxu0 0.0
      %2611 = vmatpush2.msra.mxu0 0.0
      %2612 = vmatprep.subr.mxu0 0.0
      %2613 = vmatpush2.msra.mxu0 0.0
      %2614 = vmatprep.subr.mxu0 0.0
      %2615 = vmatpush2.msra.mxu0 0.0
      %2616 = vmatprep.subr.mxu0 0.0
      %2617 = vmatpush2.msra.mxu0 0.0
      %2618 = vmatprep.subr.mxu0 0.0
      %2619 = vmatpush2.msra.mxu0 0.0
      %2620 = vmatprep.subr.mxu0 0.0
      %2621 = vmatpush2.msra.mxu0 0.0
      %2622 = vmatprep.subr.mxu0 0.0
      %2623 = vmatpush2.msra.mxu0 0.0
      %2624 = vmatprep.subr.mxu0 0.0
      %2625 = vmatpush2.msra.mxu0 0.0
      %2626 = vmatprep.subr.mxu0 0.0
      %2627 = vmatpush2.msra.mxu0 0.0
      %2628 = vmatprep.subr.mxu0 0.0
      %2629 = vmatpush2.msra.mxu0 0.0
      %2630 = vmatprep.subr.mxu0 0.0
      %2631 = vmatpush2.msra.mxu0 0.0
      %2632 = vmatprep.mubr.f32.mxu0 0.0
      %2633 = vmatmul.mubr.f32.gmra.mxu0 %v2560
      %v2634 = vpop.f32.mrf.mxu0
      %v2635 = vadd.f32 %v2556, %v2634
      %v2636 = vpop.f32.mrf.mxu0
      %2637 = vmatprep.mubr.f32.mxu0 0.0
      %2638 = vmatmul.mubr.f32.gmra.mxu0 %v2563
      %v2639 = vpop.f32.mrf.mxu0
      %v2640 = vadd.f32 %v2557, %v2639
      %v2641 = vpop.f32.mrf.mxu0
      %2642 = vmatprep.mubr.f32.mxu0 0.0
      %2643 = vmatmul.mubr.f32.gmra.mxu0 %v2566
      %v2644 = vpop.f32.mrf.mxu0
      %v2645 = vadd.f32 %v2558, %v2644
      %v2646 = vpop.f32.mrf.mxu0
      %2647 = vdwg.mxu0
      %v2648 = vmax.f32 %v2635, 0.0
      %v2649 = vmax.f32 %v2640, 0.0
      %v2650 = vmax.f32 %v2645, 0.0
      %v2651 = vadd.f32 %v2648, 0.0
      %v2652 = vadd.f32 %v2649, 0.0
      %v2653 = vadd.f32 %v2650, 0.0
      %s2654 = scalar_lea.vmem %s3, 8
      %v2655 = vld [vmem:[%s2654] sm:$0x7]
      %s2656 = scalar_lea.vmem %s4, 8
      %v2657 = vld [vmem:[%s2656] sm:$0x7]
      %vm2658 = vcmask 195584
      %v2660 = vsel %vm2658, %v2655, 0
      %2662 = vmatprep.subr.mxu0 0.0
      %2663 = vmatpush1.msra.mxu0 0.0
      %2664 = vmatprep.subr.mxu0 0.0
      %2665 = vmatpush1.msra.mxu0 0.0
      %2666 = vmatprep.subr.mxu0 0.0
      %2667 = vmatpush1.msra.mxu0 0.0
      %2668 = vmatprep.subr.mxu0 0.0
      %2669 = vmatpush1.msra.mxu0 0.0
      %2670 = vmatprep.subr.mxu0 0.0
      %2671 = vmatpush1.msra.mxu0 0.0
      %2672 = vmatprep.subr.mxu0 0.0
      %2673 = vmatpush1.msra.mxu0 0.0
      %2674 = vmatprep.subr.mxu0 0.0
      %2675 = vmatpush1.msra.mxu0 0.0
      %2676 = vmatprep.subr.mxu0 0.0
      %2677 = vmatpush1.msra.mxu0 0.0
      %2678 = vmatprep.subr.mxu0 0.0
      %2679 = vmatpush1.msra.mxu0 0.0
      %2680 = vmatprep.subr.mxu0 0.0
      %2681 = vmatpush1.msra.mxu0 0.0
      %2682 = vmatprep.subr.mxu0 0.0
      %2683 = vmatpush1.msra.mxu0 0.0
      %2684 = vmatprep.subr.mxu0 0.0
      %2685 = vmatpush1.msra.mxu0 0.0
      %2686 = vmatprep.subr.mxu0 0.0
      %2687 = vmatpush1.msra.mxu0 0.0
      %2688 = vmatprep.subr.mxu0 0.0
      %2689 = vmatpush1.msra.mxu0 %v2653
      %2690 = vmatprep.subr.mxu0 0.0
      %2691 = vmatpush1.msra.mxu0 %v2652
      %2692 = vmatprep.subr.mxu0 0.0
      %2693 = vmatpush1.msra.mxu0 %v2651
      %2694 = vmatprep.subr.mxu0 0.0
      %2695 = vmatpush2.msra.mxu0 0.0
      %2696 = vmatprep.subr.mxu0 0.0
      %2697 = vmatpush2.msra.mxu0 0.0
      %2698 = vmatprep.subr.mxu0 0.0
      %2699 = vmatpush2.msra.mxu0 0.0
      %2700 = vmatprep.subr.mxu0 0.0
      %2701 = vmatpush2.msra.mxu0 0.0
      %2702 = vmatprep.subr.mxu0 0.0
      %2703 = vmatpush2.msra.mxu0 0.0
      %2704 = vmatprep.subr.mxu0 0.0
      %2705 = vmatpush2.msra.mxu0 0.0
      %2706 = vmatprep.subr.mxu0 0.0
      %2707 = vmatpush2.msra.mxu0 0.0
      %2708 = vmatprep.subr.mxu0 0.0
      %2709 = vmatpush2.msra.mxu0 0.0
      %2710 = vmatprep.subr.mxu0 0.0
      %2711 = vmatpush2.msra.mxu0 0.0
      %2712 = vmatprep.subr.mxu0 0.0
      %2713 = vmatpush2.msra.mxu0 0.0
      %2714 = vmatprep.subr.mxu0 0.0
      %2715 = vmatpush2.msra.mxu0 0.0
      %2716 = vmatprep.subr.mxu0 0.0
      %2717 = vmatpush2.msra.mxu0 0.0
      %2718 = vmatprep.subr.mxu0 0.0
      %2719 = vmatpush2.msra.mxu0 0.0
      %2720 = vmatprep.subr.mxu0 0.0
      %2721 = vmatpush2.msra.mxu0 0.0
      %2722 = vmatprep.subr.mxu0 0.0
      %2723 = vmatpush2.msra.mxu0 0.0
      %2724 = vmatprep.subr.mxu0 0.0
      %2725 = vmatpush2.msra.mxu0 0.0
      %2726 = vmatprep.mubr.f32.mxu0 0.0
      %2727 = vmatmul.mubr.f32.gmra.mxu0 %v2660
      %v2728 = vpop.f32.mrf.mxu0
      %v2729 = vadd.f32 %v2657, %v2728
      %v2730 = vpop.f32.mrf.mxu0
      %2731 = vdwg.mxu0
      %v2732 = vmax.f32 %v2729, 0.0
      %s2733 = scalar_lea.vmem %s5, 48
      %v2734 = vld [vmem:[%s2733] sm:$0xff]
      %v2735 = vld [vmem:[%s2733 + $0x8] sm:$0xff]
      %v2736 = vld [vmem:[%s2733 + $0x10] sm:$0xff]
      %s2737 = scalar_lea.vmem %s6, 48
      %v2738 = vld [vmem:[%s2737] sm:$0xff]
      %v2739 = vld [vmem:[%s2737 + $0x8] sm:$0xff]
      %v2740 = vld [vmem:[%s2737 + $0x10] sm:$0xff]
      %vm2741 = vcmask 23552
      %v2743 = vsel %vm2741, %v2734, 0
      %v2746 = vsel %vm2741, %v2735, 0
      %v2749 = vsel %vm2741, %v2736, 0
      %vm2751 = vcmask 1042432
      %v2753 = vsel %vm2751, %v2732, 0
      %2755 = vmatprep.subr.mxu0 0.0
      %2756 = vmatpush1.msra.mxu0 0.0
      %2757 = vmatprep.subr.mxu0 0.0
      %2758 = vmatpush1.msra.mxu0 0.0
      %2759 = vmatprep.subr.mxu0 0.0
      %2760 = vmatpush1.msra.mxu0 0.0
      %2761 = vmatprep.subr.mxu0 0.0
      %2762 = vmatpush1.msra.mxu0 0.0
      %2763 = vmatprep.subr.mxu0 0.0
      %2764 = vmatpush1.msra.mxu0 0.0
      %2765 = vmatprep.subr.mxu0 0.0
      %2766 = vmatpush1.msra.mxu0 0.0
      %2767 = vmatprep.subr.mxu0 0.0
      %2768 = vmatpush1.msra.mxu0 0.0
      %2769 = vmatprep.subr.mxu0 0.0
      %2770 = vmatpush1.msra.mxu0 0.0
      %2771 = vmatprep.subr.mxu0 0.0
      %2772 = vmatpush1.msra.mxu0 0.0
      %2773 = vmatprep.subr.mxu0 0.0
      %2774 = vmatpush1.msra.mxu0 0.0
      %2775 = vmatprep.subr.mxu0 0.0
      %2776 = vmatpush1.msra.mxu0 0.0
      %2777 = vmatprep.subr.mxu0 0.0
      %2778 = vmatpush1.msra.mxu0 0.0
      %2779 = vmatprep.subr.mxu0 0.0
      %2780 = vmatpush1.msra.mxu0 0.0
      %2781 = vmatprep.subr.mxu0 0.0
      %2782 = vmatpush1.msra.mxu0 0.0
      %2783 = vmatprep.subr.mxu0 0.0
      %2784 = vmatpush1.msra.mxu0 0.0
      %2785 = vmatprep.subr.mxu0 0.0
      %2786 = vmatpush1.msra.mxu0 %v2753
      %2787 = vmatprep.subr.mxu0 0.0
      %2788 = vmatpush2.msra.mxu0 0.0
      %2789 = vmatprep.subr.mxu0 0.0
      %2790 = vmatpush2.msra.mxu0 0.0
      %2791 = vmatprep.subr.mxu0 0.0
      %2792 = vmatpush2.msra.mxu0 0.0
      %2793 = vmatprep.subr.mxu0 0.0
      %2794 = vmatpush2.msra.mxu0 0.0
      %2795 = vmatprep.subr.mxu0 0.0
      %2796 = vmatpush2.msra.mxu0 0.0
      %2797 = vmatprep.subr.mxu0 0.0
      %2798 = vmatpush2.msra.mxu0 0.0
      %2799 = vmatprep.subr.mxu0 0.0
      %2800 = vmatpush2.msra.mxu0 0.0
      %2801 = vmatprep.subr.mxu0 0.0
      %2802 = vmatpush2.msra.mxu0 0.0
      %2803 = vmatprep.subr.mxu0 0.0
      %2804 = vmatpush2.msra.mxu0 0.0
      %2805 = vmatprep.subr.mxu0 0.0
      %2806 = vmatpush2.msra.mxu0 0.0
      %2807 = vmatprep.subr.mxu0 0.0
      %2808 = vmatpush2.msra.mxu0 0.0
      %2809 = vmatprep.subr.mxu0 0.0
      %2810 = vmatpush2.msra.mxu0 0.0
      %2811 = vmatprep.subr.mxu0 0.0
      %2812 = vmatpush2.msra.mxu0 0.0
      %2813 = vmatprep.subr.mxu0 0.0
      %2814 = vmatpush2.msra.mxu0 0.0
      %2815 = vmatprep.subr.mxu0 0.0
      %2816 = vmatpush2.msra.mxu0 0.0
      %2817 = vmatprep.subr.mxu0 0.0
      %2818 = vmatpush2.msra.mxu0 0.0
      %2819 = vmatprep.mubr.f32.mxu0 0.0
      %2820 = vmatmul.mubr.f32.gmra.mxu0 %v2743
      %v2821 = vpop.f32.mrf.mxu0
      %v2822 = vadd.f32 %v2738, %v2821
      %v2823 = vpop.f32.mrf.mxu0
      %2824 = vmatprep.mubr.f32.mxu0 0.0
      %2825 = vmatmul.mubr.f32.gmra.mxu0 %v2746
      %v2826 = vpop.f32.mrf.mxu0
      %v2827 = vadd.f32 %v2739, %v2826
      %v2828 = vpop.f32.mrf.mxu0
      %2829 = vmatprep.mubr.f32.mxu0 0.0
      %2830 = vmatmul.mubr.f32.gmra.mxu0 %v2749
      %v2831 = vpop.f32.mrf.mxu0
      %v2832 = vadd.f32 %v2740, %v2831
      %v2833 = vpop.f32.mrf.mxu0
      %2834 = vdwg.mxu0
      %v2835 = vxor.u32 %v2822, 2147483648
      %v2836 = vxor.u32 %v2827, 2147483648
      %v2837 = vxor.u32 %v2832, 2147483648
      %v2838 = vmul.f32 %v2835, 1.442695
      %v2839 = vpow.pop %v2838
      %v2840 = vmul.f32 %v2836, 1.442695
      %v2841 = vpow.pop %v2840
      %v2842 = vmul.f32 %v2837, 1.442695
      %v2843 = vpow.pop %v2842
      %v2844 = vadd.f32 %v2839, 1.0
      %v2845 = vadd.f32 %v2841, 1.0
      %v2846 = vadd.f32 %v2843, 1.0
      %v2847 = vrcp.pop %v2844
      %v2848 = vmul.f32 1.0, %v2847
      %v2849 = vrcp.pop %v2845
      %v2850 = vmul.f32 1.0, %v2849
      %v2851 = vrcp.pop %v2846
      %v2852 = vmul.f32 1.0, %v2851
      %v2853 = vadd.f32 %v2648, %v2848
      %v2854 = vadd.f32 %v2649, %v2850
      %v2855 = vadd.f32 %v2650, %v2852
      %v2856 = vadd.f32 %v2217, %v2853
      %v2857 = vadd.f32 %v2218, %v2854
      %v2858 = vadd.f32 %v2219, %v2855
      %2860 = vset.pattern.permute.xlu0 0
      %2861 = vperm.xlu0 %2860, %v2856
      %v2862 = vpop.permute.xlu0 %2861
      %2865 = vset.pattern.permute.xlu0 0
      %2866 = vperm.xlu0 %2865, %v2857
      %v2867 = vpop.permute.xlu0 %2866
      %2870 = vset.pattern.permute.xlu0 0
      %2871 = vperm.xlu0 %2870, %v2858
      %v2872 = vpop.permute.xlu0 %2871
      %2874 = vst.msk [vmem:[#allocation2] sm:$0xff] %vm1318, %v2862
      %2875 = vst.msk [vmem:[#allocation2 + $0x8] sm:$0xff] %vm1318, %v2867
      %2876 = vst.msk [vmem:[#allocation2 + $0x10] sm:$0xff] %vm1318, %v2872
      %2877 = vst.msk [vmem:[#allocation2 + $0x18] sm:$0xff] %vm1318, %v1872
      %2878 = vst.msk [vmem:[#allocation2 + $0x20] sm:$0xff] %vm1318, %v1874
      %2879 = vst.msk [vmem:[#allocation2] sm:$0xff] %vm514, 0.0
      %2880 = vst.msk [vmem:[#allocation2 + $0x8] sm:$0xff] %vm514, 0.0
      %2881 = vst.msk [vmem:[#allocation2 + $0x10] sm:$0xff] %vm514, 0.0
      %2882 = vst.msk [vmem:[#allocation2 + $0x18] sm:$0xff] %vm514, 0.0
      %2883 = vst.msk [vmem:[#allocation2 + $0x20] sm:$0xff] %vm514, 0.0
      %2884 = vst.msk [vmem:[#allocation2] sm:$0xff] %vm1323, 0.0
      %2885 = vst.msk [vmem:[#allocation2 + $0x8] sm:$0xff] %vm1323, 0.0
      %2886 = vst.msk [vmem:[#allocation2 + $0x10] sm:$0xff] %vm1323, 0.0
      %2887 = vst.msk [vmem:[#allocation2 + $0x18] sm:$0xff] %vm1323, 0.0
      %2888 = vst.msk [vmem:[#allocation2 + $0x20] sm:$0xff] %vm1323, 0.0
      %v2889 = vld [vmem:[#allocation2] sm:$0xff]
      %v2890 = vld [vmem:[#allocation2 + $0x8] sm:$0xff]
      %v2891 = vld [vmem:[#allocation2 + $0x10] sm:$0xff]
      %v2892 = vld [vmem:[#allocation2 + $0x18] sm:$0xff]
      %v2893 = vld [vmem:[#allocation2 + $0x20] sm:$0xff]
      %2894 = vst.msk [vmem:[#allocation3] sm:$0xff] %vm1328, %v2889
      %2895 = vst.msk [vmem:[#allocation3 + $0x8] sm:$0xff] %vm1328, %v2890
      %2896 = vst.msk [vmem:[#allocation3 + $0x10] sm:$0xff] %vm1328, %v2891
      %2897 = vst.msk [vmem:[#allocation3 + $0x18] sm:$0xff] %vm1328, %v2892
      %2898 = vst.msk [vmem:[#allocation3 + $0x20] sm:$0xff] %vm1328, %v2893
      %v2899 = vld [vmem:[#allocation2] sm:$0xff]
      %v2900 = vld [vmem:[#allocation2 + $0x8] sm:$0xff]
      %v2901 = vld [vmem:[#allocation2 + $0x10] sm:$0xff]
      %v2902 = vld [vmem:[#allocation2 + $0x18] sm:$0xff]
      %v2903 = vld [vmem:[#allocation2 + $0x20] sm:$0xff]
      %2909 = vrot.lane.b32.xlu0 %v2899, 127
      %v2910 = vpop.permute.xlu0 %2909
      %2911 = vrot.lane.b32.xlu0 %v2900, 127
      %v2912 = vpop.permute.xlu0 %2911
      %2913 = vrot.lane.b32.xlu0 %v2901, 127
      %v2914 = vpop.permute.xlu0 %2913
      %2915 = vrot.lane.b32.xlu0 %v2902, 127
      %v2916 = vpop.permute.xlu0 %2915
      %2917 = vrot.lane.b32.xlu0 %v2903, 127
      %v2918 = vpop.permute.xlu0 %2917
      %2924 = vst.msk [vmem:[#allocation3 + $0x28] sm:$0xff] %vm1328, %v2910
      %2925 = vst.msk [vmem:[#allocation3 + $0x30] sm:$0xff] %vm1328, %v2912
      %2926 = vst.msk [vmem:[#allocation3 + $0x38] sm:$0xff] %vm1328, %v2914
      %2927 = vst.msk [vmem:[#allocation3 + $0x40] sm:$0xff] %vm1328, %v2916
      %2928 = vst.msk [vmem:[#allocation3 + $0x48] sm:$0xff] %vm1328, %v2918
      %v2929 = vld [vmem:[#allocation2] sm:$0xff]
      %v2930 = vld [vmem:[#allocation2 + $0x8] sm:$0xff]
      %v2931 = vld [vmem:[#allocation2 + $0x10] sm:$0xff]
      %v2932 = vld [vmem:[#allocation2 + $0x18] sm:$0xff]
      %v2933 = vld [vmem:[#allocation2 + $0x20] sm:$0xff]
      %2939 = vrot.lane.b32.xlu0 %v2929, 126
      %v2940 = vpop.permute.xlu0 %2939
      %2941 = vrot.lane.b32.xlu0 %v2930, 126
      %v2942 = vpop.permute.xlu0 %2941
      %2943 = vrot.lane.b32.xlu0 %v2931, 126
      %v2944 = vpop.permute.xlu0 %2943
      %2945 = vrot.lane.b32.xlu0 %v2932, 126
      %v2946 = vpop.permute.xlu0 %2945
      %2947 = vrot.lane.b32.xlu0 %v2933, 126
      %v2948 = vpop.permute.xlu0 %2947
      %2954 = vst.msk [vmem:[#allocation3 + $0x50] sm:$0xff] %vm1328, %v2940
      %2955 = vst.msk [vmem:[#allocation3 + $0x58] sm:$0xff] %vm1328, %v2942
      %2956 = vst.msk [vmem:[#allocation3 + $0x60] sm:$0xff] %vm1328, %v2944
      %2957 = vst.msk [vmem:[#allocation3 + $0x68] sm:$0xff] %vm1328, %v2946
      %2958 = vst.msk [vmem:[#allocation3 + $0x70] sm:$0xff] %vm1328, %v2948
      %v2959 = vld [vmem:[#allocation2] sm:$0xff]
      %v2960 = vld [vmem:[#allocation2 + $0x8] sm:$0xff]
      %v2961 = vld [vmem:[#allocation2 + $0x10] sm:$0xff]
      %v2962 = vld [vmem:[#allocation2 + $0x18] sm:$0xff]
      %v2963 = vld [vmem:[#allocation2 + $0x20] sm:$0xff]
      %2969 = vrot.lane.b32.xlu0 %v2959, 125
      %v2970 = vpop.permute.xlu0 %2969
      %2971 = vrot.lane.b32.xlu0 %v2960, 125
      %v2972 = vpop.permute.xlu0 %2971
      %2973 = vrot.lane.b32.xlu0 %v2961, 125
      %v2974 = vpop.permute.xlu0 %2973
      %2975 = vrot.lane.b32.xlu0 %v2962, 125
      %v2976 = vpop.permute.xlu0 %2975
      %2977 = vrot.lane.b32.xlu0 %v2963, 125
      %v2978 = vpop.permute.xlu0 %2977
      %2984 = vst.msk [vmem:[#allocation3 + $0x78] sm:$0xff] %vm1328, %v2970
      %2985 = vst.msk [vmem:[#allocation3 + $0x80] sm:$0xff] %vm1328, %v2972
      %2986 = vst.msk [vmem:[#allocation3 + $0x88] sm:$0xff] %vm1328, %v2974
      %2987 = vst.msk [vmem:[#allocation3 + $0x90] sm:$0xff] %vm1328, %v2976
      %2988 = vst.msk [vmem:[#allocation3 + $0x98] sm:$0xff] %vm1328, %v2978
      %v2989 = vld [vmem:[#allocation2] sm:$0xff]
      %v2990 = vld [vmem:[#allocation2 + $0x8] sm:$0xff]
      %v2991 = vld [vmem:[#allocation2 + $0x10] sm:$0xff]
      %v2992 = vld [vmem:[#allocation2 + $0x18] sm:$0xff]
      %v2993 = vld [vmem:[#allocation2 + $0x20] sm:$0xff]
      %2999 = vrot.lane.b32.xlu0 %v2989, 124
      %v3000 = vpop.permute.xlu0 %2999
      %3001 = vrot.lane.b32.xlu0 %v2990, 124
      %v3002 = vpop.permute.xlu0 %3001
      %3003 = vrot.lane.b32.xlu0 %v2991, 124
      %v3004 = vpop.permute.xlu0 %3003
      %3005 = vrot.lane.b32.xlu0 %v2992, 124
      %v3006 = vpop.permute.xlu0 %3005
      %3007 = vrot.lane.b32.xlu0 %v2993, 124
      %v3008 = vpop.permute.xlu0 %3007
      %3014 = vst.msk [vmem:[#allocation3 + $0xa0] sm:$0xff] %vm1328, %v3000
      %3015 = vst.msk [vmem:[#allocation3 + $0xa8] sm:$0xff] %vm1328, %v3002
      %3016 = vst.msk [vmem:[#allocation3 + $0xb0] sm:$0xff] %vm1328, %v3004
      %3017 = vst.msk [vmem:[#allocation3 + $0xb8] sm:$0xff] %vm1328, %v3006
      %3018 = vst.msk [vmem:[#allocation3 + $0xc0] sm:$0xff] %vm1328, %v3008
      %s3019 = scalar_lea.vmem %s1, 432
      %v3020 = vld [vmem:[%s3019] sm:$0xff]
      %v3021 = vld [vmem:[%s3019 + $0x8] sm:$0xff]
      %v3022 = vld [vmem:[%s3019 + $0x10] sm:$0xff]
      %v3023 = vld [vmem:[%s3019 + $0x18] sm:$0xff]
      %v3024 = vld [vmem:[#allocation3] sm:$0xff]
      %v3025 = vld [vmem:[#allocation3 + $0x8] sm:$0xff]
      %v3026 = vld [vmem:[#allocation3 + $0x10] sm:$0xff]
      %v3027 = vld [vmem:[#allocation3 + $0x18] sm:$0xff]
      %v3028 = vld [vmem:[#allocation3 + $0x20] sm:$0xff]
      %v3029 = vld [vmem:[#allocation3 + $0x28] sm:$0xff]
      %v3030 = vld [vmem:[#allocation3 + $0x30] sm:$0xff]
      %v3031 = vld [vmem:[#allocation3 + $0x38] sm:$0xff]
      %v3032 = vld [vmem:[#allocation3 + $0x40] sm:$0xff]
      %v3033 = vld [vmem:[#allocation3 + $0x48] sm:$0xff]
      %v3034 = vld [vmem:[#allocation3 + $0x50] sm:$0xff]
      %v3035 = vld [vmem:[#allocation3 + $0x58] sm:$0xff]
      %v3036 = vld [vmem:[#allocation3 + $0x60] sm:$0xff]
      %v3037 = vld [vmem:[#allocation3 + $0x68] sm:$0xff]
      %v3038 = vld [vmem:[#allocation3 + $0x70] sm:$0xff]
      %v3039 = vld [vmem:[#allocation3 + $0x78] sm:$0xff]
      %v3040 = vld [vmem:[#allocation3 + $0x80] sm:$0xff]
      %v3041 = vld [vmem:[#allocation3 + $0x88] sm:$0xff]
      %v3042 = vld [vmem:[#allocation3 + $0x90] sm:$0xff]
      %v3043 = vld [vmem:[#allocation3 + $0x98] sm:$0xff]
      %v3044 = vld [vmem:[#allocation3 + $0xa0] sm:$0xff]
      %v3045 = vld [vmem:[#allocation3 + $0xa8] sm:$0xff]
      %v3046 = vld [vmem:[#allocation3 + $0xb0] sm:$0xff]
      %v3047 = vld [vmem:[#allocation3 + $0xb8] sm:$0xff]
      %v3048 = vld [vmem:[#allocation3 + $0xc0] sm:$0xff]
      %s3049 = scalar_lea.vmem %s2, 216
      %v3050 = vld [vmem:[%s3049] sm:$0xff]
      %v3051 = vld [vmem:[%s3049 + $0x8] sm:$0xff]
      %3053 = vset.pattern.permute.xlu0 0
      %3054 = vperm.xlu0 %3053, %v3050
      %v3055 = vpop.permute.xlu0 %3054
      %3058 = vset.pattern.permute.xlu0 0
      %3059 = vperm.xlu0 %3058, %v3051
      %v3060 = vpop.permute.xlu0 %3059
      %vm3062 = vcmask 588800
      %v3064 = vsel %vm3062, %v3021, 0
      %v3067 = vsel %vm3062, %v3023, 0
      %3069 = vmatprep.subr.mxu0 0.0
      %3070 = vmatpush1.msra.mxu0 %v3039
      %3071 = vmatprep.subr.mxu0 0.0
      %3072 = vmatpush1.msra.mxu0 %v3038
      %3073 = vmatprep.subr.mxu0 0.0
      %3074 = vmatpush1.msra.mxu0 %v3037
      %3075 = vmatprep.subr.mxu0 0.0
      %3076 = vmatpush1.msra.mxu0 %v3036
      %3077 = vmatprep.subr.mxu0 0.0
      %3078 = vmatpush1.msra.mxu0 %v3035
      %3079 = vmatprep.subr.mxu0 0.0
      %3080 = vmatpush1.msra.mxu0 %v3034
      %3081 = vmatprep.subr.mxu0 0.0
      %3082 = vmatpush1.msra.mxu0 %v3033
      %3083 = vmatprep.subr.mxu0 0.0
      %3084 = vmatpush1.msra.mxu0 %v3032
      %3085 = vmatprep.subr.mxu0 0.0
      %3086 = vmatpush1.msra.mxu0 %v3031
      %3087 = vmatprep.subr.mxu0 0.0
      %3088 = vmatpush1.msra.mxu0 %v3030
      %3089 = vmatprep.subr.mxu0 0.0
      %3090 = vmatpush1.msra.mxu0 %v3029
      %3091 = vmatprep.subr.mxu0 0.0
      %3092 = vmatpush1.msra.mxu0 %v3028
      %3093 = vmatprep.subr.mxu0 0.0
      %3094 = vmatpush1.msra.mxu0 %v3027
      %3095 = vmatprep.subr.mxu0 0.0
      %3096 = vmatpush1.msra.mxu0 %v3026
      %3097 = vmatprep.subr.mxu0 0.0
      %3098 = vmatpush1.msra.mxu0 %v3025
      %3099 = vmatprep.subr.mxu0 0.0
      %3100 = vmatpush1.msra.mxu0 %v3024
      %3101 = vmatprep.subr.mxu0 0.0
      %3102 = vmatpush2.msra.mxu0 0.0
      %3103 = vmatprep.subr.mxu0 0.0
      %3104 = vmatpush2.msra.mxu0 0.0
      %3105 = vmatprep.subr.mxu0 0.0
      %3106 = vmatpush2.msra.mxu0 0.0
      %3107 = vmatprep.subr.mxu0 0.0
      %3108 = vmatpush2.msra.mxu0 0.0
      %3109 = vmatprep.subr.mxu0 0.0
      %3110 = vmatpush2.msra.mxu0 0.0
      %3111 = vmatprep.subr.mxu0 0.0
      %3112 = vmatpush2.msra.mxu0 0.0
      %3113 = vmatprep.subr.mxu0 0.0
      %3114 = vmatpush2.msra.mxu0 0.0
      %3115 = vmatprep.subr.mxu0 0.0
      %3116 = vmatpush2.msra.mxu0 %v3048
      %3117 = vmatprep.subr.mxu0 0.0
      %3118 = vmatpush2.msra.mxu0 %v3047
      %3119 = vmatprep.subr.mxu0 0.0
      %3120 = vmatpush2.msra.mxu0 %v3046
      %3121 = vmatprep.subr.mxu0 0.0
      %3122 = vmatpush2.msra.mxu0 %v3045
      %3123 = vmatprep.subr.mxu0 0.0
      %3124 = vmatpush2.msra.mxu0 %v3044
      %3125 = vmatprep.subr.mxu0 0.0
      %3126 = vmatpush2.msra.mxu0 %v3043
      %3127 = vmatprep.subr.mxu0 0.0
      %3128 = vmatpush2.msra.mxu0 %v3042
      %3129 = vmatprep.subr.mxu0 0.0
      %3130 = vmatpush2.msra.mxu0 %v3041
      %3131 = vmatprep.subr.mxu0 0.0
      %3132 = vmatpush2.msra.mxu0 %v3040
      %3133 = vmatprep.mubr.f32.mxu0 %v3064
      %3134 = vmatmul.mubr.f32.gmra.mxu0 %v3020
      %v3135 = vpop.f32.mrf.mxu0
      %v3136 = vadd.f32 %v3055, %v3135
      %v3137 = vpop.f32.mrf.mxu0
      %3138 = vmatprep.mubr.f32.mxu0 %v3067
      %3139 = vmatmul.mubr.f32.gmra.mxu0 %v3022
      %v3140 = vpop.f32.mrf.mxu0
      %v3141 = vadd.f32 %v3060, %v3140
      %v3142 = vpop.f32.mrf.mxu0
      %3143 = vdwg.mxu0
      %v3144 = vmax.f32 %v3136, 0.0
      %v3145 = vmax.f32 %v3141, 0.0
      %v3146 = vld [vmem:[%s11] sm:$0x1f]
      %v3148 = vsel %vm1328, %v3144, 0
      %v3151 = vsel %vm1328, %v3145, 0
      %v3154 = vsel %vm2133, %v3146, 0
      %3156 = vmatprep.subr.mxu0 0.0
      %3157 = vmatpush1.msra.mxu0 0.0
      %3158 = vmatprep.subr.mxu0 0.0
      %3159 = vmatpush1.msra.mxu0 0.0
      %3160 = vmatprep.subr.mxu0 0.0
      %3161 = vmatpush1.msra.mxu0 0.0
      %3162 = vmatprep.subr.mxu0 0.0
      %3163 = vmatpush1.msra.mxu0 0.0
      %3164 = vmatprep.subr.mxu0 0.0
      %3165 = vmatpush1.msra.mxu0 0.0
      %3166 = vmatprep.subr.mxu0 0.0
      %3167 = vmatpush1.msra.mxu0 0.0
      %3168 = vmatprep.subr.mxu0 0.0
      %3169 = vmatpush1.msra.mxu0 0.0
      %3170 = vmatprep.subr.mxu0 0.0
      %3171 = vmatpush1.msra.mxu0 0.0
      %3172 = vmatprep.subr.mxu0 0.0
      %3173 = vmatpush1.msra.mxu0 0.0
      %3174 = vmatprep.subr.mxu0 0.0
      %3175 = vmatpush1.msra.mxu0 0.0
      %3176 = vmatprep.subr.mxu0 0.0
      %3177 = vmatpush1.msra.mxu0 0.0
      %3178 = vmatprep.subr.mxu0 0.0
      %3179 = vmatpush1.msra.mxu0 0.0
      %3180 = vmatprep.subr.mxu0 0.0
      %3181 = vmatpush1.msra.mxu0 0.0
      %3182 = vmatprep.subr.mxu0 0.0
      %3183 = vmatpush1.msra.mxu0 0.0
      %3184 = vmatprep.subr.mxu0 0.0
      %3185 = vmatpush1.msra.mxu0 0.0
      %3186 = vmatprep.subr.mxu0 0.0
      %3187 = vmatpush1.msra.mxu0 %v3154
      %3188 = vmatprep.subr.mxu0 0.0
      %3189 = vmatpush2.msra.mxu0 0.0
      %3190 = vmatprep.subr.mxu0 0.0
      %3191 = vmatpush2.msra.mxu0 0.0
      %3192 = vmatprep.subr.mxu0 0.0
      %3193 = vmatpush2.msra.mxu0 0.0
      %3194 = vmatprep.subr.mxu0 0.0
      %3195 = vmatpush2.msra.mxu0 0.0
      %3196 = vmatprep.subr.mxu0 0.0
      %3197 = vmatpush2.msra.mxu0 0.0
      %3198 = vmatprep.subr.mxu0 0.0
      %3199 = vmatpush2.msra.mxu0 0.0
      %3200 = vmatprep.subr.mxu0 0.0
      %3201 = vmatpush2.msra.mxu0 0.0
      %3202 = vmatprep.subr.mxu0 0.0
      %3203 = vmatpush2.msra.mxu0 0.0
      %3204 = vmatprep.subr.mxu0 0.0
      %3205 = vmatpush2.msra.mxu0 0.0
      %3206 = vmatprep.subr.mxu0 0.0
      %3207 = vmatpush2.msra.mxu0 0.0
      %3208 = vmatprep.subr.mxu0 0.0
      %3209 = vmatpush2.msra.mxu0 0.0
      %3210 = vmatprep.subr.mxu0 0.0
      %3211 = vmatpush2.msra.mxu0 0.0
      %3212 = vmatprep.subr.mxu0 0.0
      %3213 = vmatpush2.msra.mxu0 0.0
      %3214 = vmatprep.subr.mxu0 0.0
      %3215 = vmatpush2.msra.mxu0 0.0
      %3216 = vmatprep.subr.mxu0 0.0
      %3217 = vmatpush2.msra.mxu0 0.0
      %3218 = vmatprep.subr.mxu0 0.0
      %3219 = vmatpush2.msra.mxu0 0.0
      %3220 = vmatprep.mubr.f32.mxu0 0.0
      %3221 = vmatmul.mubr.f32.gmra.mxu0 %v3148
      %v3222 = vpop.f32.mrf.mxu0
      %v3223 = vadd.f32 0.0, %v3222
      %v3224 = vpop.f32.mrf.mxu0
      %3225 = vmatprep.mubr.f32.mxu0 0.0
      %3226 = vmatmul.mubr.f32.gmra.mxu0 %v3151
      %v3227 = vpop.f32.mrf.mxu0
      %v3228 = vadd.f32 0.0, %v3227
      %v3229 = vpop.f32.mrf.mxu0
      %3230 = vdwg.mxu0
      %3233 = vrot.lane.b32.xlu0 %v3223, 2
      %v3234 = vpop.permute.xlu0 %3233
      %3235 = vrot.lane.b32.xlu0 %v3228, 2
      %v3236 = vpop.permute.xlu0 %3235
      %3239 = vst.msk [vmem:[#allocation2] sm:$0xff] %vm510, %v3234
      %3240 = vst.msk [vmem:[#allocation2 + $0x8] sm:$0xff] %vm510, %v3236
      %3241 = vst.msk [vmem:[#allocation2 + $0x10] sm:$0xff] %vm510, %v1091
      %3242 = vst.msk [vmem:[#allocation2] sm:$0xff] %vm514, 0.0
      %3243 = vst.msk [vmem:[#allocation2 + $0x8] sm:$0xff] %vm514, 0.0
      %3244 = vst.msk [vmem:[#allocation2 + $0x10] sm:$0xff] %vm514, 0.0
      %3245 = vst.msk [vmem:[#allocation2] sm:$0xff] %vm518, 0.0
      %3246 = vst.msk [vmem:[#allocation2 + $0x8] sm:$0xff] %vm518, 0.0
      %3247 = vst.msk [vmem:[#allocation2 + $0x10] sm:$0xff] %vm518, 0.0
      %v3248 = vld [vmem:[#allocation2] sm:$0xff]
      %v3249 = vld [vmem:[#allocation2 + $0x8] sm:$0xff]
      %v3250 = vld [vmem:[#allocation2 + $0x10] sm:$0xff]
      %3251 = vst.msk [vmem:[#allocation3] sm:$0xff] %vm418, %v3248
      %3252 = vst.msk [vmem:[#allocation3 + $0x8] sm:$0xff] %vm418, %v3249
      %3253 = vst.msk [vmem:[#allocation3 + $0x10] sm:$0xff] %vm418, %v3250
      %v3254 = vld [vmem:[#allocation2] sm:$0xff]
      %v3255 = vld [vmem:[#allocation2 + $0x8] sm:$0xff]
      %v3256 = vld [vmem:[#allocation2 + $0x10] sm:$0xff]
      %3260 = vrot.lane.b32.xlu0 %v3254, 127
      %v3261 = vpop.permute.xlu0 %3260
      %3262 = vrot.lane.b32.xlu0 %v3255, 127
      %v3263 = vpop.permute.xlu0 %3262
      %3264 = vrot.lane.b32.xlu0 %v3256, 127
      %v3265 = vpop.permute.xlu0 %3264
      %3269 = vst.msk [vmem:[#allocation3 + $0x18] sm:$0xff] %vm418, %v3261
      %3270 = vst.msk [vmem:[#allocation3 + $0x20] sm:$0xff] %vm418, %v3263
      %3271 = vst.msk [vmem:[#allocation3 + $0x28] sm:$0xff] %vm418, %v3265
      %v3272 = vld [vmem:[#allocation2] sm:$0xff]
      %v3273 = vld [vmem:[#allocation2 + $0x8] sm:$0xff]
      %v3274 = vld [vmem:[#allocation2 + $0x10] sm:$0xff]
      %3278 = vrot.lane.b32.xlu0 %v3272, 126
      %v3279 = vpop.permute.xlu0 %3278
      %3280 = vrot.lane.b32.xlu0 %v3273, 126
      %v3281 = vpop.permute.xlu0 %3280
      %3282 = vrot.lane.b32.xlu0 %v3274, 126
      %v3283 = vpop.permute.xlu0 %3282
      %3287 = vst.msk [vmem:[#allocation3 + $0x30] sm:$0xff] %vm418, %v3279
      %3288 = vst.msk [vmem:[#allocation3 + $0x38] sm:$0xff] %vm418, %v3281
      %3289 = vst.msk [vmem:[#allocation3 + $0x40] sm:$0xff] %vm418, %v3283
      %v3290 = vld [vmem:[#allocation2] sm:$0xff]
      %v3291 = vld [vmem:[#allocation2 + $0x8] sm:$0xff]
      %v3292 = vld [vmem:[#allocation2 + $0x10] sm:$0xff]
      %3296 = vrot.lane.b32.xlu0 %v3290, 125
      %v3297 = vpop.permute.xlu0 %3296
      %3298 = vrot.lane.b32.xlu0 %v3291, 125
      %v3299 = vpop.permute.xlu0 %3298
      %3300 = vrot.lane.b32.xlu0 %v3292, 125
      %v3301 = vpop.permute.xlu0 %3300
      %3305 = vst.msk [vmem:[#allocation3 + $0x48] sm:$0xff] %vm418, %v3297
      %3306 = vst.msk [vmem:[#allocation3 + $0x50] sm:$0xff] %vm418, %v3299
      %3307 = vst.msk [vmem:[#allocation3 + $0x58] sm:$0xff] %vm418, %v3301
      %v3308 = vld [vmem:[#allocation2] sm:$0xff]
      %v3309 = vld [vmem:[#allocation2 + $0x8] sm:$0xff]
      %v3310 = vld [vmem:[#allocation2 + $0x10] sm:$0xff]
      %3314 = vrot.lane.b32.xlu0 %v3308, 124
      %v3315 = vpop.permute.xlu0 %3314
      %3316 = vrot.lane.b32.xlu0 %v3309, 124
      %v3317 = vpop.permute.xlu0 %3316
      %3318 = vrot.lane.b32.xlu0 %v3310, 124
      %v3319 = vpop.permute.xlu0 %3318
      %3323 = vst.msk [vmem:[#allocation3 + $0x60] sm:$0xff] %vm418, %v3315
      %3324 = vst.msk [vmem:[#allocation3 + $0x68] sm:$0xff] %vm418, %v3317
      %3325 = vst.msk [vmem:[#allocation3 + $0x70] sm:$0xff] %vm418, %v3319
      %s3326 = scalar_lea.vmem %s1, 480
      %v3327 = vld [vmem:[%s3326] sm:$0xff]
      %v3328 = vld [vmem:[#allocation3] sm:$0xff]
      %v3329 = vld [vmem:[#allocation3 + $0x8] sm:$0xff]
      %v3330 = vld [vmem:[#allocation3 + $0x10] sm:$0xff]
      %v3331 = vld [vmem:[#allocation3 + $0x18] sm:$0xff]
      %v3332 = vld [vmem:[#allocation3 + $0x20] sm:$0xff]
      %v3333 = vld [vmem:[#allocation3 + $0x28] sm:$0xff]
      %v3334 = vld [vmem:[#allocation3 + $0x30] sm:$0xff]
      %v3335 = vld [vmem:[#allocation3 + $0x38] sm:$0xff]
      %v3336 = vld [vmem:[#allocation3 + $0x40] sm:$0xff]
      %v3337 = vld [vmem:[#allocation3 + $0x48] sm:$0xff]
      %v3338 = vld [vmem:[#allocation3 + $0x50] sm:$0xff]
      %v3339 = vld [vmem:[#allocation3 + $0x58] sm:$0xff]
      %v3340 = vld [vmem:[#allocation3 + $0x60] sm:$0xff]
      %v3341 = vld [vmem:[#allocation3 + $0x68] sm:$0xff]
      %v3342 = vld [vmem:[#allocation3 + $0x70] sm:$0xff]
      %s3343 = scalar_lea.vmem %s2, 240
      %v3344 = vld [vmem:[%s3343] sm:$0xff]
      %3346 = vset.pattern.permute.xlu0 0
      %3347 = vperm.xlu0 %3346, %v3344
      %v3348 = vpop.permute.xlu0 %3347
      %v3351 = vsel %vm2344, %v3327, 0
      %3353 = vmatprep.subr.mxu0 0.0
      %3354 = vmatpush1.msra.mxu0 0.0
      %3355 = vmatprep.subr.mxu0 0.0
      %3356 = vmatpush1.msra.mxu0 %v3342
      %3357 = vmatprep.subr.mxu0 0.0
      %3358 = vmatpush1.msra.mxu0 %v3341
      %3359 = vmatprep.subr.mxu0 0.0
      %3360 = vmatpush1.msra.mxu0 %v3340
      %3361 = vmatprep.subr.mxu0 0.0
      %3362 = vmatpush1.msra.mxu0 %v3339
      %3363 = vmatprep.subr.mxu0 0.0
      %3364 = vmatpush1.msra.mxu0 %v3338
      %3365 = vmatprep.subr.mxu0 0.0
      %3366 = vmatpush1.msra.mxu0 %v3337
      %3367 = vmatprep.subr.mxu0 0.0
      %3368 = vmatpush1.msra.mxu0 %v3336
      %3369 = vmatprep.subr.mxu0 0.0
      %3370 = vmatpush1.msra.mxu0 %v3335
      %3371 = vmatprep.subr.mxu0 0.0
      %3372 = vmatpush1.msra.mxu0 %v3334
      %3373 = vmatprep.subr.mxu0 0.0
      %3374 = vmatpush1.msra.mxu0 %v3333
      %3375 = vmatprep.subr.mxu0 0.0
      %3376 = vmatpush1.msra.mxu0 %v3332
      %3377 = vmatprep.subr.mxu0 0.0
      %3378 = vmatpush1.msra.mxu0 %v3331
      %3379 = vmatprep.subr.mxu0 0.0
      %3380 = vmatpush1.msra.mxu0 %v3330
      %3381 = vmatprep.subr.mxu0 0.0
      %3382 = vmatpush1.msra.mxu0 %v3329
      %3383 = vmatprep.subr.mxu0 0.0
      %3384 = vmatpush1.msra.mxu0 %v3328
      %3385 = vmatprep.subr.mxu0 0.0
      %3386 = vmatpush2.msra.mxu0 0.0
      %3387 = vmatprep.subr.mxu0 0.0
      %3388 = vmatpush2.msra.mxu0 0.0
      %3389 = vmatprep.subr.mxu0 0.0
      %3390 = vmatpush2.msra.mxu0 0.0
      %3391 = vmatprep.subr.mxu0 0.0
      %3392 = vmatpush2.msra.mxu0 0.0
      %3393 = vmatprep.subr.mxu0 0.0
      %3394 = vmatpush2.msra.mxu0 0.0
      %3395 = vmatprep.subr.mxu0 0.0
      %3396 = vmatpush2.msra.mxu0 0.0
      %3397 = vmatprep.subr.mxu0 0.0
      %3398 = vmatpush2.msra.mxu0 0.0
      %3399 = vmatprep.subr.mxu0 0.0
      %3400 = vmatpush2.msra.mxu0 0.0
      %3401 = vmatprep.subr.mxu0 0.0
      %3402 = vmatpush2.msra.mxu0 0.0
      %3403 = vmatprep.subr.mxu0 0.0
      %3404 = vmatpush2.msra.mxu0 0.0
      %3405 = vmatprep.subr.mxu0 0.0
      %3406 = vmatpush2.msra.mxu0 0.0
      %3407 = vmatprep.subr.mxu0 0.0
      %3408 = vmatpush2.msra.mxu0 0.0
      %3409 = vmatprep.subr.mxu0 0.0
      %3410 = vmatpush2.msra.mxu0 0.0
      %3411 = vmatprep.subr.mxu0 0.0
      %3412 = vmatpush2.msra.mxu0 0.0
      %3413 = vmatprep.subr.mxu0 0.0
      %3414 = vmatpush2.msra.mxu0 0.0
      %3415 = vmatprep.subr.mxu0 0.0
      %3416 = vmatpush2.msra.mxu0 0.0
      %3417 = vmatprep.mubr.f32.mxu0 0.0
      %3418 = vmatmul.mubr.f32.gmra.mxu0 %v3351
      %v3419 = vpop.f32.mrf.mxu0
      %v3420 = vadd.f32 %v3348, %v3419
      %v3421 = vpop.f32.mrf.mxu0
      %3422 = vdwg.mxu0
      %v3423 = vmax.f32 %v3420, 0.0
      %3425 = vrot.lane.b32.xlu0 %v3423, 2
      %v3426 = vpop.permute.xlu0 %3425
      %3428 = vst.msk [vmem:[#allocation2] sm:$0xff] %vm510, %v3426
      %3429 = vst.msk [vmem:[#allocation2] sm:$0xff] %vm514, 0.0
      %3430 = vst.msk [vmem:[#allocation2] sm:$0xff] %vm518, 0.0
      %v3431 = vld [vmem:[#allocation2] sm:$0xff]
      %3432 = vst.msk [vmem:[#allocation3] sm:$0xff] %vm418, %v3431
      %v3433 = vld [vmem:[#allocation2] sm:$0xff]
      %3435 = vrot.lane.b32.xlu0 %v3433, 127
      %v3436 = vpop.permute.xlu0 %3435
      %3438 = vst.msk [vmem:[#allocation3 + $0x8] sm:$0xff] %vm418, %v3436
      %v3439 = vld [vmem:[#allocation2] sm:$0xff]
      %3441 = vrot.lane.b32.xlu0 %v3439, 126
      %v3442 = vpop.permute.xlu0 %3441
      %3444 = vst.msk [vmem:[#allocation3 + $0x10] sm:$0xff] %vm418, %v3442
      %v3445 = vld [vmem:[#allocation2] sm:$0xff]
      %3447 = vrot.lane.b32.xlu0 %v3445, 125
      %v3448 = vpop.permute.xlu0 %3447
      %3450 = vst.msk [vmem:[#allocation3 + $0x18] sm:$0xff] %vm418, %v3448
      %v3451 = vld [vmem:[#allocation2] sm:$0xff]
      %3453 = vrot.lane.b32.xlu0 %v3451, 124
      %v3454 = vpop.permute.xlu0 %3453
      %3456 = vst.msk [vmem:[#allocation3 + $0x20] sm:$0xff] %vm418, %v3454
      %s3457 = scalar_lea.vmem %s1, 528
      %v3458 = vld [vmem:[%s3457] sm:$0xff]
      %v3459 = vld [vmem:[#allocation3] sm:$0xff]
      %v3460 = vld [vmem:[#allocation3 + $0x8] sm:$0xff]
      %v3461 = vld [vmem:[#allocation3 + $0x10] sm:$0xff]
      %v3462 = vld [vmem:[#allocation3 + $0x18] sm:$0xff]
      %v3463 = vld [vmem:[#allocation3 + $0x20] sm:$0xff]
      %s3464 = scalar_lea.vmem %s2, 264
      %v3465 = vld [vmem:[%s3464] sm:$0xff]
      %3467 = vset.pattern.permute.xlu0 0
      %3468 = vperm.xlu0 %3467, %v3465
      %v3469 = vpop.permute.xlu0 %3468
      %v3472 = vsel %vm715, %v3458, 0
      %3474 = vmatprep.subr.mxu0 0.0
      %3475 = vmatpush1.msra.mxu0 0.0
      %3476 = vmatprep.subr.mxu0 0.0
      %3477 = vmatpush1.msra.mxu0 0.0
      %3478 = vmatprep.subr.mxu0 0.0
      %3479 = vmatpush1.msra.mxu0 0.0
      %3480 = vmatprep.subr.mxu0 0.0
      %3481 = vmatpush1.msra.mxu0 0.0
      %3482 = vmatprep.subr.mxu0 0.0
      %3483 = vmatpush1.msra.mxu0 0.0
      %3484 = vmatprep.subr.mxu0 0.0
      %3485 = vmatpush1.msra.mxu0 0.0
      %3486 = vmatprep.subr.mxu0 0.0
      %3487 = vmatpush1.msra.mxu0 0.0
      %3488 = vmatprep.subr.mxu0 0.0
      %3489 = vmatpush1.msra.mxu0 0.0
      %3490 = vmatprep.subr.mxu0 0.0
      %3491 = vmatpush1.msra.mxu0 0.0
      %3492 = vmatprep.subr.mxu0 0.0
      %3493 = vmatpush1.msra.mxu0 0.0
      %3494 = vmatprep.subr.mxu0 0.0
      %3495 = vmatpush1.msra.mxu0 0.0
      %3496 = vmatprep.subr.mxu0 0.0
      %3497 = vmatpush1.msra.mxu0 %v3463
      %3498 = vmatprep.subr.mxu0 0.0
      %3499 = vmatpush1.msra.mxu0 %v3462
      %3500 = vmatprep.subr.mxu0 0.0
      %3501 = vmatpush1.msra.mxu0 %v3461
      %3502 = vmatprep.subr.mxu0 0.0
      %3503 = vmatpush1.msra.mxu0 %v3460
      %3504 = vmatprep.subr.mxu0 0.0
      %3505 = vmatpush1.msra.mxu0 %v3459
      %3506 = vmatprep.subr.mxu0 0.0
      %3507 = vmatpush2.msra.mxu0 0.0
      %3508 = vmatprep.subr.mxu0 0.0
      %3509 = vmatpush2.msra.mxu0 0.0
      %3510 = vmatprep.subr.mxu0 0.0
      %3511 = vmatpush2.msra.mxu0 0.0
      %3512 = vmatprep.subr.mxu0 0.0
      %3513 = vmatpush2.msra.mxu0 0.0
      %3514 = vmatprep.subr.mxu0 0.0
      %3515 = vmatpush2.msra.mxu0 0.0
      %3516 = vmatprep.subr.mxu0 0.0
      %3517 = vmatpush2.msra.mxu0 0.0
      %3518 = vmatprep.subr.mxu0 0.0
      %3519 = vmatpush2.msra.mxu0 0.0
      %3520 = vmatprep.subr.mxu0 0.0
      %3521 = vmatpush2.msra.mxu0 0.0
      %3522 = vmatprep.subr.mxu0 0.0
      %3523 = vmatpush2.msra.mxu0 0.0
      %3524 = vmatprep.subr.mxu0 0.0
      %3525 = vmatpush2.msra.mxu0 0.0
      %3526 = vmatprep.subr.mxu0 0.0
      %3527 = vmatpush2.msra.mxu0 0.0
      %3528 = vmatprep.subr.mxu0 0.0
      %3529 = vmatpush2.msra.mxu0 0.0
      %3530 = vmatprep.subr.mxu0 0.0
      %3531 = vmatpush2.msra.mxu0 0.0
      %3532 = vmatprep.subr.mxu0 0.0
      %3533 = vmatpush2.msra.mxu0 0.0
      %3534 = vmatprep.subr.mxu0 0.0
      %3535 = vmatpush2.msra.mxu0 0.0
      %3536 = vmatprep.subr.mxu0 0.0
      %3537 = vmatpush2.msra.mxu0 0.0
      %3538 = vmatprep.mubr.f32.mxu0 0.0
      %3539 = vmatmul.mubr.f32.gmra.mxu0 %v3472
      %v3540 = vpop.f32.mrf.mxu0
      %v3541 = vadd.f32 %v3469, %v3540
      %v3542 = vpop.f32.mrf.mxu0
      %3543 = vdwg.mxu0
      %vm3544 = vcmask 198656
      %v3545 = vsel %vm3544, %v3541, -inf
      %v3546 = vrot.slane %v3545, 4
      %v3547 = vmax.f32 %v3545, %v3546
      %v3548 = vrot.slane %v3547, 2
      %v3549 = vmax.f32 %v3547, %v3548
      %v3550 = vrot.slane %v3549, 1
      %v3551 = vmax.f32 %v3549, %v3550
      %v3552 = vsub.f32 %v3541, %v3551
      %v3553 = vmul.f32 %v3552, 1.442695
      %v3554 = vpow.pop %v3553
      %v3555 = vsel %vm3544, %v3554, 0.0
      %v3556 = vrot.slane %v3555, 4
      %v3557 = vadd.f32 %v3555, %v3556
      %v3558 = vrot.slane %v3557, 2
      %v3559 = vadd.f32 %v3557, %v3558
      %v3560 = vrot.slane %v3559, 1
      %v3561 = vadd.f32 %v3559, %v3560
      %v3562 = vrcp.pop %v3561
      %v3563 = vmul.f32 %v3554, %v3562
      %3564 = vst.msk [vmem:[%s411] sm:$0x7] %vm3544, %v3563
      %p3565 = scmp.lt.s32.totalorder %s23, 1
      %s3566 = scalar_select %p3565, %s23, 1
      %s3567 = smul.addr %s3566, 4
      %s3568 = scalar_lea.vmem %s12, %s3567
      // Predicated region
      $region69: #{forward.1} parent=67 // pred_check
        %p3569 = pneg %p298
      $region70: #{forward.1} parent=67 // pred_check_branch
        %3571 = sbr.rel (%p3569) target = $region72
      $region71: #{forward.1} parent=67 // pred_region
        _
      $region72: #{forward.1} parent=67 // pred_fallthru
        _
    $region68: #{forward.1} parent=5 // pred_fallthru
      _
    %p3572 = scmp.le.s32.totalorder 2, %s18
    // Predicated region
    $region73: #{forward.1} parent=5 // pred_check
      %p3573 = pneg %p3572
    $region74: #{forward.1} parent=5 // pred_check_branch
      %3575 = sbr.rel (%p3573) target = $region76
    $region75: #{forward.1} parent=5 // pred_region
      %s3576 = ssub.s32 %s18, 2
      // Predicated region
      $region77: #{forward.1} parent=75 // pred_check
        %p3577 = pneg %p304
      $region78: #{forward.1} parent=75 // pred_check_branch
        %3579 = sbr.rel (%p3577) target = $region80
      $region79: #{forward.1} parent=75 // pred_region
        %p3580 = scmp.lt.s32.totalorder %s24, 1
        %s3581 = scalar_select %p3580, %s24, 1
        %s3582 = smul.addr %s3581, 4
        %s3583 = scalar_lea.vmem %s12, %s3582
      $region80: #{forward.1} parent=75 // pred_fallthru
        _
    $region76: #{forward.1} parent=5 // pred_fallthru
      _
  $region6: #{forward.1} parent=0 // loop_footer
    %s22 = sadd.s32 1, %s18
  $region7: #{forward.1} parent=0 // loop_footer_branch
    %17 = sbr.rel target = $region3
  $region8: #{forward.1} parent=0 // loop_exit
    _

</llo_original>
